<compile_context>
chip_gen: v6e
topology: v6e:2x2x1
jax: 0.10.0
libtpu: 0.0.40
codegen_flags: <defaults>
</compile_context>

<pallas_src>
import functools

import jax
import jax.numpy as jnp
import numpy as np
from jax.experimental import pallas as pl
from jax.experimental.pallas import tpu as pltpu


def _largest_divisor_leq(n, cap):
    for d in range(min(n, cap), 0, -1):
        if n % d == 0:
            return d
    return 1


# --------------------------------------------------------------------------
# Fused kernel factory
# --------------------------------------------------------------------------
def _make_fused_kernel(num_layers, tile_t, b_tile, hidden_dim, multi_layer):
    H = hidden_dim

    def kernel(*args):
        a = 0
        x_ref = args[a]; a += 1                         # (tile_t, b_tile, D) cdtype
        layer_refs = args[a:a + 3 * num_layers]; a += 3 * num_layers
        wfc_ref = args[a]; a += 1                       # (H, O)  cdtype
        bfc_ref = args[a]; a += 1                       # (1, O)  f32
        o_ref = args[a]; a += 1                         # (b_tile, O)
        h_scr = args[a]; a += 1                         # (num_layers, b_tile, H) f32
        c_scr = args[a]; a += 1                         # (num_layers, b_tile, H) f32
        seq_scr = args[a] if multi_layer else None      # (tile_t, b_tile, H) cdtype

        t_tile = pl.program_id(1)

        @pl.when(t_tile == 0)
        def _init():
            h_scr[...] = jnp.zeros_like(h_scr)
            c_scr[...] = jnp.zeros_like(c_scr)

        cdtype = x_ref.dtype
        layer_in = x_ref[...]                           # time-major (tile_t, b_tile, D_l)

        h = None
        for l in range(num_layers):
            wih = layer_refs[3 * l][...]                # (D_l, 4H) cdtype
            whh = layer_refs[3 * l + 1][...]            # (H, 4H)  cdtype
            bias = layer_refs[3 * l + 2][...]           # (1, 4H)  f32 (= b_ih + b_hh)

            d_l = layer_in.shape[-1]
            # Hoisted input projection: ONE matmul + ONE bias broadcast per layer-tile.
            flat = layer_in.reshape(tile_t * b_tile, d_l)
            proj = jnp.dot(flat, wih, preferred_element_type=jnp.float32) + bias
            proj = proj.reshape(tile_t, b_tile, 4 * H)  # leading-axis split (free)

            h = h_scr[l]                                # (b_tile, H) f32 carried state
            c = c_scr[l]
            last_layer = (l == num_layers - 1)
            for tt in range(tile_t):                    # statically unrolled recurrence
                gates = proj[tt] + jnp.dot(h.astype(cdtype), whh,
                                           preferred_element_type=jnp.float32)
                # Full-width transcendentals (2 EUP issues), slices go to XLU.
                sig = jax.nn.sigmoid(gates)             # (b_tile, 4H) f32
                tnh = jnp.tanh(gates)                   # (b_tile, 4H) f32
                # PyTorch gate order: input, forget, cell(g), output.
                i_g = sig[:, 0 * H:1 * H]
                f_g = sig[:, 1 * H:2 * H]
                g_g = tnh[:, 2 * H:3 * H]
                o_g = sig[:, 3 * H:4 * H]
                c = f_g * c + i_g * g_g
                h = o_g * jnp.tanh(c)
                if not last_layer:
                    seq_scr[tt] = h.astype(cdtype)      # time-leading stack for next layer

            h_scr[l] = h
            c_scr[l] = c
            if not last_layer:
                layer_in = seq_scr[...]                 # (tile_t, b_tile, H), VMEM only

        # Final Linear on the last layer's last hidden; only on the last time tile.
        @pl.when(t_tile == pl.num_programs(1) - 1)
        def _fc():
            y = (jnp.dot(h.astype(cdtype), wfc_ref[...],
                         preferred_element_type=jnp.float32) + bfc_ref[...])
            o_ref[...] = y.astype(o_ref.dtype)

    return kernel


# --------------------------------------------------------------------------
# Wrapper: one fused pallas_call
# --------------------------------------------------------------------------
@functools.partial(jax.jit, static_argnames=("tile_t", "b_tile", "use_bf16"))
def lstm_price_predictor(x, params, tile_t=None, b_tile=None, use_bf16=True):
    """x: (B, T, input_dim) batch-first -> (B, output_dim)."""
    B, T, D = x.shape
    layers = params["layers"]
    num_layers = len(layers)
    H = layers[0]["w_hh_t"].shape[0]
    O = params["w_fc_t"].shape[1]
    out_dtype = x.dtype
    cdtype = jnp.bfloat16 if use_bf16 else jnp.float32
    csize = jnp.dtype(cdtype).itemsize

    # ---- batch padding to a sublane-packing multiple -----------------------
    pad_to = 16 if use_bf16 else 8
    B_pad = -(-B // pad_to) * pad_to
    if b_tile is None:
        # >=2 batch tiles lets v7x's second TensorCore take half the batch once the
        # batch is big enough to still fill MXU rows; on v5e/v6e the extra grid
        # steps cost ~0.35us each (negligible).
        b_tile = B_pad // 2 if B_pad >= 256 else B_pad
    assert B_pad % b_tile == 0 and b_tile % 8 == 0

    if tile_t is None:
        tile_t = _largest_divisor_leq(T, 32)
    assert T % tile_t == 0
    grid = (B_pad // b_tile, T // tile_t)

    # ---- wrapper-side layout plumbing (one cheap HBM pass over x) ----------
    if B_pad != B:
        x = jnp.pad(x, ((0, B_pad - B), (0, 0), (0, 0)))
    x_tm = jnp.transpose(x, (1, 0, 2)).astype(cdtype)   # time-major (T, B_pad, D)

    # ---- specs --------------------------------------------------------------
    in_specs = [pl.BlockSpec((tile_t, b_tile, D), lambda b, t: (t, b, 0))]
    inputs = [x_tm]
    for lp in layers:
        d_l = lp["w_ih_t"].shape[0]
        in_specs += [
            pl.BlockSpec((d_l, 4 * H), lambda b, t: (0, 0)),
            pl.BlockSpec((H, 4 * H), lambda b, t: (0, 0)),
            pl.BlockSpec((1, 4 * H), lambda b, t: (0, 0)),
        ]
        inputs += [lp["w_ih_t"].astype(cdtype), lp["w_hh_t"].astype(cdtype), lp["bias"]]
    in_specs += [
        pl.BlockSpec((H, O), lambda b, t: (0, 0)),
        pl.BlockSpec((1, O), lambda b, t: (0, 0)),
    ]
    inputs += [params["w_fc_t"].astype(cdtype), params["b_fc"]]

    out_specs = pl.BlockSpec((b_tile, O), lambda b, t: (b, 0))

    multi_layer = num_layers > 1
    scratch_shapes = [
        pltpu.VMEM((num_layers, b_tile, H), jnp.float32),   # hidden state
        pltpu.VMEM((num_layers, b_tile, H), jnp.float32),   # cell state
    ]
    if multi_layer:
        scratch_shapes.append(pltpu.VMEM((tile_t, b_tile, H), cdtype))  # layer outputs

    # ---- VMEM footprint estimate -> explicit vmem_limit (v7x-safe cap) -----
    est = 2 * tile_t * b_tile * D * csize                       # x blocks (double-buffered)
    for lp in layers:
        d_l = lp["w_ih_t"].shape[0]
        est += 2 * (d_l + H) * 4 * H * csize + 2 * 4 * H * 4
    est += 2 * (H * O * csize + O * 4)
    est += 2 * b_tile * O * 4
    est += 2 * num_layers * b_tile * H * 4                      # h/c scratch
    est += tile_t * b_tile * H * csize                          # seq scratch
    est += 3 * tile_t * b_tile * 4 * H * 4                      # proj / temporaries headroom
    vmem_limit = int(min(64 * 1024 * 1024, max(32 * 1024 * 1024, 2 * est)))

    # ---- advisory cost estimate ---------------------------------------------
    flops = 2 * B_pad * H * O
    bytes_accessed = B_pad * T * D * csize + B_pad * O * 4
    for lp in layers:
        d_l = lp["w_ih_t"].shape[0]
        flops += 2 * B_pad * T * (d_l + H) * 4 * H
        bytes_accessed += csize * (lp["w_ih_t"].size + lp["w_hh_t"].size) + 4 * lp["bias"].size
    bytes_accessed += csize * params["w_fc_t"].size + 4 * params["b_fc"].size
    transcendentals = 9 * B_pad * T * H * num_layers
    cost = pl.CostEstimate(flops=int(flops),
                           transcendentals=int(transcendentals),
                           bytes_accessed=int(bytes_accessed))

    kernel = _make_fused_kernel(num_layers, tile_t, b_tile, H, multi_layer)

    out = pl.pallas_call(
        kernel,
        out_shape=jax.ShapeDtypeStruct((B_pad, O), out_dtype),
        grid_spec=pltpu.PrefetchScalarGridSpec(
            num_scalar_prefetch=0,
            grid=grid,
            in_specs=in_specs,
            out_specs=out_specs,
            scratch_shapes=scratch_shapes,
        ),
        compiler_params=pltpu.CompilerParams(
            # batch axis independent ("parallel"); time axis carries state ("arbitrary")
            dimension_semantics=("parallel", "arbitrary"),
            vmem_limit_bytes=vmem_limit,
        ),
        cost_estimate=cost,
    )(*inputs)

    return out[:B]


# --------------------------------------------------------------------------
# Parameter init (PyTorch-shaped: uniform(-1/sqrt(H), 1/sqrt(H)))
# --------------------------------------------------------------------------
def init_params(key, input_dim, hidden_dim, num_layers, output_dim):
    params = {"layers": []}
    k = 1.0 / np.sqrt(hidden_dim)
    for layer in range(num_layers):
        d_in = input_dim if layer == 0 else hidden_dim
        key, k1, k2, k3, k4 = jax.random.split(key, 5)
        w_ih = jax.random.uniform(k1, (4 * hidden_dim, d_in), jnp.float32, -k, k)
        w_hh = jax.random.uniform(k2, (4 * hidden_dim, hidden_dim), jnp.float32, -k, k)
        b_ih = jax.random.uniform(k3, (4 * hidden_dim,), jnp.float32, -k, k)
        b_hh = jax.random.uniform(k4, (4 * hidden_dim,), jnp.float32, -k, k)
        params["layers"].append({
            "w_ih_t": w_ih.T,                                # (D_in, 4H)
            "w_hh_t": w_hh.T,                                # (H, 4H)
            "bias": (b_ih + b_hh).reshape(1, 4 * hidden_dim),
        })
    key, k5, k6 = jax.random.split(key, 3)
    w_fc = jax.random.uniform(k5, (output_dim, hidden_dim), jnp.float32, -k, k)
    b_fc = jax.random.uniform(k6, (output_dim,), jnp.float32, -k, k)
    params["w_fc_t"] = w_fc.T                                # (H, O)
    params["b_fc"] = b_fc.reshape(1, output_dim)
    return params


# --------------------------------------------------------------------------
# Pure-JAX reference (correctness check only)
# --------------------------------------------------------------------------
def reference_forward(x, params):
    B = x.shape[0]
    seq = x
    for lp in params["layers"]:
        H = lp["w_hh_t"].shape[0]
        h = jnp.zeros((B, H), jnp.float32)
        c = jnp.zeros((B, H), jnp.float32)

        def step(carry, x_t):
            h, c = carry
            gates = x_t @ lp["w_ih_t"] + h @ lp["w_hh_t"] + lp["bias"]
            i = jax.nn.sigmoid(gates[:, 0 * H:1 * H])
            f = jax.nn.sigmoid(gates[:, 1 * H:2 * H])
            g = jnp.tanh(gates[:, 2 * H:3 * H])
            o = jax.nn.sigmoid(gates[:, 3 * H:4 * H])
            c = f * c + i * g
            h = o * jnp.tanh(c)
            return (h, c), h

        (_, _), hs = jax.lax.scan(step, (h, c), jnp.transpose(seq, (1, 0, 2)))
        seq = jnp.transpose(hs, (1, 0, 2))
    return seq[:, -1, :] @ params["w_fc_t"] + params["b_fc"]


# --------------------------------------------------------------------------
if __name__ == "__main__":
    B, T = 2, 16
    input_dim, hidden_dim, num_layers, output_dim = 16, 32, 2, 4

    key = jax.random.PRNGKey(0)
    key, kx, kp = jax.random.split(key, 3)
    x = jax.random.normal(kx, (B, T, input_dim), jnp.float32)
    params = init_params(kp, input_dim, hidden_dim, num_layers, output_dim)

    ref = reference_forward(x, params)

    # Exact-semantics check: f32 MXU path, tile_t=8 -> grid=(1, 2) exercises the
    # cross-tile (h, c) state carry.
    out_f32 = jax.block_until_ready(
        lstm_price_predictor(x, params, tile_t=8, use_bf16=False))
    np.testing.assert_allclose(np.asarray(out_f32), np.asarray(ref),
                               rtol=1e-5, atol=1e-5)

    # Default fast path: bf16 MXU operands, f32 accumulation / gate math / state.
    out_bf16 = jax.block_until_ready(lstm_price_predictor(x, params, tile_t=8))
    np.testing.assert_allclose(np.asarray(out_bf16), np.asarray(ref),
                               rtol=5e-2, atol=5e-2)

    print("KERNEL_OK")
</pallas_src>

<mosaic_0001>
module attributes {stable_mosaic.version = 11 : i64} {
  func.func @kernel(%arg0: i32, %arg1: i32, %arg2: memref<8x8x16xf32, #tpu.memory_space<vmem>>, %arg3: memref<16x128xf32, #tpu.memory_space<vmem>>, %arg4: memref<32x128xf32, #tpu.memory_space<vmem>>, %arg5: memref<1x128xf32, #tpu.memory_space<vmem>>, %arg6: memref<32x128xf32, #tpu.memory_space<vmem>>, %arg7: memref<32x128xf32, #tpu.memory_space<vmem>>, %arg8: memref<1x128xf32, #tpu.memory_space<vmem>>, %arg9: memref<32x4xf32, #tpu.memory_space<vmem>>, %arg10: memref<1x4xf32, #tpu.memory_space<vmem>>, %arg11: memref<8x4xf32, #tpu.memory_space<vmem>>, %arg12: memref<2x8x32xf32, #tpu.memory_space<vmem>>, %arg13: memref<2x8x32xf32, #tpu.memory_space<vmem>>, %arg14: memref<8x8x32xf32, #tpu.memory_space<vmem>>) attributes {dimension_semantics = [#tpu.dimension_semantics<parallel>, #tpu.dimension_semantics<arbitrary>], iteration_bounds = array<i64: 1, 2>, scalar_prefetch = 0 : i64, scratch_operands = 3 : i64, tpu.core_type = #tpu.core_type<tc>, window_params = [{transform_indices = @transform_0, window_bounds = array<i64: 8, 8, 16>}, {pipeline_mode = #tpu.pipeline_mode<synchronous>, transform_indices = @transform_1, window_bounds = array<i64: 16, 128>}, {pipeline_mode = #tpu.pipeline_mode<synchronous>, transform_indices = @transform_2, window_bounds = array<i64: 32, 128>}, {pipeline_mode = #tpu.pipeline_mode<synchronous>, transform_indices = @transform_3, window_bounds = array<i64: 1, 128>}, {pipeline_mode = #tpu.pipeline_mode<synchronous>, transform_indices = @transform_4, window_bounds = array<i64: 32, 128>}, {pipeline_mode = #tpu.pipeline_mode<synchronous>, transform_indices = @transform_5, window_bounds = array<i64: 32, 128>}, {pipeline_mode = #tpu.pipeline_mode<synchronous>, transform_indices = @transform_6, window_bounds = array<i64: 1, 128>}, {pipeline_mode = #tpu.pipeline_mode<synchronous>, transform_indices = @transform_7, window_bounds = array<i64: 32, 4>}, {pipeline_mode = #tpu.pipeline_mode<synchronous>, transform_indices = @transform_8, window_bounds = array<i64: 1, 4>}, {transform_indices = @transform_9, window_bounds = array<i64: 8, 4>}]} {
    %c0_i32 = arith.constant 0 : i32
    %0 = arith.cmpi eq, %arg1, %c0_i32 : i32
    %1 = arith.extui %0 : i1 to i32
    %c0_i32_0 = arith.constant 0 : i32
    %2 = arith.cmpi ne, %1, %c0_i32_0 : i32
    scf.if %2 {
      %cst_93 = arith.constant 0.000000e+00 : f32
      %372 = vector.broadcast %cst_93 : f32 to vector<2x8x32xf32>
      %c0_94 = arith.constant 0 : index
      %c0_95 = arith.constant 0 : index
      %c0_96 = arith.constant 0 : index
      %373 = vector.load %arg12[%c0_94, %c0_95, %c0_96] : memref<2x8x32xf32, #tpu.memory_space<vmem>>, vector<2x8x32xf32>
      tpu.vector_store %arg12[%c0_94, %c0_95, %c0_96], %372 {strides = array<i32>} : memref<2x8x32xf32, #tpu.memory_space<vmem>>, vector<2x8x32xf32>,
      %cst_97 = arith.constant 0.000000e+00 : f32
      %374 = vector.broadcast %cst_97 : f32 to vector<2x8x32xf32>
      %c0_98 = arith.constant 0 : index
      %c0_99 = arith.constant 0 : index
      %c0_100 = arith.constant 0 : index
      %375 = vector.load %arg13[%c0_98, %c0_99, %c0_100] : memref<2x8x32xf32, #tpu.memory_space<vmem>>, vector<2x8x32xf32>
      tpu.vector_store %arg13[%c0_98, %c0_99, %c0_100], %374 {strides = array<i32>} : memref<2x8x32xf32, #tpu.memory_space<vmem>>, vector<2x8x32xf32>,
    } else {
    }
    %c0 = arith.constant 0 : index
    %c0_1 = arith.constant 0 : index
    %c0_2 = arith.constant 0 : index
    %3 = vector.load %arg2[%c0, %c0_1, %c0_2] : memref<8x8x16xf32, #tpu.memory_space<vmem>>, vector<8x8x16xf32>
    %c0_3 = arith.constant 0 : index
    %c0_4 = arith.constant 0 : index
    %4 = vector.load %arg3[%c0_3, %c0_4] : memref<16x128xf32, #tpu.memory_space<vmem>>, vector<16x128xf32>
    %c0_5 = arith.constant 0 : index
    %c0_6 = arith.constant 0 : index
    %5 = vector.load %arg4[%c0_5, %c0_6] : memref<32x128xf32, #tpu.memory_space<vmem>>, vector<32x128xf32>
    %c0_7 = arith.constant 0 : index
    %c0_8 = arith.constant 0 : index
    %6 = vector.load %arg5[%c0_7, %c0_8] : memref<1x128xf32, #tpu.memory_space<vmem>>, vector<1x128xf32>
    %7 = vector.shape_cast %3 : vector<8x8x16xf32> to vector<64x16xf32>
    %cst = arith.constant dense<0.000000e+00> : vector<64x128xf32>
    %8 = tpu.matmul %7, %4, %cst {dimension_numbers = #tpu.dot_dimension_numbers<[1], [0], [0], [1], [0, 0, 1, 1], [], []>} : vector<64x16xf32>, vector<16x128xf32>, vector<64x128xf32> -> vector<64x128xf32>
    %9 = vector.broadcast %6 : vector<1x128xf32> to vector<64x128xf32>
    %10 = arith.addf %8, %9 : vector<64x128xf32>
    %11 = vector.shape_cast %10 : vector<64x128xf32> to vector<8x8x128xf32>
    %c0_9 = arith.constant 0 : index
    %c0_10 = arith.constant 0 : index
    %c0_11 = arith.constant 0 : index
    %12 = vector.load %arg12[%c0_9, %c0_10, %c0_11] : memref<2x8x32xf32, #tpu.memory_space<vmem>>, vector<1x8x32xf32>
    %13 = vector.shape_cast %12 : vector<1x8x32xf32> to vector<8x32xf32>
    %c0_12 = arith.constant 0 : index
    %c0_13 = arith.constant 0 : index
    %c0_14 = arith.constant 0 : index
    %14 = vector.load %arg13[%c0_12, %c0_13, %c0_14] : memref<2x8x32xf32, #tpu.memory_space<vmem>>, vector<1x8x32xf32>
    %15 = vector.shape_cast %14 : vector<1x8x32xf32> to vector<8x32xf32>
    %16 = vector.extract_strided_slice %11 {offsets = [0, 0, 0], sizes = [1, 8, 128], strides = [1, 1, 1]} : vector<8x8x128xf32> to vector<1x8x128xf32>
    %17 = vector.shape_cast %16 : vector<1x8x128xf32> to vector<8x128xf32>
    %cst_15 = arith.constant dense<0.000000e+00> : vector<8x128xf32>
    %18 = tpu.matmul %13, %5, %cst_15 {dimension_numbers = #tpu.dot_dimension_numbers<[1], [0], [0], [1], [0, 0, 1, 1], [], []>} : vector<8x32xf32>, vector<32x128xf32>, vector<8x128xf32> -> vector<8x128xf32>
    %19 = arith.addf %17, %18 : vector<8x128xf32>
    %20 = arith.negf %19 : vector<8x128xf32>
    %21 = math.exp %20 : vector<8x128xf32>
    %cst_16 = arith.constant 1.000000e+00 : f32
    %22 = vector.broadcast %cst_16 : f32 to vector<8x128xf32>
    %23 = arith.addf %22, %21 : vector<8x128xf32>
    %24 = arith.divf %22, %23 : vector<8x128xf32>
    %25 = math.tanh %19 : vector<8x128xf32>
    %26 = vector.extract_strided_slice %24 {offsets = [0, 0], sizes = [8, 32], strides = [1, 1]} : vector<8x128xf32> to vector<8x32xf32>
    %27 = vector.extract_strided_slice %24 {offsets = [0, 32], sizes = [8, 32], strides = [1, 1]} : vector<8x128xf32> to vector<8x32xf32>
    %28 = vector.extract_strided_slice %25 {offsets = [0, 64], sizes = [8, 32], strides = [1, 1]} : vector<8x128xf32> to vector<8x32xf32>
    %29 = vector.extract_strided_slice %24 {offsets = [0, 96], sizes = [8, 32], strides = [1, 1]} : vector<8x128xf32> to vector<8x32xf32>
    %30 = arith.mulf %27, %15 : vector<8x32xf32>
    %31 = arith.mulf %26, %28 : vector<8x32xf32>
    %32 = arith.addf %30, %31 : vector<8x32xf32>
    %33 = math.tanh %32 : vector<8x32xf32>
    %34 = arith.mulf %29, %33 : vector<8x32xf32>
    %c0_17 = arith.constant 0 : index
    %c0_18 = arith.constant 0 : index
    %c0_19 = arith.constant 0 : index
    %35 = vector.load %arg14[%c0_17, %c0_18, %c0_19] : memref<8x8x32xf32, #tpu.memory_space<vmem>>, vector<1x8x32xf32>
    %36 = vector.shape_cast %35 : vector<1x8x32xf32> to vector<8x32xf32>
    %37 = vector.shape_cast %34 : vector<8x32xf32> to vector<1x8x32xf32>
    tpu.vector_store %arg14[%c0_17, %c0_18, %c0_19], %37 {strides = array<i32>} : memref<8x8x32xf32, #tpu.memory_space<vmem>>, vector<1x8x32xf32>,
    %38 = vector.extract_strided_slice %11 {offsets = [1, 0, 0], sizes = [1, 8, 128], strides = [1, 1, 1]} : vector<8x8x128xf32> to vector<1x8x128xf32>
    %39 = vector.shape_cast %38 : vector<1x8x128xf32> to vector<8x128xf32>
    %cst_20 = arith.constant dense<0.000000e+00> : vector<8x128xf32>
    %40 = tpu.matmul %34, %5, %cst_20 {dimension_numbers = #tpu.dot_dimension_numbers<[1], [0], [0], [1], [0, 0, 1, 1], [], []>} : vector<8x32xf32>, vector<32x128xf32>, vector<8x128xf32> -> vector<8x128xf32>
    %41 = arith.addf %39, %40 : vector<8x128xf32>
    %42 = arith.negf %41 : vector<8x128xf32>
    %43 = math.exp %42 : vector<8x128xf32>
    %cst_21 = arith.constant 1.000000e+00 : f32
    %44 = vector.broadcast %cst_21 : f32 to vector<8x128xf32>
    %45 = arith.addf %44, %43 : vector<8x128xf32>
    %46 = arith.divf %44, %45 : vector<8x128xf32>
    %47 = math.tanh %41 : vector<8x128xf32>
    %48 = vector.extract_strided_slice %46 {offsets = [0, 0], sizes = [8, 32], strides = [1, 1]} : vector<8x128xf32> to vector<8x32xf32>
    %49 = vector.extract_strided_slice %46 {offsets = [0, 32], sizes = [8, 32], strides = [1, 1]} : vector<8x128xf32> to vector<8x32xf32>
    %50 = vector.extract_strided_slice %47 {offsets = [0, 64], sizes = [8, 32], strides = [1, 1]} : vector<8x128xf32> to vector<8x32xf32>
    %51 = vector.extract_strided_slice %46 {offsets = [0, 96], sizes = [8, 32], strides = [1, 1]} : vector<8x128xf32> to vector<8x32xf32>
    %52 = arith.mulf %49, %32 : vector<8x32xf32>
    %53 = arith.mulf %48, %50 : vector<8x32xf32>
    %54 = arith.addf %52, %53 : vector<8x32xf32>
    %55 = math.tanh %54 : vector<8x32xf32>
    %56 = arith.mulf %51, %55 : vector<8x32xf32>
    %c1 = arith.constant 1 : index
    %c0_22 = arith.constant 0 : index
    %c0_23 = arith.constant 0 : index
    %57 = vector.load %arg14[%c1, %c0_22, %c0_23] : memref<8x8x32xf32, #tpu.memory_space<vmem>>, vector<1x8x32xf32>
    %58 = vector.shape_cast %57 : vector<1x8x32xf32> to vector<8x32xf32>
    %59 = vector.shape_cast %56 : vector<8x32xf32> to vector<1x8x32xf32>
    tpu.vector_store %arg14[%c1, %c0_22, %c0_23], %59 {strides = array<i32>} : memref<8x8x32xf32, #tpu.memory_space<vmem>>, vector<1x8x32xf32>,
    %60 = vector.extract_strided_slice %11 {offsets = [2, 0, 0], sizes = [1, 8, 128], strides = [1, 1, 1]} : vector<8x8x128xf32> to vector<1x8x128xf32>
    %61 = vector.shape_cast %60 : vector<1x8x128xf32> to vector<8x128xf32>
    %cst_24 = arith.constant dense<0.000000e+00> : vector<8x128xf32>
    %62 = tpu.matmul %56, %5, %cst_24 {dimension_numbers = #tpu.dot_dimension_numbers<[1], [0], [0], [1], [0, 0, 1, 1], [], []>} : vector<8x32xf32>, vector<32x128xf32>, vector<8x128xf32> -> vector<8x128xf32>
    %63 = arith.addf %61, %62 : vector<8x128xf32>
    %64 = arith.negf %63 : vector<8x128xf32>
    %65 = math.exp %64 : vector<8x128xf32>
    %cst_25 = arith.constant 1.000000e+00 : f32
    %66 = vector.broadcast %cst_25 : f32 to vector<8x128xf32>
    %67 = arith.addf %66, %65 : vector<8x128xf32>
    %68 = arith.divf %66, %67 : vector<8x128xf32>
    %69 = math.tanh %63 : vector<8x128xf32>
    %70 = vector.extract_strided_slice %68 {offsets = [0, 0], sizes = [8, 32], strides = [1, 1]} : vector<8x128xf32> to vector<8x32xf32>
    %71 = vector.extract_strided_slice %68 {offsets = [0, 32], sizes = [8, 32], strides = [1, 1]} : vector<8x128xf32> to vector<8x32xf32>
    %72 = vector.extract_strided_slice %69 {offsets = [0, 64], sizes = [8, 32], strides = [1, 1]} : vector<8x128xf32> to vector<8x32xf32>
    %73 = vector.extract_strided_slice %68 {offsets = [0, 96], sizes = [8, 32], strides = [1, 1]} : vector<8x128xf32> to vector<8x32xf32>
    %74 = arith.mulf %71, %54 : vector<8x32xf32>
    %75 = arith.mulf %70, %72 : vector<8x32xf32>
    %76 = arith.addf %74, %75 : vector<8x32xf32>
    %77 = math.tanh %76 : vector<8x32xf32>
    %78 = arith.mulf %73, %77 : vector<8x32xf32>
    %c2 = arith.constant 2 : index
    %c0_26 = arith.constant 0 : index
    %c0_27 = arith.constant 0 : index
    %79 = vector.load %arg14[%c2, %c0_26, %c0_27] : memref<8x8x32xf32, #tpu.memory_space<vmem>>, vector<1x8x32xf32>
    %80 = vector.shape_cast %79 : vector<1x8x32xf32> to vector<8x32xf32>
    %81 = vector.shape_cast %78 : vector<8x32xf32> to vector<1x8x32xf32>
    tpu.vector_store %arg14[%c2, %c0_26, %c0_27], %81 {strides = array<i32>} : memref<8x8x32xf32, #tpu.memory_space<vmem>>, vector<1x8x32xf32>,
    %82 = vector.extract_strided_slice %11 {offsets = [3, 0, 0], sizes = [1, 8, 128], strides = [1, 1, 1]} : vector<8x8x128xf32> to vector<1x8x128xf32>
    %83 = vector.shape_cast %82 : vector<1x8x128xf32> to vector<8x128xf32>
    %cst_28 = arith.constant dense<0.000000e+00> : vector<8x128xf32>
    %84 = tpu.matmul %78, %5, %cst_28 {dimension_numbers = #tpu.dot_dimension_numbers<[1], [0], [0], [1], [0, 0, 1, 1], [], []>} : vector<8x32xf32>, vector<32x128xf32>, vector<8x128xf32> -> vector<8x128xf32>
    %85 = arith.addf %83, %84 : vector<8x128xf32>
    %86 = arith.negf %85 : vector<8x128xf32>
    %87 = math.exp %86 : vector<8x128xf32>
    %cst_29 = arith.constant 1.000000e+00 : f32
    %88 = vector.broadcast %cst_29 : f32 to vector<8x128xf32>
    %89 = arith.addf %88, %87 : vector<8x128xf32>
    %90 = arith.divf %88, %89 : vector<8x128xf32>
    %91 = math.tanh %85 : vector<8x128xf32>
    %92 = vector.extract_strided_slice %90 {offsets = [0, 0], sizes = [8, 32], strides = [1, 1]} : vector<8x128xf32> to vector<8x32xf32>
    %93 = vector.extract_strided_slice %90 {offsets = [0, 32], sizes = [8, 32], strides = [1, 1]} : vector<8x128xf32> to vector<8x32xf32>
    %94 = vector.extract_strided_slice %91 {offsets = [0, 64], sizes = [8, 32], strides = [1, 1]} : vector<8x128xf32> to vector<8x32xf32>
    %95 = vector.extract_strided_slice %90 {offsets = [0, 96], sizes = [8, 32], strides = [1, 1]} : vector<8x128xf32> to vector<8x32xf32>
    %96 = arith.mulf %93, %76 : vector<8x32xf32>
    %97 = arith.mulf %92, %94 : vector<8x32xf32>
    %98 = arith.addf %96, %97 : vector<8x32xf32>
    %99 = math.tanh %98 : vector<8x32xf32>
    %100 = arith.mulf %95, %99 : vector<8x32xf32>
    %c3 = arith.constant 3 : index
    %c0_30 = arith.constant 0 : index
    %c0_31 = arith.constant 0 : index
    %101 = vector.load %arg14[%c3, %c0_30, %c0_31] : memref<8x8x32xf32, #tpu.memory_space<vmem>>, vector<1x8x32xf32>
    %102 = vector.shape_cast %101 : vector<1x8x32xf32> to vector<8x32xf32>
    %103 = vector.shape_cast %100 : vector<8x32xf32> to vector<1x8x32xf32>
    tpu.vector_store %arg14[%c3, %c0_30, %c0_31], %103 {strides = array<i32>} : memref<8x8x32xf32, #tpu.memory_space<vmem>>, vector<1x8x32xf32>,
    %104 = vector.extract_strided_slice %11 {offsets = [4, 0, 0], sizes = [1, 8, 128], strides = [1, 1, 1]} : vector<8x8x128xf32> to vector<1x8x128xf32>
    %105 = vector.shape_cast %104 : vector<1x8x128xf32> to vector<8x128xf32>
    %cst_32 = arith.constant dense<0.000000e+00> : vector<8x128xf32>
    %106 = tpu.matmul %100, %5, %cst_32 {dimension_numbers = #tpu.dot_dimension_numbers<[1], [0], [0], [1], [0, 0, 1, 1], [], []>} : vector<8x32xf32>, vector<32x128xf32>, vector<8x128xf32> -> vector<8x128xf32>
    %107 = arith.addf %105, %106 : vector<8x128xf32>
    %108 = arith.negf %107 : vector<8x128xf32>
    %109 = math.exp %108 : vector<8x128xf32>
    %cst_33 = arith.constant 1.000000e+00 : f32
    %110 = vector.broadcast %cst_33 : f32 to vector<8x128xf32>
    %111 = arith.addf %110, %109 : vector<8x128xf32>
    %112 = arith.divf %110, %111 : vector<8x128xf32>
    %113 = math.tanh %107 : vector<8x128xf32>
    %114 = vector.extract_strided_slice %112 {offsets = [0, 0], sizes = [8, 32], strides = [1, 1]} : vector<8x128xf32> to vector<8x32xf32>
    %115 = vector.extract_strided_slice %112 {offsets = [0, 32], sizes = [8, 32], strides = [1, 1]} : vector<8x128xf32> to vector<8x32xf32>
    %116 = vector.extract_strided_slice %113 {offsets = [0, 64], sizes = [8, 32], strides = [1, 1]} : vector<8x128xf32> to vector<8x32xf32>
    %117 = vector.extract_strided_slice %112 {offsets = [0, 96], sizes = [8, 32], strides = [1, 1]} : vector<8x128xf32> to vector<8x32xf32>
    %118 = arith.mulf %115, %98 : vector<8x32xf32>
    %119 = arith.mulf %114, %116 : vector<8x32xf32>
    %120 = arith.addf %118, %119 : vector<8x32xf32>
    %121 = math.tanh %120 : vector<8x32xf32>
    %122 = arith.mulf %117, %121 : vector<8x32xf32>
    %c4 = arith.constant 4 : index
    %c0_34 = arith.constant 0 : index
    %c0_35 = arith.constant 0 : index
    %123 = vector.load %arg14[%c4, %c0_34, %c0_35] : memref<8x8x32xf32, #tpu.memory_space<vmem>>, vector<1x8x32xf32>
    %124 = vector.shape_cast %123 : vector<1x8x32xf32> to vector<8x32xf32>
    %125 = vector.shape_cast %122 : vector<8x32xf32> to vector<1x8x32xf32>
    tpu.vector_store %arg14[%c4, %c0_34, %c0_35], %125 {strides = array<i32>} : memref<8x8x32xf32, #tpu.memory_space<vmem>>, vector<1x8x32xf32>,
    %126 = vector.extract_strided_slice %11 {offsets = [5, 0, 0], sizes = [1, 8, 128], strides = [1, 1, 1]} : vector<8x8x128xf32> to vector<1x8x128xf32>
    %127 = vector.shape_cast %126 : vector<1x8x128xf32> to vector<8x128xf32>
    %cst_36 = arith.constant dense<0.000000e+00> : vector<8x128xf32>
    %128 = tpu.matmul %122, %5, %cst_36 {dimension_numbers = #tpu.dot_dimension_numbers<[1], [0], [0], [1], [0, 0, 1, 1], [], []>} : vector<8x32xf32>, vector<32x128xf32>, vector<8x128xf32> -> vector<8x128xf32>
    %129 = arith.addf %127, %128 : vector<8x128xf32>
    %130 = arith.negf %129 : vector<8x128xf32>
    %131 = math.exp %130 : vector<8x128xf32>
    %cst_37 = arith.constant 1.000000e+00 : f32
    %132 = vector.broadcast %cst_37 : f32 to vector<8x128xf32>
    %133 = arith.addf %132, %131 : vector<8x128xf32>
    %134 = arith.divf %132, %133 : vector<8x128xf32>
    %135 = math.tanh %129 : vector<8x128xf32>
    %136 = vector.extract_strided_slice %134 {offsets = [0, 0], sizes = [8, 32], strides = [1, 1]} : vector<8x128xf32> to vector<8x32xf32>
    %137 = vector.extract_strided_slice %134 {offsets = [0, 32], sizes = [8, 32], strides = [1, 1]} : vector<8x128xf32> to vector<8x32xf32>
    %138 = vector.extract_strided_slice %135 {offsets = [0, 64], sizes = [8, 32], strides = [1, 1]} : vector<8x128xf32> to vector<8x32xf32>
    %139 = vector.extract_strided_slice %134 {offsets = [0, 96], sizes = [8, 32], strides = [1, 1]} : vector<8x128xf32> to vector<8x32xf32>
    %140 = arith.mulf %137, %120 : vector<8x32xf32>
    %141 = arith.mulf %136, %138 : vector<8x32xf32>
    %142 = arith.addf %140, %141 : vector<8x32xf32>
    %143 = math.tanh %142 : vector<8x32xf32>
    %144 = arith.mulf %139, %143 : vector<8x32xf32>
    %c5 = arith.constant 5 : index
    %c0_38 = arith.constant 0 : index
    %c0_39 = arith.constant 0 : index
    %145 = vector.load %arg14[%c5, %c0_38, %c0_39] : memref<8x8x32xf32, #tpu.memory_space<vmem>>, vector<1x8x32xf32>
    %146 = vector.shape_cast %145 : vector<1x8x32xf32> to vector<8x32xf32>
    %147 = vector.shape_cast %144 : vector<8x32xf32> to vector<1x8x32xf32>
    tpu.vector_store %arg14[%c5, %c0_38, %c0_39], %147 {strides = array<i32>} : memref<8x8x32xf32, #tpu.memory_space<vmem>>, vector<1x8x32xf32>,
    %148 = vector.extract_strided_slice %11 {offsets = [6, 0, 0], sizes = [1, 8, 128], strides = [1, 1, 1]} : vector<8x8x128xf32> to vector<1x8x128xf32>
    %149 = vector.shape_cast %148 : vector<1x8x128xf32> to vector<8x128xf32>
    %cst_40 = arith.constant dense<0.000000e+00> : vector<8x128xf32>
    %150 = tpu.matmul %144, %5, %cst_40 {dimension_numbers = #tpu.dot_dimension_numbers<[1], [0], [0], [1], [0, 0, 1, 1], [], []>} : vector<8x32xf32>, vector<32x128xf32>, vector<8x128xf32> -> vector<8x128xf32>
    %151 = arith.addf %149, %150 : vector<8x128xf32>
    %152 = arith.negf %151 : vector<8x128xf32>
    %153 = math.exp %152 : vector<8x128xf32>
    %cst_41 = arith.constant 1.000000e+00 : f32
    %154 = vector.broadcast %cst_41 : f32 to vector<8x128xf32>
    %155 = arith.addf %154, %153 : vector<8x128xf32>
    %156 = arith.divf %154, %155 : vector<8x128xf32>
    %157 = math.tanh %151 : vector<8x128xf32>
    %158 = vector.extract_strided_slice %156 {offsets = [0, 0], sizes = [8, 32], strides = [1, 1]} : vector<8x128xf32> to vector<8x32xf32>
    %159 = vector.extract_strided_slice %156 {offsets = [0, 32], sizes = [8, 32], strides = [1, 1]} : vector<8x128xf32> to vector<8x32xf32>
    %160 = vector.extract_strided_slice %157 {offsets = [0, 64], sizes = [8, 32], strides = [1, 1]} : vector<8x128xf32> to vector<8x32xf32>
    %161 = vector.extract_strided_slice %156 {offsets = [0, 96], sizes = [8, 32], strides = [1, 1]} : vector<8x128xf32> to vector<8x32xf32>
    %162 = arith.mulf %159, %142 : vector<8x32xf32>
    %163 = arith.mulf %158, %160 : vector<8x32xf32>
    %164 = arith.addf %162, %163 : vector<8x32xf32>
    %165 = math.tanh %164 : vector<8x32xf32>
    %166 = arith.mulf %161, %165 : vector<8x32xf32>
    %c6 = arith.constant 6 : index
    %c0_42 = arith.constant 0 : index
    %c0_43 = arith.constant 0 : index
    %167 = vector.load %arg14[%c6, %c0_42, %c0_43] : memref<8x8x32xf32, #tpu.memory_space<vmem>>, vector<1x8x32xf32>
    %168 = vector.shape_cast %167 : vector<1x8x32xf32> to vector<8x32xf32>
    %169 = vector.shape_cast %166 : vector<8x32xf32> to vector<1x8x32xf32>
    tpu.vector_store %arg14[%c6, %c0_42, %c0_43], %169 {strides = array<i32>} : memref<8x8x32xf32, #tpu.memory_space<vmem>>, vector<1x8x32xf32>,
    %170 = vector.extract_strided_slice %11 {offsets = [7, 0, 0], sizes = [1, 8, 128], strides = [1, 1, 1]} : vector<8x8x128xf32> to vector<1x8x128xf32>
    %171 = vector.shape_cast %170 : vector<1x8x128xf32> to vector<8x128xf32>
    %cst_44 = arith.constant dense<0.000000e+00> : vector<8x128xf32>
    %172 = tpu.matmul %166, %5, %cst_44 {dimension_numbers = #tpu.dot_dimension_numbers<[1], [0], [0], [1], [0, 0, 1, 1], [], []>} : vector<8x32xf32>, vector<32x128xf32>, vector<8x128xf32> -> vector<8x128xf32>
    %173 = arith.addf %171, %172 : vector<8x128xf32>
    %174 = arith.negf %173 : vector<8x128xf32>
    %175 = math.exp %174 : vector<8x128xf32>
    %cst_45 = arith.constant 1.000000e+00 : f32
    %176 = vector.broadcast %cst_45 : f32 to vector<8x128xf32>
    %177 = arith.addf %176, %175 : vector<8x128xf32>
    %178 = arith.divf %176, %177 : vector<8x128xf32>
    %179 = math.tanh %173 : vector<8x128xf32>
    %180 = vector.extract_strided_slice %178 {offsets = [0, 0], sizes = [8, 32], strides = [1, 1]} : vector<8x128xf32> to vector<8x32xf32>
    %181 = vector.extract_strided_slice %178 {offsets = [0, 32], sizes = [8, 32], strides = [1, 1]} : vector<8x128xf32> to vector<8x32xf32>
    %182 = vector.extract_strided_slice %179 {offsets = [0, 64], sizes = [8, 32], strides = [1, 1]} : vector<8x128xf32> to vector<8x32xf32>
    %183 = vector.extract_strided_slice %178 {offsets = [0, 96], sizes = [8, 32], strides = [1, 1]} : vector<8x128xf32> to vector<8x32xf32>
    %184 = arith.mulf %181, %164 : vector<8x32xf32>
    %185 = arith.mulf %180, %182 : vector<8x32xf32>
    %186 = arith.addf %184, %185 : vector<8x32xf32>
    %187 = math.tanh %186 : vector<8x32xf32>
    %188 = arith.mulf %183, %187 : vector<8x32xf32>
    %c7 = arith.constant 7 : index
    %c0_46 = arith.constant 0 : index
    %c0_47 = arith.constant 0 : index
    %189 = vector.load %arg14[%c7, %c0_46, %c0_47] : memref<8x8x32xf32, #tpu.memory_space<vmem>>, vector<1x8x32xf32>
    %190 = vector.shape_cast %189 : vector<1x8x32xf32> to vector<8x32xf32>
    %191 = vector.shape_cast %188 : vector<8x32xf32> to vector<1x8x32xf32>
    tpu.vector_store %arg14[%c7, %c0_46, %c0_47], %191 {strides = array<i32>} : memref<8x8x32xf32, #tpu.memory_space<vmem>>, vector<1x8x32xf32>,
    %c0_48 = arith.constant 0 : index
    %c0_49 = arith.constant 0 : index
    %c0_50 = arith.constant 0 : index
    %192 = vector.load %arg12[%c0_48, %c0_49, %c0_50] : memref<2x8x32xf32, #tpu.memory_space<vmem>>, vector<1x8x32xf32>
    %193 = vector.shape_cast %192 : vector<1x8x32xf32> to vector<8x32xf32>
    %194 = vector.shape_cast %188 : vector<8x32xf32> to vector<1x8x32xf32>
    tpu.vector_store %arg12[%c0_48, %c0_49, %c0_50], %194 {strides = array<i32>} : memref<2x8x32xf32, #tpu.memory_space<vmem>>, vector<1x8x32xf32>,
    %c0_51 = arith.constant 0 : index
    %c0_52 = arith.constant 0 : index
    %c0_53 = arith.constant 0 : index
    %195 = vector.load %arg13[%c0_51, %c0_52, %c0_53] : memref<2x8x32xf32, #tpu.memory_space<vmem>>, vector<1x8x32xf32>
    %196 = vector.shape_cast %195 : vector<1x8x32xf32> to vector<8x32xf32>
    %197 = vector.shape_cast %186 : vector<8x32xf32> to vector<1x8x32xf32>
    tpu.vector_store %arg13[%c0_51, %c0_52, %c0_53], %197 {strides = array<i32>} : memref<2x8x32xf32, #tpu.memory_space<vmem>>, vector<1x8x32xf32>,
    %c0_54 = arith.constant 0 : index
    %c0_55 = arith.constant 0 : index
    %c0_56 = arith.constant 0 : index
    %198 = vector.load %arg14[%c0_54, %c0_55, %c0_56] : memref<8x8x32xf32, #tpu.memory_space<vmem>>, vector<8x8x32xf32>
    %c0_57 = arith.constant 0 : index
    %c0_58 = arith.constant 0 : index
    %199 = vector.load %arg6[%c0_57, %c0_58] : memref<32x128xf32, #tpu.memory_space<vmem>>, vector<32x128xf32>
    %c0_59 = arith.constant 0 : index
    %c0_60 = arith.constant 0 : index
    %200 = vector.load %arg7[%c0_59, %c0_60] : memref<32x128xf32, #tpu.memory_space<vmem>>, vector<32x128xf32>
    %c0_61 = arith.constant 0 : index
    %c0_62 = arith.constant 0 : index
    %201 = vector.load %arg8[%c0_61, %c0_62] : memref<1x128xf32, #tpu.memory_space<vmem>>, vector<1x128xf32>
    %202 = vector.shape_cast %198 : vector<8x8x32xf32> to vector<64x32xf32>
    %cst_63 = arith.constant dense<0.000000e+00> : vector<64x128xf32>
    %203 = tpu.matmul %202, %199, %cst_63 {dimension_numbers = #tpu.dot_dimension_numbers<[1], [0], [0], [1], [0, 0, 1, 1], [], []>} : vector<64x32xf32>, vector<32x128xf32>, vector<64x128xf32> -> vector<64x128xf32>
    %204 = vector.broadcast %201 : vector<1x128xf32> to vector<64x128xf32>
    %205 = arith.addf %203, %204 : vector<64x128xf32>
    %206 = vector.shape_cast %205 : vector<64x128xf32> to vector<8x8x128xf32>
    %c1_64 = arith.constant 1 : index
    %c0_65 = arith.constant 0 : index
    %c0_66 = arith.constant 0 : index
    %207 = vector.load %arg12[%c1_64, %c0_65, %c0_66] : memref<2x8x32xf32, #tpu.memory_space<vmem>>, vector<1x8x32xf32>
    %208 = vector.shape_cast %207 : vector<1x8x32xf32> to vector<8x32xf32>
    %c1_67 = arith.constant 1 : index
    %c0_68 = arith.constant 0 : index
    %c0_69 = arith.constant 0 : index
    %209 = vector.load %arg13[%c1_67, %c0_68, %c0_69] : memref<2x8x32xf32, #tpu.memory_space<vmem>>, vector<1x8x32xf32>
    %210 = vector.shape_cast %209 : vector<1x8x32xf32> to vector<8x32xf32>
    %211 = vector.extract_strided_slice %206 {offsets = [0, 0, 0], sizes = [1, 8, 128], strides = [1, 1, 1]} : vector<8x8x128xf32> to vector<1x8x128xf32>
    %212 = vector.shape_cast %211 : vector<1x8x128xf32> to vector<8x128xf32>
    %cst_70 = arith.constant dense<0.000000e+00> : vector<8x128xf32>
    %213 = tpu.matmul %208, %200, %cst_70 {dimension_numbers = #tpu.dot_dimension_numbers<[1], [0], [0], [1], [0, 0, 1, 1], [], []>} : vector<8x32xf32>, vector<32x128xf32>, vector<8x128xf32> -> vector<8x128xf32>
    %214 = arith.addf %212, %213 : vector<8x128xf32>
    %215 = arith.negf %214 : vector<8x128xf32>
    %216 = math.exp %215 : vector<8x128xf32>
    %cst_71 = arith.constant 1.000000e+00 : f32
    %217 = vector.broadcast %cst_71 : f32 to vector<8x128xf32>
    %218 = arith.addf %217, %216 : vector<8x128xf32>
    %219 = arith.divf %217, %218 : vector<8x128xf32>
    %220 = math.tanh %214 : vector<8x128xf32>
    %221 = vector.extract_strided_slice %219 {offsets = [0, 0], sizes = [8, 32], strides = [1, 1]} : vector<8x128xf32> to vector<8x32xf32>
    %222 = vector.extract_strided_slice %219 {offsets = [0, 32], sizes = [8, 32], strides = [1, 1]} : vector<8x128xf32> to vector<8x32xf32>
    %223 = vector.extract_strided_slice %220 {offsets = [0, 64], sizes = [8, 32], strides = [1, 1]} : vector<8x128xf32> to vector<8x32xf32>
    %224 = vector.extract_strided_slice %219 {offsets = [0, 96], sizes = [8, 32], strides = [1, 1]} : vector<8x128xf32> to vector<8x32xf32>
    %225 = arith.mulf %222, %210 : vector<8x32xf32>
    %226 = arith.mulf %221, %223 : vector<8x32xf32>
    %227 = arith.addf %225, %226 : vector<8x32xf32>
    %228 = math.tanh %227 : vector<8x32xf32>
    %229 = arith.mulf %224, %228 : vector<8x32xf32>
    %230 = vector.extract_strided_slice %206 {offsets = [1, 0, 0], sizes = [1, 8, 128], strides = [1, 1, 1]} : vector<8x8x128xf32> to vector<1x8x128xf32>
    %231 = vector.shape_cast %230 : vector<1x8x128xf32> to vector<8x128xf32>
    %cst_72 = arith.constant dense<0.000000e+00> : vector<8x128xf32>
    %232 = tpu.matmul %229, %200, %cst_72 {dimension_numbers = #tpu.dot_dimension_numbers<[1], [0], [0], [1], [0, 0, 1, 1], [], []>} : vector<8x32xf32>, vector<32x128xf32>, vector<8x128xf32> -> vector<8x128xf32>
    %233 = arith.addf %231, %232 : vector<8x128xf32>
    %234 = arith.negf %233 : vector<8x128xf32>
    %235 = math.exp %234 : vector<8x128xf32>
    %cst_73 = arith.constant 1.000000e+00 : f32
    %236 = vector.broadcast %cst_73 : f32 to vector<8x128xf32>
    %237 = arith.addf %236, %235 : vector<8x128xf32>
    %238 = arith.divf %236, %237 : vector<8x128xf32>
    %239 = math.tanh %233 : vector<8x128xf32>
    %240 = vector.extract_strided_slice %238 {offsets = [0, 0], sizes = [8, 32], strides = [1, 1]} : vector<8x128xf32> to vector<8x32xf32>
    %241 = vector.extract_strided_slice %238 {offsets = [0, 32], sizes = [8, 32], strides = [1, 1]} : vector<8x128xf32> to vector<8x32xf32>
    %242 = vector.extract_strided_slice %239 {offsets = [0, 64], sizes = [8, 32], strides = [1, 1]} : vector<8x128xf32> to vector<8x32xf32>
    %243 = vector.extract_strided_slice %238 {offsets = [0, 96], sizes = [8, 32], strides = [1, 1]} : vector<8x128xf32> to vector<8x32xf32>
    %244 = arith.mulf %241, %227 : vector<8x32xf32>
    %245 = arith.mulf %240, %242 : vector<8x32xf32>
    %246 = arith.addf %244, %245 : vector<8x32xf32>
    %247 = math.tanh %246 : vector<8x32xf32>
    %248 = arith.mulf %243, %247 : vector<8x32xf32>
    %249 = vector.extract_strided_slice %206 {offsets = [2, 0, 0], sizes = [1, 8, 128], strides = [1, 1, 1]} : vector<8x8x128xf32> to vector<1x8x128xf32>
    %250 = vector.shape_cast %249 : vector<1x8x128xf32> to vector<8x128xf32>
    %cst_74 = arith.constant dense<0.000000e+00> : vector<8x128xf32>
    %251 = tpu.matmul %248, %200, %cst_74 {dimension_numbers = #tpu.dot_dimension_numbers<[1], [0], [0], [1], [0, 0, 1, 1], [], []>} : vector<8x32xf32>, vector<32x128xf32>, vector<8x128xf32> -> vector<8x128xf32>
    %252 = arith.addf %250, %251 : vector<8x128xf32>
    %253 = arith.negf %252 : vector<8x128xf32>
    %254 = math.exp %253 : vector<8x128xf32>
    %cst_75 = arith.constant 1.000000e+00 : f32
    %255 = vector.broadcast %cst_75 : f32 to vector<8x128xf32>
    %256 = arith.addf %255, %254 : vector<8x128xf32>
    %257 = arith.divf %255, %256 : vector<8x128xf32>
    %258 = math.tanh %252 : vector<8x128xf32>
    %259 = vector.extract_strided_slice %257 {offsets = [0, 0], sizes = [8, 32], strides = [1, 1]} : vector<8x128xf32> to vector<8x32xf32>
    %260 = vector.extract_strided_slice %257 {offsets = [0, 32], sizes = [8, 32], strides = [1, 1]} : vector<8x128xf32> to vector<8x32xf32>
    %261 = vector.extract_strided_slice %258 {offsets = [0, 64], sizes = [8, 32], strides = [1, 1]} : vector<8x128xf32> to vector<8x32xf32>
    %262 = vector.extract_strided_slice %257 {offsets = [0, 96], sizes = [8, 32], strides = [1, 1]} : vector<8x128xf32> to vector<8x32xf32>
    %263 = arith.mulf %260, %246 : vector<8x32xf32>
    %264 = arith.mulf %259, %261 : vector<8x32xf32>
    %265 = arith.addf %263, %264 : vector<8x32xf32>
    %266 = math.tanh %265 : vector<8x32xf32>
    %267 = arith.mulf %262, %266 : vector<8x32xf32>
    %268 = vector.extract_strided_slice %206 {offsets = [3, 0, 0], sizes = [1, 8, 128], strides = [1, 1, 1]} : vector<8x8x128xf32> to vector<1x8x128xf32>
    %269 = vector.shape_cast %268 : vector<1x8x128xf32> to vector<8x128xf32>
    %cst_76 = arith.constant dense<0.000000e+00> : vector<8x128xf32>
    %270 = tpu.matmul %267, %200, %cst_76 {dimension_numbers = #tpu.dot_dimension_numbers<[1], [0], [0], [1], [0, 0, 1, 1], [], []>} : vector<8x32xf32>, vector<32x128xf32>, vector<8x128xf32> -> vector<8x128xf32>
    %271 = arith.addf %269, %270 : vector<8x128xf32>
    %272 = arith.negf %271 : vector<8x128xf32>
    %273 = math.exp %272 : vector<8x128xf32>
    %cst_77 = arith.constant 1.000000e+00 : f32
    %274 = vector.broadcast %cst_77 : f32 to vector<8x128xf32>
    %275 = arith.addf %274, %273 : vector<8x128xf32>
    %276 = arith.divf %274, %275 : vector<8x128xf32>
    %277 = math.tanh %271 : vector<8x128xf32>
    %278 = vector.extract_strided_slice %276 {offsets = [0, 0], sizes = [8, 32], strides = [1, 1]} : vector<8x128xf32> to vector<8x32xf32>
    %279 = vector.extract_strided_slice %276 {offsets = [0, 32], sizes = [8, 32], strides = [1, 1]} : vector<8x128xf32> to vector<8x32xf32>
    %280 = vector.extract_strided_slice %277 {offsets = [0, 64], sizes = [8, 32], strides = [1, 1]} : vector<8x128xf32> to vector<8x32xf32>
    %281 = vector.extract_strided_slice %276 {offsets = [0, 96], sizes = [8, 32], strides = [1, 1]} : vector<8x128xf32> to vector<8x32xf32>
    %282 = arith.mulf %279, %265 : vector<8x32xf32>
    %283 = arith.mulf %278, %280 : vector<8x32xf32>
    %284 = arith.addf %282, %283 : vector<8x32xf32>
    %285 = math.tanh %284 : vector<8x32xf32>
    %286 = arith.mulf %281, %285 : vector<8x32xf32>
    %287 = vector.extract_strided_slice %206 {offsets = [4, 0, 0], sizes = [1, 8, 128], strides = [1, 1, 1]} : vector<8x8x128xf32> to vector<1x8x128xf32>
    %288 = vector.shape_cast %287 : vector<1x8x128xf32> to vector<8x128xf32>
    %cst_78 = arith.constant dense<0.000000e+00> : vector<8x128xf32>
    %289 = tpu.matmul %286, %200, %cst_78 {dimension_numbers = #tpu.dot_dimension_numbers<[1], [0], [0], [1], [0, 0, 1, 1], [], []>} : vector<8x32xf32>, vector<32x128xf32>, vector<8x128xf32> -> vector<8x128xf32>
    %290 = arith.addf %288, %289 : vector<8x128xf32>
    %291 = arith.negf %290 : vector<8x128xf32>
    %292 = math.exp %291 : vector<8x128xf32>
    %cst_79 = arith.constant 1.000000e+00 : f32
    %293 = vector.broadcast %cst_79 : f32 to vector<8x128xf32>
    %294 = arith.addf %293, %292 : vector<8x128xf32>
    %295 = arith.divf %293, %294 : vector<8x128xf32>
    %296 = math.tanh %290 : vector<8x128xf32>
    %297 = vector.extract_strided_slice %295 {offsets = [0, 0], sizes = [8, 32], strides = [1, 1]} : vector<8x128xf32> to vector<8x32xf32>
    %298 = vector.extract_strided_slice %295 {offsets = [0, 32], sizes = [8, 32], strides = [1, 1]} : vector<8x128xf32> to vector<8x32xf32>
    %299 = vector.extract_strided_slice %296 {offsets = [0, 64], sizes = [8, 32], strides = [1, 1]} : vector<8x128xf32> to vector<8x32xf32>
    %300 = vector.extract_strided_slice %295 {offsets = [0, 96], sizes = [8, 32], strides = [1, 1]} : vector<8x128xf32> to vector<8x32xf32>
    %301 = arith.mulf %298, %284 : vector<8x32xf32>
    %302 = arith.mulf %297, %299 : vector<8x32xf32>
    %303 = arith.addf %301, %302 : vector<8x32xf32>
    %304 = math.tanh %303 : vector<8x32xf32>
    %305 = arith.mulf %300, %304 : vector<8x32xf32>
    %306 = vector.extract_strided_slice %206 {offsets = [5, 0, 0], sizes = [1, 8, 128], strides = [1, 1, 1]} : vector<8x8x128xf32> to vector<1x8x128xf32>
    %307 = vector.shape_cast %306 : vector<1x8x128xf32> to vector<8x128xf32>
    %cst_80 = arith.constant dense<0.000000e+00> : vector<8x128xf32>
    %308 = tpu.matmul %305, %200, %cst_80 {dimension_numbers = #tpu.dot_dimension_numbers<[1], [0], [0], [1], [0, 0, 1, 1], [], []>} : vector<8x32xf32>, vector<32x128xf32>, vector<8x128xf32> -> vector<8x128xf32>
    %309 = arith.addf %307, %308 : vector<8x128xf32>
    %310 = arith.negf %309 : vector<8x128xf32>
    %311 = math.exp %310 : vector<8x128xf32>
    %cst_81 = arith.constant 1.000000e+00 : f32
    %312 = vector.broadcast %cst_81 : f32 to vector<8x128xf32>
    %313 = arith.addf %312, %311 : vector<8x128xf32>
    %314 = arith.divf %312, %313 : vector<8x128xf32>
    %315 = math.tanh %309 : vector<8x128xf32>
    %316 = vector.extract_strided_slice %314 {offsets = [0, 0], sizes = [8, 32], strides = [1, 1]} : vector<8x128xf32> to vector<8x32xf32>
    %317 = vector.extract_strided_slice %314 {offsets = [0, 32], sizes = [8, 32], strides = [1, 1]} : vector<8x128xf32> to vector<8x32xf32>
    %318 = vector.extract_strided_slice %315 {offsets = [0, 64], sizes = [8, 32], strides = [1, 1]} : vector<8x128xf32> to vector<8x32xf32>
    %319 = vector.extract_strided_slice %314 {offsets = [0, 96], sizes = [8, 32], strides = [1, 1]} : vector<8x128xf32> to vector<8x32xf32>
    %320 = arith.mulf %317, %303 : vector<8x32xf32>
    %321 = arith.mulf %316, %318 : vector<8x32xf32>
    %322 = arith.addf %320, %321 : vector<8x32xf32>
    %323 = math.tanh %322 : vector<8x32xf32>
    %324 = arith.mulf %319, %323 : vector<8x32xf32>
    %325 = vector.extract_strided_slice %206 {offsets = [6, 0, 0], sizes = [1, 8, 128], strides = [1, 1, 1]} : vector<8x8x128xf32> to vector<1x8x128xf32>
    %326 = vector.shape_cast %325 : vector<1x8x128xf32> to vector<8x128xf32>
    %cst_82 = arith.constant dense<0.000000e+00> : vector<8x128xf32>
    %327 = tpu.matmul %324, %200, %cst_82 {dimension_numbers = #tpu.dot_dimension_numbers<[1], [0], [0], [1], [0, 0, 1, 1], [], []>} : vector<8x32xf32>, vector<32x128xf32>, vector<8x128xf32> -> vector<8x128xf32>
    %328 = arith.addf %326, %327 : vector<8x128xf32>
    %329 = arith.negf %328 : vector<8x128xf32>
    %330 = math.exp %329 : vector<8x128xf32>
    %cst_83 = arith.constant 1.000000e+00 : f32
    %331 = vector.broadcast %cst_83 : f32 to vector<8x128xf32>
    %332 = arith.addf %331, %330 : vector<8x128xf32>
    %333 = arith.divf %331, %332 : vector<8x128xf32>
    %334 = math.tanh %328 : vector<8x128xf32>
    %335 = vector.extract_strided_slice %333 {offsets = [0, 0], sizes = [8, 32], strides = [1, 1]} : vector<8x128xf32> to vector<8x32xf32>
    %336 = vector.extract_strided_slice %333 {offsets = [0, 32], sizes = [8, 32], strides = [1, 1]} : vector<8x128xf32> to vector<8x32xf32>
    %337 = vector.extract_strided_slice %334 {offsets = [0, 64], sizes = [8, 32], strides = [1, 1]} : vector<8x128xf32> to vector<8x32xf32>
    %338 = vector.extract_strided_slice %333 {offsets = [0, 96], sizes = [8, 32], strides = [1, 1]} : vector<8x128xf32> to vector<8x32xf32>
    %339 = arith.mulf %336, %322 : vector<8x32xf32>
    %340 = arith.mulf %335, %337 : vector<8x32xf32>
    %341 = arith.addf %339, %340 : vector<8x32xf32>
    %342 = math.tanh %341 : vector<8x32xf32>
    %343 = arith.mulf %338, %342 : vector<8x32xf32>
    %344 = vector.extract_strided_slice %206 {offsets = [7, 0, 0], sizes = [1, 8, 128], strides = [1, 1, 1]} : vector<8x8x128xf32> to vector<1x8x128xf32>
    %345 = vector.shape_cast %344 : vector<1x8x128xf32> to vector<8x128xf32>
    %cst_84 = arith.constant dense<0.000000e+00> : vector<8x128xf32>
    %346 = tpu.matmul %343, %200, %cst_84 {dimension_numbers = #tpu.dot_dimension_numbers<[1], [0], [0], [1], [0, 0, 1, 1], [], []>} : vector<8x32xf32>, vector<32x128xf32>, vector<8x128xf32> -> vector<8x128xf32>
    %347 = arith.addf %345, %346 : vector<8x128xf32>
    %348 = arith.negf %347 : vector<8x128xf32>
    %349 = math.exp %348 : vector<8x128xf32>
    %cst_85 = arith.constant 1.000000e+00 : f32
    %350 = vector.broadcast %cst_85 : f32 to vector<8x128xf32>
    %351 = arith.addf %350, %349 : vector<8x128xf32>
    %352 = arith.divf %350, %351 : vector<8x128xf32>
    %353 = math.tanh %347 : vector<8x128xf32>
    %354 = vector.extract_strided_slice %352 {offsets = [0, 0], sizes = [8, 32], strides = [1, 1]} : vector<8x128xf32> to vector<8x32xf32>
    %355 = vector.extract_strided_slice %352 {offsets = [0, 32], sizes = [8, 32], strides = [1, 1]} : vector<8x128xf32> to vector<8x32xf32>
    %356 = vector.extract_strided_slice %353 {offsets = [0, 64], sizes = [8, 32], strides = [1, 1]} : vector<8x128xf32> to vector<8x32xf32>
    %357 = vector.extract_strided_slice %352 {offsets = [0, 96], sizes = [8, 32], strides = [1, 1]} : vector<8x128xf32> to vector<8x32xf32>
    %358 = arith.mulf %355, %341 : vector<8x32xf32>
    %359 = arith.mulf %354, %356 : vector<8x32xf32>
    %360 = arith.addf %358, %359 : vector<8x32xf32>
    %361 = math.tanh %360 : vector<8x32xf32>
    %362 = arith.mulf %357, %361 : vector<8x32xf32>
    %c1_86 = arith.constant 1 : index
    %c0_87 = arith.constant 0 : index
    %c0_88 = arith.constant 0 : index
    %363 = vector.load %arg12[%c1_86, %c0_87, %c0_88] : memref<2x8x32xf32, #tpu.memory_space<vmem>>, vector<1x8x32xf32>
    %364 = vector.shape_cast %363 : vector<1x8x32xf32> to vector<8x32xf32>
    %365 = vector.shape_cast %362 : vector<8x32xf32> to vector<1x8x32xf32>
    tpu.vector_store %arg12[%c1_86, %c0_87, %c0_88], %365 {strides = array<i32>} : memref<2x8x32xf32, #tpu.memory_space<vmem>>, vector<1x8x32xf32>,
    %c1_89 = arith.constant 1 : index
    %c0_90 = arith.constant 0 : index
    %c0_91 = arith.constant 0 : index
    %366 = vector.load %arg13[%c1_89, %c0_90, %c0_91] : memref<2x8x32xf32, #tpu.memory_space<vmem>>, vector<1x8x32xf32>
    %367 = vector.shape_cast %366 : vector<1x8x32xf32> to vector<8x32xf32>
    %368 = vector.shape_cast %360 : vector<8x32xf32> to vector<1x8x32xf32>
    tpu.vector_store %arg13[%c1_89, %c0_90, %c0_91], %368 {strides = array<i32>} : memref<2x8x32xf32, #tpu.memory_space<vmem>>, vector<1x8x32xf32>,
    %c1_i32 = arith.constant 1 : i32
    %369 = arith.cmpi eq, %arg1, %c1_i32 : i32
    %370 = arith.extui %369 : i1 to i32
    %c0_i32_92 = arith.constant 0 : i32
    %371 = arith.cmpi ne, %370, %c0_i32_92 : i32
    scf.if %371 {
      %c0_93 = arith.constant 0 : index
      %c0_94 = arith.constant 0 : index
      %372 = vector.load %arg9[%c0_93, %c0_94] : memref<32x4xf32, #tpu.memory_space<vmem>>, vector<32x4xf32>
      %cst_95 = arith.constant dense<0.000000e+00> : vector<8x4xf32>
      %373 = tpu.matmul %362, %372, %cst_95 {dimension_numbers = #tpu.dot_dimension_numbers<[1], [0], [0], [1], [0, 0, 1, 1], [], []>} : vector<8x32xf32>, vector<32x4xf32>, vector<8x4xf32> -> vector<8x4xf32>
      %c0_96 = arith.constant 0 : index
      %c0_97 = arith.constant 0 : index
      %374 = vector.load %arg10[%c0_96, %c0_97] : memref<1x4xf32, #tpu.memory_space<vmem>>, vector<1x4xf32>
      %375 = vector.broadcast %374 : vector<1x4xf32> to vector<8x4xf32>
      %376 = arith.addf %373, %375 : vector<8x4xf32>
      %c0_98 = arith.constant 0 : index
      %c0_99 = arith.constant 0 : index
      %377 = vector.load %arg11[%c0_98, %c0_99] : memref<8x4xf32, #tpu.memory_space<vmem>>, vector<8x4xf32>
      tpu.vector_store %arg11[%c0_98, %c0_99], %376 {strides = array<i32>} : memref<8x4xf32, #tpu.memory_space<vmem>>, vector<8x4xf32>,
    } else {
    }
    return
  }
  func.func @transform_0(%arg0: i32, %arg1: i32) -> (i32, i32, i32) {
    %c0_i32 = arith.constant 0 : i32
    %c0_i32_0 = arith.constant 0 : i32
    return %arg1, %arg0, %c0_i32 : i32, i32, i32
  }
  func.func @transform_1(%arg0: i32, %arg1: i32) -> (i32, i32) {
    %c0_i32 = arith.constant 0 : i32
    %c0_i32_0 = arith.constant 0 : i32
    %c0_i32_1 = arith.constant 0 : i32
    return %c0_i32, %c0_i32_0 : i32, i32
  }
  func.func @transform_2(%arg0: i32, %arg1: i32) -> (i32, i32) {
    %c0_i32 = arith.constant 0 : i32
    %c0_i32_0 = arith.constant 0 : i32
    %c0_i32_1 = arith.constant 0 : i32
    return %c0_i32, %c0_i32_0 : i32, i32
  }
  func.func @transform_3(%arg0: i32, %arg1: i32) -> (i32, i32) {
    %c0_i32 = arith.constant 0 : i32
    %c0_i32_0 = arith.constant 0 : i32
    %c0_i32_1 = arith.constant 0 : i32
    return %c0_i32, %c0_i32_0 : i32, i32
  }
  func.func @transform_4(%arg0: i32, %arg1: i32) -> (i32, i32) {
    %c0_i32 = arith.constant 0 : i32
    %c0_i32_0 = arith.constant 0 : i32
    %c0_i32_1 = arith.constant 0 : i32
    return %c0_i32, %c0_i32_0 : i32, i32
  }
  func.func @transform_5(%arg0: i32, %arg1: i32) -> (i32, i32) {
    %c0_i32 = arith.constant 0 : i32
    %c0_i32_0 = arith.constant 0 : i32
    %c0_i32_1 = arith.constant 0 : i32
    return %c0_i32, %c0_i32_0 : i32, i32
  }
  func.func @transform_6(%arg0: i32, %arg1: i32) -> (i32, i32) {
    %c0_i32 = arith.constant 0 : i32
    %c0_i32_0 = arith.constant 0 : i32
    %c0_i32_1 = arith.constant 0 : i32
    return %c0_i32, %c0_i32_0 : i32, i32
  }
  func.func @transform_7(%arg0: i32, %arg1: i32) -> (i32, i32) {
    %c0_i32 = arith.constant 0 : i32
    %c0_i32_0 = arith.constant 0 : i32
    %c0_i32_1 = arith.constant 0 : i32
    return %c0_i32, %c0_i32_0 : i32, i32
  }
  func.func @transform_8(%arg0: i32, %arg1: i32) -> (i32, i32) {
    %c0_i32 = arith.constant 0 : i32
    %c0_i32_0 = arith.constant 0 : i32
    %c0_i32_1 = arith.constant 0 : i32
    return %c0_i32, %c0_i32_0 : i32, i32
  }
  func.func @transform_9(%arg0: i32, %arg1: i32) -> (i32, i32) {
    %c0_i32 = arith.constant 0 : i32
    %c0_i32_0 = arith.constant 0 : i32
    return %arg0, %c0_i32 : i32, i32
  }
}

</mosaic_0001>

<llo_original>
// kernel: lstm_price_predictor.1
$region0: #{lstm_price_predictor.1}
  #allocation0 [shape = 'u32[]', space=smem, size = 0x4, offset = 0x4, fixed_abs, tag = 'smem constant byte address 0x4 - core index']
  #allocation1 [shape = 'u32[144,128]{1,0:T(1,128)}', space=vmem, size = 0x12000, scoped, tag = 'internal scratch']
  #allocation2 [shape = 'f32[2,8,32]{2,1,0:T(8,128)}', space=vmem, size = 0x2000, scoped, tag = 'scratch operand']
  #allocation3 [shape = 'f32[2,8,32]{2,1,0:T(8,128)}', space=vmem, size = 0x2000, scoped, tag = 'scratch operand']
  #allocation4 [shape = 'f32[8,8,32]{2,1,0:T(8,128)}', space=vmem, size = 0x8000, scoped, tag = 'scratch operand']
  %s0 = inlined_call_operand.vmem [shape: f32[16,8,16], index: 0, kind: input, shape index: {}]
  %s1 = inlined_call_operand.vmem [shape: f32[16,128], index: 1, kind: input, shape index: {}]
  %s2 = inlined_call_operand.vmem [shape: f32[32,128], index: 2, kind: input, shape index: {}]
  %s3 = inlined_call_operand.vmem [shape: f32[1,128], index: 3, kind: input, shape index: {}]
  %s4 = inlined_call_operand.vmem [shape: f32[32,128], index: 4, kind: input, shape index: {}]
  %s5 = inlined_call_operand.vmem [shape: f32[32,128], index: 5, kind: input, shape index: {}]
  %s6 = inlined_call_operand.vmem [shape: f32[1,128], index: 6, kind: input, shape index: {}]
  %s7 = inlined_call_operand.vmem [shape: f32[32,4], index: 7, kind: input, shape index: {}]
  %s8 = inlined_call_operand.vmem [shape: f32[1,4], index: 8, kind: input, shape index: {}]
  %s9 = inlined_call_operand.vmem [shape: f32[8,4], index: 9, kind: output, shape index: {}]
  %s10 = sld [smem:[#allocation0]]
  $region77: #{lstm_price_predictor.1} parent=0
    _
  %s12 = ssub.s32 1, %s10
  %s13 = scalar_select 0, %s12, %s10
  loop: start=0, step=1, limit=4
  $region2: #{lstm_price_predictor.1} parent=0 // loop_pre_header
    _
  $region3: #{lstm_price_predictor.1} parent=0 // loop_header
    %s15 = sphi 0, %s19
    %p16 = scmp.ge.s32.totalorder %s15, 4
    %s22 = sphi 0, %s34
    %s23 = sphi 0, %s30
    %s24 = sphi 0, %s22
    %s25 = sphi 0, %s23
    %s26 = sphi 0, %s24
    %s27 = sphi 0, %s25
    %s39 = sphi 0, %s41
    %s42 = sphi 0, %s39
    %s43 = sphi 0, %s42
    %s59 = sphi 0, %s43
    %s63 = sphi 0, %s63
    %s65 = sphi 0, %s63
    %s66 = sphi 0, %s65
    %s80 = sphi 0, %s66
    %s84 = sphi 0, %s84
    %s86 = sphi 0, %s84
    %s87 = sphi 0, %s86
    %s101 = sphi 0, %s87
    %s105 = sphi 0, %s105
    %s107 = sphi 0, %s105
    %s108 = sphi 0, %s107
    %s122 = sphi 0, %s108
    %s126 = sphi 0, %s126
    %s128 = sphi 0, %s126
    %s129 = sphi 0, %s128
    %s143 = sphi 0, %s129
    %s147 = sphi 0, %s147
    %s149 = sphi 0, %s147
    %s150 = sphi 0, %s149
    %s164 = sphi 0, %s150
    %s168 = sphi 0, %s168
    %s170 = sphi 0, %s168
    %s171 = sphi 0, %s170
    %s185 = sphi 0, %s171
    %s189 = sphi 0, %s189
    %s191 = sphi 0, %s189
    %s192 = sphi 0, %s191
    %s206 = sphi 0, %s192
    %s210 = sphi 0, %s210
    %s212 = sphi 0, %s210
    %s213 = sphi 0, %s212
    %s227 = sphi 0, %s213
    %s233 = sphi 0, %s235
    %s236 = sphi 0, %s233
    %s237 = sphi 0, %s236
    %s253 = sphi 0, %s237
  $region4: #{lstm_price_predictor.1} parent=0 // loop_header_branch
    %18 = sbr.rel (%p16) target = $region8
  $region5: #{lstm_price_predictor.1} parent=0 // loop_body
    %s20 = ssub.s32 %s15, 1
    %s21 = ssub.s32 %s15, 2
    %s28 = sadd.s32 1, %s23
    %p29 = scmp.ge.s32.totalorder %s28, 2
    %s30 = scalar_select %p29, 0, %s28
    %s31 = sadd.s32 1, %s22
    %s32 = scalar_select %p29, %s31, %s22
    %p33 = scmp.ge.s32.totalorder %s32, 1
    %s34 = scalar_select %p33, 0, %s32
    %s35 = ssub.s32 %s23, %s30
    %s36 = ssub.s32 %s22, %s34
    %s37 = sor.u32 %s35, %s36
    %p38 = scmp.eq.s32.totalorder %s37, 0
    %s40 = sadd.s32 %s39, 1
    %s41 = scalar_select %p38, %s39, %s40
    %p44 = pneg %p38
    %p45 = scmp.eq.s32.totalorder %s15, 1
    %p46 = por %p44, %p45
    %p47 = scmp.ne.s32.totalorder %s39, %s42
    %p48 = scmp.eq.s32.totalorder %s15, 0
    %p49 = por %p47, %p48
    %p50 = scmp.ne.s32.totalorder %s39, %s42
    %p51 = scmp.eq.s32.totalorder %s20, 1
    %p52 = por %p50, %p51
    %p53 = scmp.ne.s32.totalorder %s42, %s43
    %p54 = scmp.eq.s32.totalorder %s20, 0
    %p55 = por %p53, %p54
    %p56 = scmp.ne.s32.totalorder %s42, %s43
    %p57 = scmp.eq.s32.totalorder %s21, 1
    %p58 = por %p56, %p57
    %p60 = scmp.ne.s32.totalorder %s43, %s59
    %p61 = scmp.eq.s32.totalorder %s21, 0
    %p62 = por %p60, %p61
    %s64 = sadd.s32 %s63, 1
    %p67 = scmp.eq.s32.totalorder %s15, 1
    %p68 = scmp.ne.s32.totalorder %s63, %s65
    %p69 = scmp.eq.s32.totalorder %s15, 0
    %p70 = por %p68, %p69
    %p71 = scmp.ne.s32.totalorder %s63, %s65
    %p72 = scmp.eq.s32.totalorder %s20, 1
    %p73 = por %p71, %p72
    %p74 = scmp.ne.s32.totalorder %s65, %s66
    %p75 = scmp.eq.s32.totalorder %s20, 0
    %p76 = por %p74, %p75
    %p77 = scmp.ne.s32.totalorder %s65, %s66
    %p78 = scmp.eq.s32.totalorder %s21, 1
    %p79 = por %p77, %p78
    %p81 = scmp.ne.s32.totalorder %s66, %s80
    %p82 = scmp.eq.s32.totalorder %s21, 0
    %p83 = por %p81, %p82
    %s85 = sadd.s32 %s84, 1
    %p88 = scmp.eq.s32.totalorder %s15, 1
    %p89 = scmp.ne.s32.totalorder %s84, %s86
    %p90 = scmp.eq.s32.totalorder %s15, 0
    %p91 = por %p89, %p90
    %p92 = scmp.ne.s32.totalorder %s84, %s86
    %p93 = scmp.eq.s32.totalorder %s20, 1
    %p94 = por %p92, %p93
    %p95 = scmp.ne.s32.totalorder %s86, %s87
    %p96 = scmp.eq.s32.totalorder %s20, 0
    %p97 = por %p95, %p96
    %p98 = scmp.ne.s32.totalorder %s86, %s87
    %p99 = scmp.eq.s32.totalorder %s21, 1
    %p100 = por %p98, %p99
    %p102 = scmp.ne.s32.totalorder %s87, %s101
    %p103 = scmp.eq.s32.totalorder %s21, 0
    %p104 = por %p102, %p103
    %s106 = sadd.s32 %s105, 1
    %p109 = scmp.eq.s32.totalorder %s15, 1
    %p110 = scmp.ne.s32.totalorder %s105, %s107
    %p111 = scmp.eq.s32.totalorder %s15, 0
    %p112 = por %p110, %p111
    %p113 = scmp.ne.s32.totalorder %s105, %s107
    %p114 = scmp.eq.s32.totalorder %s20, 1
    %p115 = por %p113, %p114
    %p116 = scmp.ne.s32.totalorder %s107, %s108
    %p117 = scmp.eq.s32.totalorder %s20, 0
    %p118 = por %p116, %p117
    %p119 = scmp.ne.s32.totalorder %s107, %s108
    %p120 = scmp.eq.s32.totalorder %s21, 1
    %p121 = por %p119, %p120
    %p123 = scmp.ne.s32.totalorder %s108, %s122
    %p124 = scmp.eq.s32.totalorder %s21, 0
    %p125 = por %p123, %p124
    %s127 = sadd.s32 %s126, 1
    %p130 = scmp.eq.s32.totalorder %s15, 1
    %p131 = scmp.ne.s32.totalorder %s126, %s128
    %p132 = scmp.eq.s32.totalorder %s15, 0
    %p133 = por %p131, %p132
    %p134 = scmp.ne.s32.totalorder %s126, %s128
    %p135 = scmp.eq.s32.totalorder %s20, 1
    %p136 = por %p134, %p135
    %p137 = scmp.ne.s32.totalorder %s128, %s129
    %p138 = scmp.eq.s32.totalorder %s20, 0
    %p139 = por %p137, %p138
    %p140 = scmp.ne.s32.totalorder %s128, %s129
    %p141 = scmp.eq.s32.totalorder %s21, 1
    %p142 = por %p140, %p141
    %p144 = scmp.ne.s32.totalorder %s129, %s143
    %p145 = scmp.eq.s32.totalorder %s21, 0
    %p146 = por %p144, %p145
    %s148 = sadd.s32 %s147, 1
    %p151 = scmp.eq.s32.totalorder %s15, 1
    %p152 = scmp.ne.s32.totalorder %s147, %s149
    %p153 = scmp.eq.s32.totalorder %s15, 0
    %p154 = por %p152, %p153
    %p155 = scmp.ne.s32.totalorder %s147, %s149
    %p156 = scmp.eq.s32.totalorder %s20, 1
    %p157 = por %p155, %p156
    %p158 = scmp.ne.s32.totalorder %s149, %s150
    %p159 = scmp.eq.s32.totalorder %s20, 0
    %p160 = por %p158, %p159
    %p161 = scmp.ne.s32.totalorder %s149, %s150
    %p162 = scmp.eq.s32.totalorder %s21, 1
    %p163 = por %p161, %p162
    %p165 = scmp.ne.s32.totalorder %s150, %s164
    %p166 = scmp.eq.s32.totalorder %s21, 0
    %p167 = por %p165, %p166
    %s169 = sadd.s32 %s168, 1
    %p172 = scmp.eq.s32.totalorder %s15, 1
    %p173 = scmp.ne.s32.totalorder %s168, %s170
    %p174 = scmp.eq.s32.totalorder %s15, 0
    %p175 = por %p173, %p174
    %p176 = scmp.ne.s32.totalorder %s168, %s170
    %p177 = scmp.eq.s32.totalorder %s20, 1
    %p178 = por %p176, %p177
    %p179 = scmp.ne.s32.totalorder %s170, %s171
    %p180 = scmp.eq.s32.totalorder %s20, 0
    %p181 = por %p179, %p180
    %p182 = scmp.ne.s32.totalorder %s170, %s171
    %p183 = scmp.eq.s32.totalorder %s21, 1
    %p184 = por %p182, %p183
    %p186 = scmp.ne.s32.totalorder %s171, %s185
    %p187 = scmp.eq.s32.totalorder %s21, 0
    %p188 = por %p186, %p187
    %s190 = sadd.s32 %s189, 1
    %p193 = scmp.eq.s32.totalorder %s15, 1
    %p194 = scmp.ne.s32.totalorder %s189, %s191
    %p195 = scmp.eq.s32.totalorder %s15, 0
    %p196 = por %p194, %p195
    %p197 = scmp.ne.s32.totalorder %s189, %s191
    %p198 = scmp.eq.s32.totalorder %s20, 1
    %p199 = por %p197, %p198
    %p200 = scmp.ne.s32.totalorder %s191, %s192
    %p201 = scmp.eq.s32.totalorder %s20, 0
    %p202 = por %p200, %p201
    %p203 = scmp.ne.s32.totalorder %s191, %s192
    %p204 = scmp.eq.s32.totalorder %s21, 1
    %p205 = por %p203, %p204
    %p207 = scmp.ne.s32.totalorder %s192, %s206
    %p208 = scmp.eq.s32.totalorder %s21, 0
    %p209 = por %p207, %p208
    %s211 = sadd.s32 %s210, 1
    %p214 = scmp.eq.s32.totalorder %s15, 1
    %p215 = scmp.ne.s32.totalorder %s210, %s212
    %p216 = scmp.eq.s32.totalorder %s15, 0
    %p217 = por %p215, %p216
    %p218 = scmp.ne.s32.totalorder %s210, %s212
    %p219 = scmp.eq.s32.totalorder %s20, 1
    %p220 = por %p218, %p219
    %p221 = scmp.ne.s32.totalorder %s212, %s213
    %p222 = scmp.eq.s32.totalorder %s20, 0
    %p223 = por %p221, %p222
    %p224 = scmp.ne.s32.totalorder %s212, %s213
    %p225 = scmp.eq.s32.totalorder %s21, 1
    %p226 = por %p224, %p225
    %p228 = scmp.ne.s32.totalorder %s213, %s227
    %p229 = scmp.eq.s32.totalorder %s21, 0
    %p230 = por %p228, %p229
    %s231 = ssub.s32 %s22, %s34
    %p232 = scmp.eq.s32.totalorder %s231, 0
    %s234 = sadd.s32 %s233, 1
    %s235 = scalar_select %p232, %s233, %s234
    %p238 = pneg %p232
    %p239 = scmp.eq.s32.totalorder %s15, 1
    %p240 = por %p238, %p239
    %p241 = scmp.ne.s32.totalorder %s233, %s236
    %p242 = scmp.eq.s32.totalorder %s15, 0
    %p243 = por %p241, %p242
    %p244 = scmp.ne.s32.totalorder %s233, %s236
    %p245 = scmp.eq.s32.totalorder %s20, 1
    %p246 = por %p244, %p245
    %p247 = scmp.ne.s32.totalorder %s236, %s237
    %p248 = scmp.eq.s32.totalorder %s20, 0
    %p249 = por %p247, %p248
    %p250 = scmp.ne.s32.totalorder %s236, %s237
    %p251 = scmp.eq.s32.totalorder %s21, 1
    %p252 = por %p250, %p251
    %p254 = scmp.ne.s32.totalorder %s237, %s253
    %p255 = scmp.eq.s32.totalorder %s21, 0
    %p256 = por %p254, %p255
    %p257 = scmp.le.s32.totalorder 1, %s15
    %p258 = scmp.lt.s32.totalorder %s15, 3
    %p259 = pnand %p257, %p258
    %p260 = pneg %p259
    // Predicated region
    $region9: #{lstm_price_predictor.1} parent=5 // pred_check
      _
    $region10: #{lstm_price_predictor.1} parent=5 // pred_check_branch
      %262 = sbr.rel (%p259) target = $region12
    $region11: #{lstm_price_predictor.1} parent=5 // pred_region
      %s263 = ssub.s32 %s15, 1
      // Predicated region
      $region13: #{lstm_price_predictor.1} parent=11 // pred_check
        %p264 = pneg %p76
      $region14: #{lstm_price_predictor.1} parent=11 // pred_check_branch
        %266 = sbr.rel (%p264) target = $region16
      $region15: #{lstm_price_predictor.1} parent=11 // pred_region
        _
      $region16: #{lstm_price_predictor.1} parent=11 // pred_fallthru
        _
      // Predicated region
      $region17: #{lstm_price_predictor.1} parent=11 // pred_check
        %p267 = pneg %p97
      $region18: #{lstm_price_predictor.1} parent=11 // pred_check_branch
        %269 = sbr.rel (%p267) target = $region20
      $region19: #{lstm_price_predictor.1} parent=11 // pred_region
        _
      $region20: #{lstm_price_predictor.1} parent=11 // pred_fallthru
        _
      // Predicated region
      $region21: #{lstm_price_predictor.1} parent=11 // pred_check
        %p270 = pneg %p118
      $region22: #{lstm_price_predictor.1} parent=11 // pred_check_branch
        %272 = sbr.rel (%p270) target = $region24
      $region23: #{lstm_price_predictor.1} parent=11 // pred_region
        _
      $region24: #{lstm_price_predictor.1} parent=11 // pred_fallthru
        _
      // Predicated region
      $region25: #{lstm_price_predictor.1} parent=11 // pred_check
        %p273 = pneg %p139
      $region26: #{lstm_price_predictor.1} parent=11 // pred_check_branch
        %275 = sbr.rel (%p273) target = $region28
      $region27: #{lstm_price_predictor.1} parent=11 // pred_region
        _
      $region28: #{lstm_price_predictor.1} parent=11 // pred_fallthru
        _
      // Predicated region
      $region29: #{lstm_price_predictor.1} parent=11 // pred_check
        %p276 = pneg %p160
      $region30: #{lstm_price_predictor.1} parent=11 // pred_check_branch
        %278 = sbr.rel (%p276) target = $region32
      $region31: #{lstm_price_predictor.1} parent=11 // pred_region
        _
      $region32: #{lstm_price_predictor.1} parent=11 // pred_fallthru
        _
      // Predicated region
      $region33: #{lstm_price_predictor.1} parent=11 // pred_check
        %p279 = pneg %p181
      $region34: #{lstm_price_predictor.1} parent=11 // pred_check_branch
        %281 = sbr.rel (%p279) target = $region36
      $region35: #{lstm_price_predictor.1} parent=11 // pred_region
        _
      $region36: #{lstm_price_predictor.1} parent=11 // pred_fallthru
        _
      // Predicated region
      $region37: #{lstm_price_predictor.1} parent=11 // pred_check
        %p282 = pneg %p202
      $region38: #{lstm_price_predictor.1} parent=11 // pred_check_branch
        %284 = sbr.rel (%p282) target = $region40
      $region39: #{lstm_price_predictor.1} parent=11 // pred_region
        _
      $region40: #{lstm_price_predictor.1} parent=11 // pred_fallthru
        _
      // Predicated region
      $region41: #{lstm_price_predictor.1} parent=11 // pred_check
        %p285 = pneg %p223
      $region42: #{lstm_price_predictor.1} parent=11 // pred_check_branch
        %287 = sbr.rel (%p285) target = $region44
      $region43: #{lstm_price_predictor.1} parent=11 // pred_region
        _
      $region44: #{lstm_price_predictor.1} parent=11 // pred_fallthru
        _
    $region12: #{lstm_price_predictor.1} parent=5 // pred_fallthru
      _
    %p288 = scmp.lt.s32.totalorder %s15, 2
    // Predicated region
    $region45: #{lstm_price_predictor.1} parent=5 // pred_check
      %p289 = pneg %p288
    $region46: #{lstm_price_predictor.1} parent=5 // pred_check_branch
      %291 = sbr.rel (%p289) target = $region48
    $region47: #{lstm_price_predictor.1} parent=5 // pred_region
      // Predicated region
      $region49: #{lstm_price_predictor.1} parent=47 // pred_check
        %p292 = pneg %p49
      $region50: #{lstm_price_predictor.1} parent=47 // pred_check_branch
        %294 = sbr.rel (%p292) target = $region52
      $region51: #{lstm_price_predictor.1} parent=47 // pred_region
        %s295 = smul.u32 8, %s23
        %p296 = scmp.lt.s32.totalorder %s295, 15
        %s297 = scalar_select %p296, %s295, 15
        %p298 = scmp.lt.s32.totalorder %s22, 0
        %s299 = scalar_select %p298, %s22, 0
        %s300 = sadd.s32 %s299, %s297
        %s301 = smul.addr %s300, 8
        %s302 = scalar_lea.vmem %s0, %s301
        %s303 = smul.u32 8, %s23
      $region52: #{lstm_price_predictor.1} parent=47 // pred_fallthru
        _
    $region48: #{lstm_price_predictor.1} parent=5 // pred_fallthru
      _
    %p304 = scmp.le.s32.totalorder 1, %s15
    %p305 = scmp.lt.s32.totalorder %s15, 3
    %p306 = pnand %p304, %p305
    %p307 = pneg %p306
    // Predicated region
    $region53: #{lstm_price_predictor.1} parent=5 // pred_check
      _
    $region54: #{lstm_price_predictor.1} parent=5 // pred_check_branch
      %309 = sbr.rel (%p306) target = $region56
    $region55: #{lstm_price_predictor.1} parent=5 // pred_region
      %s310 = ssub.s32 %s15, 1
      %s311 = smul.u32 8, %s25
      %p312 = scmp.lt.s32.totalorder %s311, 15
      %s313 = scalar_select %p312, %s311, 15
      %p314 = scmp.lt.s32.totalorder %s24, 0
      %s315 = scalar_select %p314, %s24, 0
      %s316 = sadd.s32 %s315, %s313
      %s317 = smul.addr %s316, 8
      %s318 = scalar_lea.vmem %s0, %s317
      %p319 = pneg %p55
      %p320 = pneg %p52
      %p321 = pneg %p76
      %p322 = pneg %p73
      %p323 = pneg %p97
      %p324 = pneg %p94
      %p325 = pneg %p118
      %p326 = pneg %p115
      %p327 = pneg %p139
      %p328 = pneg %p136
      %p329 = pneg %p160
      %p330 = pneg %p157
      %p331 = pneg %p181
      %p332 = pneg %p178
      %p333 = pneg %p202
      %p334 = pneg %p199
      %p335 = pneg %p223
      %p336 = pneg %p220
      %p337 = pneg %p249
      %p338 = pneg %p246
      %p339 = scmp.lt.s32.totalorder %s24, 0
      %s340 = scalar_select %p339, %s24, 0
      %s341 = smul.addr %s340, 8
      %s342 = scalar_lea.vmem %s9, %s341
      %s343 = smul.u32 8, %s25
      %p344 = scmp.lt.s32.totalorder %s343, 15
      %s345 = scalar_select %p344, %s343, 15
      %p346 = scmp.lt.s32.totalorder %s24, 0
      %s347 = scalar_select %p346, %s24, 0
      %s348 = sadd.s32 %s347, %s345
      %s349 = smul.addr %s348, 8
      %s350 = scalar_lea.vmem %s0, %s349
      %s351 = smul.u32 8, %s25
      %p352 = scmp.lt.s32.totalorder %s24, 0
      %s353 = scalar_select %p352, %s24, 0
      %s354 = smul.addr %s353, 8
      %s355 = scalar_lea.vmem %s9, %s354
      %p356 = scmp.eq.s32.totalorder %s25, 0
      // Predicated region
      $region57: #{lstm_price_predictor.1} parent=55 // pred_check
        %p357 = pneg %p356
      $region58: #{lstm_price_predictor.1} parent=55 // pred_check_branch
        %359 = sbr.rel (%p357) target = $region60
      $region59: #{lstm_price_predictor.1} parent=55 // pred_region
        %vm360 = vcmask 261120
        %361 = vst.msk [vmem:[#allocation2] sm:$0xff] %vm360, 0.0
        %362 = vst.msk [vmem:[#allocation2 + $0x8] sm:$0xff] %vm360, 0.0
        %363 = vst.msk [vmem:[#allocation3] sm:$0xff] %vm360, 0.0
        %364 = vst.msk [vmem:[#allocation3 + $0x8] sm:$0xff] %vm360, 0.0
      $region60: #{lstm_price_predictor.1} parent=55 // pred_fallthru
        _
      %v365 = vld [vmem:[%s350] sm:$0xff]
      %v366 = vld [vmem:[%s350 + $0x8] sm:$0xff]
      %v367 = vld [vmem:[%s350 + $0x10] sm:$0xff]
      %v368 = vld [vmem:[%s350 + $0x18] sm:$0xff]
      %v369 = vld [vmem:[%s350 + $0x20] sm:$0xff]
      %v370 = vld [vmem:[%s350 + $0x28] sm:$0xff]
      %v371 = vld [vmem:[%s350 + $0x30] sm:$0xff]
      %v372 = vld [vmem:[%s350 + $0x38] sm:$0xff]
      %v373 = vld [vmem:[%s1] sm:$0xff]
      %v374 = vld [vmem:[%s1 + $0x8] sm:$0xff]
      %v375 = vld [vmem:[%s2] sm:$0xff]
      %v376 = vld [vmem:[%s2 + $0x8] sm:$0xff]
      %v377 = vld [vmem:[%s2 + $0x10] sm:$0xff]
      %v378 = vld [vmem:[%s2 + $0x18] sm:$0xff]
      %v379 = vld [vmem:[%s3] sm:$0x1]
      %v381 = vlaneseq
      %v382 = vshrl.u32 %v381, 7
      %v383 = vsub.s32 0, %v382
      %v384 = vrot.slane %v379, %v383
      %vm386 = vcmask 130048
      %v388 = vsel %vm386, %v365, 0
      %v391 = vsel %vm386, %v366, 0
      %v394 = vsel %vm386, %v367, 0
      %v397 = vsel %vm386, %v368, 0
      %v400 = vsel %vm386, %v369, 0
      %v403 = vsel %vm386, %v370, 0
      %v406 = vsel %vm386, %v371, 0
      %v409 = vsel %vm386, %v372, 0
      %411 = vmatprep.subr.mxu0 0.0
      %412 = vmatpush1.msra.mxu0 0.0
      %413 = vmatprep.subr.mxu0 0.0
      %414 = vmatpush1.msra.mxu0 0.0
      %415 = vmatprep.subr.mxu0 0.0
      %416 = vmatpush1.msra.mxu0 0.0
      %417 = vmatprep.subr.mxu0 0.0
      %418 = vmatpush1.msra.mxu0 0.0
      %419 = vmatprep.subr.mxu0 0.0
      %420 = vmatpush1.msra.mxu0 0.0
      %421 = vmatprep.subr.mxu0 0.0
      %422 = vmatpush1.msra.mxu0 0.0
      %423 = vmatprep.subr.mxu0 0.0
      %424 = vmatpush1.msra.mxu0 0.0
      %425 = vmatprep.subr.mxu0 0.0
      %426 = vmatpush1.msra.mxu0 0.0
      %427 = vmatprep.subr.mxu0 0.0
      %428 = vmatpush1.msra.mxu0 0.0
      %429 = vmatprep.subr.mxu0 0.0
      %430 = vmatpush1.msra.mxu0 0.0
      %431 = vmatprep.subr.mxu0 0.0
      %432 = vmatpush1.msra.mxu0 0.0
      %433 = vmatprep.subr.mxu0 0.0
      %434 = vmatpush1.msra.mxu0 0.0
      %435 = vmatprep.subr.mxu0 0.0
      %436 = vmatpush1.msra.mxu0 0.0
      %437 = vmatprep.subr.mxu0 0.0
      %438 = vmatpush1.msra.mxu0 0.0
      %439 = vmatprep.subr.mxu0 0.0
      %440 = vmatpush1.msra.mxu0 %v374
      %441 = vmatprep.subr.mxu0 0.0
      %442 = vmatpush1.msra.mxu0 %v373
      %443 = vmatprep.subr.mxu0 0.0
      %444 = vmatpush2.msra.mxu0 0.0
      %445 = vmatprep.subr.mxu0 0.0
      %446 = vmatpush2.msra.mxu0 0.0
      %447 = vmatprep.subr.mxu0 0.0
      %448 = vmatpush2.msra.mxu0 0.0
      %449 = vmatprep.subr.mxu0 0.0
      %450 = vmatpush2.msra.mxu0 0.0
      %451 = vmatprep.subr.mxu0 0.0
      %452 = vmatpush2.msra.mxu0 0.0
      %453 = vmatprep.subr.mxu0 0.0
      %454 = vmatpush2.msra.mxu0 0.0
      %455 = vmatprep.subr.mxu0 0.0
      %456 = vmatpush2.msra.mxu0 0.0
      %457 = vmatprep.subr.mxu0 0.0
      %458 = vmatpush2.msra.mxu0 0.0
      %459 = vmatprep.subr.mxu0 0.0
      %460 = vmatpush2.msra.mxu0 0.0
      %461 = vmatprep.subr.mxu0 0.0
      %462 = vmatpush2.msra.mxu0 0.0
      %463 = vmatprep.subr.mxu0 0.0
      %464 = vmatpush2.msra.mxu0 0.0
      %465 = vmatprep.subr.mxu0 0.0
      %466 = vmatpush2.msra.mxu0 0.0
      %467 = vmatprep.subr.mxu0 0.0
      %468 = vmatpush2.msra.mxu0 0.0
      %469 = vmatprep.subr.mxu0 0.0
      %470 = vmatpush2.msra.mxu0 0.0
      %471 = vmatprep.subr.mxu0 0.0
      %472 = vmatpush2.msra.mxu0 0.0
      %473 = vmatprep.subr.mxu0 0.0
      %474 = vmatpush2.msra.mxu0 0.0
      %475 = vmatprep.mubr.f32.mxu0 0.0
      %476 = vmatmul.mubr.f32.gmra.mxu0 %v388
      %v477 = vpop.f32.mrf.mxu0
      %v478 = vadd.f32 %v384, %v477
      %v479 = vpop.f32.mrf.mxu0
      %480 = vmatprep.mubr.f32.mxu0 0.0
      %481 = vmatmul.mubr.f32.gmra.mxu0 %v391
      %v482 = vpop.f32.mrf.mxu0
      %v483 = vadd.f32 %v384, %v482
      %v484 = vpop.f32.mrf.mxu0
      %485 = vmatprep.mubr.f32.mxu0 0.0
      %486 = vmatmul.mubr.f32.gmra.mxu0 %v394
      %v487 = vpop.f32.mrf.mxu0
      %v488 = vadd.f32 %v384, %v487
      %v489 = vpop.f32.mrf.mxu0
      %490 = vmatprep.mubr.f32.mxu0 0.0
      %491 = vmatmul.mubr.f32.gmra.mxu0 %v397
      %v492 = vpop.f32.mrf.mxu0
      %v493 = vadd.f32 %v384, %v492
      %v494 = vpop.f32.mrf.mxu0
      %495 = vmatprep.mubr.f32.mxu0 0.0
      %496 = vmatmul.mubr.f32.gmra.mxu0 %v400
      %v497 = vpop.f32.mrf.mxu0
      %v498 = vadd.f32 %v384, %v497
      %v499 = vpop.f32.mrf.mxu0
      %500 = vmatprep.mubr.f32.mxu0 0.0
      %501 = vmatmul.mubr.f32.gmra.mxu0 %v403
      %v502 = vpop.f32.mrf.mxu0
      %v503 = vadd.f32 %v384, %v502
      %v504 = vpop.f32.mrf.mxu0
      %505 = vmatprep.mubr.f32.mxu0 0.0
      %506 = vmatmul.mubr.f32.gmra.mxu0 %v406
      %v507 = vpop.f32.mrf.mxu0
      %v508 = vadd.f32 %v384, %v507
      %v509 = vpop.f32.mrf.mxu0
      %510 = vmatprep.mubr.f32.mxu0 0.0
      %511 = vmatmul.mubr.f32.gmra.mxu0 %v409
      %v512 = vpop.f32.mrf.mxu0
      %v513 = vadd.f32 %v384, %v512
      %v514 = vpop.f32.mrf.mxu0
      %515 = vdwg.mxu0
      %v516 = vld [vmem:[#allocation2] sm:$0xff]
      %v517 = vld [vmem:[#allocation3] sm:$0xff]
      %vm518 = vcmask 261120
      %v520 = vsel %vm518, %v516, 0
      %522 = vmatprep.subr.mxu0 0.0
      %523 = vmatpush1.msra.mxu0 0.0
      %524 = vmatprep.subr.mxu0 0.0
      %525 = vmatpush1.msra.mxu0 0.0
      %526 = vmatprep.subr.mxu0 0.0
      %527 = vmatpush1.msra.mxu0 0.0
      %528 = vmatprep.subr.mxu0 0.0
      %529 = vmatpush1.msra.mxu0 0.0
      %530 = vmatprep.subr.mxu0 0.0
      %531 = vmatpush1.msra.mxu0 0.0
      %532 = vmatprep.subr.mxu0 0.0
      %533 = vmatpush1.msra.mxu0 0.0
      %534 = vmatprep.subr.mxu0 0.0
      %535 = vmatpush1.msra.mxu0 0.0
      %536 = vmatprep.subr.mxu0 0.0
      %537 = vmatpush1.msra.mxu0 0.0
      %538 = vmatprep.subr.mxu0 0.0
      %539 = vmatpush1.msra.mxu0 0.0
      %540 = vmatprep.subr.mxu0 0.0
      %541 = vmatpush1.msra.mxu0 0.0
      %542 = vmatprep.subr.mxu0 0.0
      %543 = vmatpush1.msra.mxu0 0.0
      %544 = vmatprep.subr.mxu0 0.0
      %545 = vmatpush1.msra.mxu0 0.0
      %546 = vmatprep.subr.mxu0 0.0
      %547 = vmatpush1.msra.mxu0 %v378
      %548 = vmatprep.subr.mxu0 0.0
      %549 = vmatpush1.msra.mxu0 %v377
      %550 = vmatprep.subr.mxu0 0.0
      %551 = vmatpush1.msra.mxu0 %v376
      %552 = vmatprep.subr.mxu0 0.0
      %553 = vmatpush1.msra.mxu0 %v375
      %554 = vmatprep.subr.mxu0 0.0
      %555 = vmatpush2.msra.mxu0 0.0
      %556 = vmatprep.subr.mxu0 0.0
      %557 = vmatpush2.msra.mxu0 0.0
      %558 = vmatprep.subr.mxu0 0.0
      %559 = vmatpush2.msra.mxu0 0.0
      %560 = vmatprep.subr.mxu0 0.0
      %561 = vmatpush2.msra.mxu0 0.0
      %562 = vmatprep.subr.mxu0 0.0
      %563 = vmatpush2.msra.mxu0 0.0
      %564 = vmatprep.subr.mxu0 0.0
      %565 = vmatpush2.msra.mxu0 0.0
      %566 = vmatprep.subr.mxu0 0.0
      %567 = vmatpush2.msra.mxu0 0.0
      %568 = vmatprep.subr.mxu0 0.0
      %569 = vmatpush2.msra.mxu0 0.0
      %570 = vmatprep.subr.mxu0 0.0
      %571 = vmatpush2.msra.mxu0 0.0
      %572 = vmatprep.subr.mxu0 0.0
      %573 = vmatpush2.msra.mxu0 0.0
      %574 = vmatprep.subr.mxu0 0.0
      %575 = vmatpush2.msra.mxu0 0.0
      %576 = vmatprep.subr.mxu0 0.0
      %577 = vmatpush2.msra.mxu0 0.0
      %578 = vmatprep.subr.mxu0 0.0
      %579 = vmatpush2.msra.mxu0 0.0
      %580 = vmatprep.subr.mxu0 0.0
      %581 = vmatpush2.msra.mxu0 0.0
      %582 = vmatprep.subr.mxu0 0.0
      %583 = vmatpush2.msra.mxu0 0.0
      %584 = vmatprep.subr.mxu0 0.0
      %585 = vmatpush2.msra.mxu0 0.0
      %586 = vmatprep.mubr.f32.mxu0 0.0
      %587 = vmatmul.mubr.f32.gmra.mxu0 %v520
      %v588 = vpop.f32.mrf.mxu0
      %v589 = vadd.f32 0.0, %v588
      %v590 = vpop.f32.mrf.mxu0
      %591 = vdwg.mxu0
      %v592 = vadd.f32 %v478, %v589
      %v593 = vxor.u32 %v592, 2147483648
      %v594 = vmul.f32 %v593, 1.442695
      %v595 = vpow.pop %v594
      %v596 = vadd.f32 %v595, 1.0
      %v597 = vrcp.pop %v596
      %v598 = vmul.f32 1.0, %v597
      %v599 = vtanh.pop %v592
      %601 = vrot.lane.b32.xlu0 %v517, 32
      %v602 = vpop.permute.xlu0 %601
      %v604 = vmul.f32 %v598, %v602
      %606 = vrot.lane.b32.xlu0 %v599, 64
      %v607 = vpop.permute.xlu0 %606
      %v609 = vmul.f32 %v598, %v607
      %611 = vrot.lane.b32.xlu0 %v609, 32
      %v612 = vpop.permute.xlu0 %611
      %v614 = vadd.f32 %v604, %v612
      %v615 = vtanh.pop %v614
      %617 = vrot.lane.b32.xlu0 %v615, 64
      %v618 = vpop.permute.xlu0 %617
      %v620 = vmul.f32 %v598, %v618
      %622 = vrot.lane.b32.xlu0 %v620, 32
      %v623 = vpop.permute.xlu0 %622
      %625 = vst.msk [vmem:[#allocation4] sm:$0xff] %vm518, %v623
      %v626 = vsel %vm518, %v623, 0
      %628 = vmatprep.subr.mxu0 0.0
      %629 = vmatpush1.msra.mxu0 0.0
      %630 = vmatprep.subr.mxu0 0.0
      %631 = vmatpush1.msra.mxu0 0.0
      %632 = vmatprep.subr.mxu0 0.0
      %633 = vmatpush1.msra.mxu0 0.0
      %634 = vmatprep.subr.mxu0 0.0
      %635 = vmatpush1.msra.mxu0 0.0
      %636 = vmatprep.subr.mxu0 0.0
      %637 = vmatpush1.msra.mxu0 0.0
      %638 = vmatprep.subr.mxu0 0.0
      %639 = vmatpush1.msra.mxu0 0.0
      %640 = vmatprep.subr.mxu0 0.0
      %641 = vmatpush1.msra.mxu0 0.0
      %642 = vmatprep.subr.mxu0 0.0
      %643 = vmatpush1.msra.mxu0 0.0
      %644 = vmatprep.subr.mxu0 0.0
      %645 = vmatpush1.msra.mxu0 0.0
      %646 = vmatprep.subr.mxu0 0.0
      %647 = vmatpush1.msra.mxu0 0.0
      %648 = vmatprep.subr.mxu0 0.0
      %649 = vmatpush1.msra.mxu0 0.0
      %650 = vmatprep.subr.mxu0 0.0
      %651 = vmatpush1.msra.mxu0 0.0
      %652 = vmatprep.subr.mxu0 0.0
      %653 = vmatpush1.msra.mxu0 %v378
      %654 = vmatprep.subr.mxu0 0.0
      %655 = vmatpush1.msra.mxu0 %v377
      %656 = vmatprep.subr.mxu0 0.0
      %657 = vmatpush1.msra.mxu0 %v376
      %658 = vmatprep.subr.mxu0 0.0
      %659 = vmatpush1.msra.mxu0 %v375
      %660 = vmatprep.subr.mxu0 0.0
      %661 = vmatpush2.msra.mxu0 0.0
      %662 = vmatprep.subr.mxu0 0.0
      %663 = vmatpush2.msra.mxu0 0.0
      %664 = vmatprep.subr.mxu0 0.0
      %665 = vmatpush2.msra.mxu0 0.0
      %666 = vmatprep.subr.mxu0 0.0
      %667 = vmatpush2.msra.mxu0 0.0
      %668 = vmatprep.subr.mxu0 0.0
      %669 = vmatpush2.msra.mxu0 0.0
      %670 = vmatprep.subr.mxu0 0.0
      %671 = vmatpush2.msra.mxu0 0.0
      %672 = vmatprep.subr.mxu0 0.0
      %673 = vmatpush2.msra.mxu0 0.0
      %674 = vmatprep.subr.mxu0 0.0
      %675 = vmatpush2.msra.mxu0 0.0
      %676 = vmatprep.subr.mxu0 0.0
      %677 = vmatpush2.msra.mxu0 0.0
      %678 = vmatprep.subr.mxu0 0.0
      %679 = vmatpush2.msra.mxu0 0.0
      %680 = vmatprep.subr.mxu0 0.0
      %681 = vmatpush2.msra.mxu0 0.0
      %682 = vmatprep.subr.mxu0 0.0
      %683 = vmatpush2.msra.mxu0 0.0
      %684 = vmatprep.subr.mxu0 0.0
      %685 = vmatpush2.msra.mxu0 0.0
      %686 = vmatprep.subr.mxu0 0.0
      %687 = vmatpush2.msra.mxu0 0.0
      %688 = vmatprep.subr.mxu0 0.0
      %689 = vmatpush2.msra.mxu0 0.0
      %690 = vmatprep.subr.mxu0 0.0
      %691 = vmatpush2.msra.mxu0 0.0
      %692 = vmatprep.mubr.f32.mxu0 0.0
      %693 = vmatmul.mubr.f32.gmra.mxu0 %v626
      %v694 = vpop.f32.mrf.mxu0
      %v695 = vadd.f32 0.0, %v694
      %v696 = vpop.f32.mrf.mxu0
      %697 = vdwg.mxu0
      %v698 = vadd.f32 %v483, %v695
      %v699 = vxor.u32 %v698, 2147483648
      %v700 = vmul.f32 %v699, 1.442695
      %v701 = vpow.pop %v700
      %v702 = vadd.f32 %v701, 1.0
      %v703 = vrcp.pop %v702
      %v704 = vmul.f32 1.0, %v703
      %v705 = vtanh.pop %v698
      %v706 = vmul.f32 %v704, %v614
      %708 = vrot.lane.b32.xlu0 %v705, 64
      %v709 = vpop.permute.xlu0 %708
      %v711 = vmul.f32 %v704, %v709
      %713 = vrot.lane.b32.xlu0 %v711, 32
      %v714 = vpop.permute.xlu0 %713
      %v716 = vadd.f32 %v706, %v714
      %v717 = vtanh.pop %v716
      %719 = vrot.lane.b32.xlu0 %v717, 64
      %v720 = vpop.permute.xlu0 %719
      %v722 = vmul.f32 %v704, %v720
      %724 = vrot.lane.b32.xlu0 %v722, 32
      %v725 = vpop.permute.xlu0 %724
      %s727 = scalar_lea.vmem [#allocation4], 8
      %728 = vst.msk [vmem:[%s727] sm:$0xff] %vm518, %v725
      %v729 = vsel %vm518, %v725, 0
      %731 = vmatprep.subr.mxu0 0.0
      %732 = vmatpush1.msra.mxu0 0.0
      %733 = vmatprep.subr.mxu0 0.0
      %734 = vmatpush1.msra.mxu0 0.0
      %735 = vmatprep.subr.mxu0 0.0
      %736 = vmatpush1.msra.mxu0 0.0
      %737 = vmatprep.subr.mxu0 0.0
      %738 = vmatpush1.msra.mxu0 0.0
      %739 = vmatprep.subr.mxu0 0.0
      %740 = vmatpush1.msra.mxu0 0.0
      %741 = vmatprep.subr.mxu0 0.0
      %742 = vmatpush1.msra.mxu0 0.0
      %743 = vmatprep.subr.mxu0 0.0
      %744 = vmatpush1.msra.mxu0 0.0
      %745 = vmatprep.subr.mxu0 0.0
      %746 = vmatpush1.msra.mxu0 0.0
      %747 = vmatprep.subr.mxu0 0.0
      %748 = vmatpush1.msra.mxu0 0.0
      %749 = vmatprep.subr.mxu0 0.0
      %750 = vmatpush1.msra.mxu0 0.0
      %751 = vmatprep.subr.mxu0 0.0
      %752 = vmatpush1.msra.mxu0 0.0
      %753 = vmatprep.subr.mxu0 0.0
      %754 = vmatpush1.msra.mxu0 0.0
      %755 = vmatprep.subr.mxu0 0.0
      %756 = vmatpush1.msra.mxu0 %v378
      %757 = vmatprep.subr.mxu0 0.0
      %758 = vmatpush1.msra.mxu0 %v377
      %759 = vmatprep.subr.mxu0 0.0
      %760 = vmatpush1.msra.mxu0 %v376
      %761 = vmatprep.subr.mxu0 0.0
      %762 = vmatpush1.msra.mxu0 %v375
      %763 = vmatprep.subr.mxu0 0.0
      %764 = vmatpush2.msra.mxu0 0.0
      %765 = vmatprep.subr.mxu0 0.0
      %766 = vmatpush2.msra.mxu0 0.0
      %767 = vmatprep.subr.mxu0 0.0
      %768 = vmatpush2.msra.mxu0 0.0
      %769 = vmatprep.subr.mxu0 0.0
      %770 = vmatpush2.msra.mxu0 0.0
      %771 = vmatprep.subr.mxu0 0.0
      %772 = vmatpush2.msra.mxu0 0.0
      %773 = vmatprep.subr.mxu0 0.0
      %774 = vmatpush2.msra.mxu0 0.0
      %775 = vmatprep.subr.mxu0 0.0
      %776 = vmatpush2.msra.mxu0 0.0
      %777 = vmatprep.subr.mxu0 0.0
      %778 = vmatpush2.msra.mxu0 0.0
      %779 = vmatprep.subr.mxu0 0.0
      %780 = vmatpush2.msra.mxu0 0.0
      %781 = vmatprep.subr.mxu0 0.0
      %782 = vmatpush2.msra.mxu0 0.0
      %783 = vmatprep.subr.mxu0 0.0
      %784 = vmatpush2.msra.mxu0 0.0
      %785 = vmatprep.subr.mxu0 0.0
      %786 = vmatpush2.msra.mxu0 0.0
      %787 = vmatprep.subr.mxu0 0.0
      %788 = vmatpush2.msra.mxu0 0.0
      %789 = vmatprep.subr.mxu0 0.0
      %790 = vmatpush2.msra.mxu0 0.0
      %791 = vmatprep.subr.mxu0 0.0
      %792 = vmatpush2.msra.mxu0 0.0
      %793 = vmatprep.subr.mxu0 0.0
      %794 = vmatpush2.msra.mxu0 0.0
      %795 = vmatprep.mubr.f32.mxu0 0.0
      %796 = vmatmul.mubr.f32.gmra.mxu0 %v729
      %v797 = vpop.f32.mrf.mxu0
      %v798 = vadd.f32 0.0, %v797
      %v799 = vpop.f32.mrf.mxu0
      %800 = vdwg.mxu0
      %v801 = vadd.f32 %v488, %v798
      %v802 = vxor.u32 %v801, 2147483648
      %v803 = vmul.f32 %v802, 1.442695
      %v804 = vpow.pop %v803
      %v805 = vadd.f32 %v804, 1.0
      %v806 = vrcp.pop %v805
      %v807 = vmul.f32 1.0, %v806
      %v808 = vtanh.pop %v801
      %v809 = vmul.f32 %v807, %v716
      %811 = vrot.lane.b32.xlu0 %v808, 64
      %v812 = vpop.permute.xlu0 %811
      %v814 = vmul.f32 %v807, %v812
      %816 = vrot.lane.b32.xlu0 %v814, 32
      %v817 = vpop.permute.xlu0 %816
      %v819 = vadd.f32 %v809, %v817
      %v820 = vtanh.pop %v819
      %822 = vrot.lane.b32.xlu0 %v820, 64
      %v823 = vpop.permute.xlu0 %822
      %v825 = vmul.f32 %v807, %v823
      %827 = vrot.lane.b32.xlu0 %v825, 32
      %v828 = vpop.permute.xlu0 %827
      %s830 = scalar_lea.vmem [#allocation4], 16
      %831 = vst.msk [vmem:[%s830] sm:$0xff] %vm518, %v828
      %v832 = vsel %vm518, %v828, 0
      %834 = vmatprep.subr.mxu0 0.0
      %835 = vmatpush1.msra.mxu0 0.0
      %836 = vmatprep.subr.mxu0 0.0
      %837 = vmatpush1.msra.mxu0 0.0
      %838 = vmatprep.subr.mxu0 0.0
      %839 = vmatpush1.msra.mxu0 0.0
      %840 = vmatprep.subr.mxu0 0.0
      %841 = vmatpush1.msra.mxu0 0.0
      %842 = vmatprep.subr.mxu0 0.0
      %843 = vmatpush1.msra.mxu0 0.0
      %844 = vmatprep.subr.mxu0 0.0
      %845 = vmatpush1.msra.mxu0 0.0
      %846 = vmatprep.subr.mxu0 0.0
      %847 = vmatpush1.msra.mxu0 0.0
      %848 = vmatprep.subr.mxu0 0.0
      %849 = vmatpush1.msra.mxu0 0.0
      %850 = vmatprep.subr.mxu0 0.0
      %851 = vmatpush1.msra.mxu0 0.0
      %852 = vmatprep.subr.mxu0 0.0
      %853 = vmatpush1.msra.mxu0 0.0
      %854 = vmatprep.subr.mxu0 0.0
      %855 = vmatpush1.msra.mxu0 0.0
      %856 = vmatprep.subr.mxu0 0.0
      %857 = vmatpush1.msra.mxu0 0.0
      %858 = vmatprep.subr.mxu0 0.0
      %859 = vmatpush1.msra.mxu0 %v378
      %860 = vmatprep.subr.mxu0 0.0
      %861 = vmatpush1.msra.mxu0 %v377
      %862 = vmatprep.subr.mxu0 0.0
      %863 = vmatpush1.msra.mxu0 %v376
      %864 = vmatprep.subr.mxu0 0.0
      %865 = vmatpush1.msra.mxu0 %v375
      %866 = vmatprep.subr.mxu0 0.0
      %867 = vmatpush2.msra.mxu0 0.0
      %868 = vmatprep.subr.mxu0 0.0
      %869 = vmatpush2.msra.mxu0 0.0
      %870 = vmatprep.subr.mxu0 0.0
      %871 = vmatpush2.msra.mxu0 0.0
      %872 = vmatprep.subr.mxu0 0.0
      %873 = vmatpush2.msra.mxu0 0.0
      %874 = vmatprep.subr.mxu0 0.0
      %875 = vmatpush2.msra.mxu0 0.0
      %876 = vmatprep.subr.mxu0 0.0
      %877 = vmatpush2.msra.mxu0 0.0
      %878 = vmatprep.subr.mxu0 0.0
      %879 = vmatpush2.msra.mxu0 0.0
      %880 = vmatprep.subr.mxu0 0.0
      %881 = vmatpush2.msra.mxu0 0.0
      %882 = vmatprep.subr.mxu0 0.0
      %883 = vmatpush2.msra.mxu0 0.0
      %884 = vmatprep.subr.mxu0 0.0
      %885 = vmatpush2.msra.mxu0 0.0
      %886 = vmatprep.subr.mxu0 0.0
      %887 = vmatpush2.msra.mxu0 0.0
      %888 = vmatprep.subr.mxu0 0.0
      %889 = vmatpush2.msra.mxu0 0.0
      %890 = vmatprep.subr.mxu0 0.0
      %891 = vmatpush2.msra.mxu0 0.0
      %892 = vmatprep.subr.mxu0 0.0
      %893 = vmatpush2.msra.mxu0 0.0
      %894 = vmatprep.subr.mxu0 0.0
      %895 = vmatpush2.msra.mxu0 0.0
      %896 = vmatprep.subr.mxu0 0.0
      %897 = vmatpush2.msra.mxu0 0.0
      %898 = vmatprep.mubr.f32.mxu0 0.0
      %899 = vmatmul.mubr.f32.gmra.mxu0 %v832
      %v900 = vpop.f32.mrf.mxu0
      %v901 = vadd.f32 0.0, %v900
      %v902 = vpop.f32.mrf.mxu0
      %903 = vdwg.mxu0
      %v904 = vadd.f32 %v493, %v901
      %v905 = vxor.u32 %v904, 2147483648
      %v906 = vmul.f32 %v905, 1.442695
      %v907 = vpow.pop %v906
      %v908 = vadd.f32 %v907, 1.0
      %v909 = vrcp.pop %v908
      %v910 = vmul.f32 1.0, %v909
      %v911 = vtanh.pop %v904
      %v912 = vmul.f32 %v910, %v819
      %914 = vrot.lane.b32.xlu0 %v911, 64
      %v915 = vpop.permute.xlu0 %914
      %v917 = vmul.f32 %v910, %v915
      %919 = vrot.lane.b32.xlu0 %v917, 32
      %v920 = vpop.permute.xlu0 %919
      %v922 = vadd.f32 %v912, %v920
      %v923 = vtanh.pop %v922
      %925 = vrot.lane.b32.xlu0 %v923, 64
      %v926 = vpop.permute.xlu0 %925
      %v928 = vmul.f32 %v910, %v926
      %930 = vrot.lane.b32.xlu0 %v928, 32
      %v931 = vpop.permute.xlu0 %930
      %s933 = scalar_lea.vmem [#allocation4], 24
      %934 = vst.msk [vmem:[%s933] sm:$0xff] %vm518, %v931
      %v935 = vsel %vm518, %v931, 0
      %937 = vmatprep.subr.mxu0 0.0
      %938 = vmatpush1.msra.mxu0 0.0
      %939 = vmatprep.subr.mxu0 0.0
      %940 = vmatpush1.msra.mxu0 0.0
      %941 = vmatprep.subr.mxu0 0.0
      %942 = vmatpush1.msra.mxu0 0.0
      %943 = vmatprep.subr.mxu0 0.0
      %944 = vmatpush1.msra.mxu0 0.0
      %945 = vmatprep.subr.mxu0 0.0
      %946 = vmatpush1.msra.mxu0 0.0
      %947 = vmatprep.subr.mxu0 0.0
      %948 = vmatpush1.msra.mxu0 0.0
      %949 = vmatprep.subr.mxu0 0.0
      %950 = vmatpush1.msra.mxu0 0.0
      %951 = vmatprep.subr.mxu0 0.0
      %952 = vmatpush1.msra.mxu0 0.0
      %953 = vmatprep.subr.mxu0 0.0
      %954 = vmatpush1.msra.mxu0 0.0
      %955 = vmatprep.subr.mxu0 0.0
      %956 = vmatpush1.msra.mxu0 0.0
      %957 = vmatprep.subr.mxu0 0.0
      %958 = vmatpush1.msra.mxu0 0.0
      %959 = vmatprep.subr.mxu0 0.0
      %960 = vmatpush1.msra.mxu0 0.0
      %961 = vmatprep.subr.mxu0 0.0
      %962 = vmatpush1.msra.mxu0 %v378
      %963 = vmatprep.subr.mxu0 0.0
      %964 = vmatpush1.msra.mxu0 %v377
      %965 = vmatprep.subr.mxu0 0.0
      %966 = vmatpush1.msra.mxu0 %v376
      %967 = vmatprep.subr.mxu0 0.0
      %968 = vmatpush1.msra.mxu0 %v375
      %969 = vmatprep.subr.mxu0 0.0
      %970 = vmatpush2.msra.mxu0 0.0
      %971 = vmatprep.subr.mxu0 0.0
      %972 = vmatpush2.msra.mxu0 0.0
      %973 = vmatprep.subr.mxu0 0.0
      %974 = vmatpush2.msra.mxu0 0.0
      %975 = vmatprep.subr.mxu0 0.0
      %976 = vmatpush2.msra.mxu0 0.0
      %977 = vmatprep.subr.mxu0 0.0
      %978 = vmatpush2.msra.mxu0 0.0
      %979 = vmatprep.subr.mxu0 0.0
      %980 = vmatpush2.msra.mxu0 0.0
      %981 = vmatprep.subr.mxu0 0.0
      %982 = vmatpush2.msra.mxu0 0.0
      %983 = vmatprep.subr.mxu0 0.0
      %984 = vmatpush2.msra.mxu0 0.0
      %985 = vmatprep.subr.mxu0 0.0
      %986 = vmatpush2.msra.mxu0 0.0
      %987 = vmatprep.subr.mxu0 0.0
      %988 = vmatpush2.msra.mxu0 0.0
      %989 = vmatprep.subr.mxu0 0.0
      %990 = vmatpush2.msra.mxu0 0.0
      %991 = vmatprep.subr.mxu0 0.0
      %992 = vmatpush2.msra.mxu0 0.0
      %993 = vmatprep.subr.mxu0 0.0
      %994 = vmatpush2.msra.mxu0 0.0
      %995 = vmatprep.subr.mxu0 0.0
      %996 = vmatpush2.msra.mxu0 0.0
      %997 = vmatprep.subr.mxu0 0.0
      %998 = vmatpush2.msra.mxu0 0.0
      %999 = vmatprep.subr.mxu0 0.0
      %1000 = vmatpush2.msra.mxu0 0.0
      %1001 = vmatprep.mubr.f32.mxu0 0.0
      %1002 = vmatmul.mubr.f32.gmra.mxu0 %v935
      %v1003 = vpop.f32.mrf.mxu0
      %v1004 = vadd.f32 0.0, %v1003
      %v1005 = vpop.f32.mrf.mxu0
      %1006 = vdwg.mxu0
      %v1007 = vadd.f32 %v498, %v1004
      %v1008 = vxor.u32 %v1007, 2147483648
      %v1009 = vmul.f32 %v1008, 1.442695
      %v1010 = vpow.pop %v1009
      %v1011 = vadd.f32 %v1010, 1.0
      %v1012 = vrcp.pop %v1011
      %v1013 = vmul.f32 1.0, %v1012
      %v1014 = vtanh.pop %v1007
      %v1015 = vmul.f32 %v1013, %v922
      %1017 = vrot.lane.b32.xlu0 %v1014, 64
      %v1018 = vpop.permute.xlu0 %1017
      %v1020 = vmul.f32 %v1013, %v1018
      %1022 = vrot.lane.b32.xlu0 %v1020, 32
      %v1023 = vpop.permute.xlu0 %1022
      %v1025 = vadd.f32 %v1015, %v1023
      %v1026 = vtanh.pop %v1025
      %1028 = vrot.lane.b32.xlu0 %v1026, 64
      %v1029 = vpop.permute.xlu0 %1028
      %v1031 = vmul.f32 %v1013, %v1029
      %1033 = vrot.lane.b32.xlu0 %v1031, 32
      %v1034 = vpop.permute.xlu0 %1033
      %s1036 = scalar_lea.vmem [#allocation4], 32
      %1037 = vst.msk [vmem:[%s1036] sm:$0xff] %vm518, %v1034
      %v1038 = vsel %vm518, %v1034, 0
      %1040 = vmatprep.subr.mxu0 0.0
      %1041 = vmatpush1.msra.mxu0 0.0
      %1042 = vmatprep.subr.mxu0 0.0
      %1043 = vmatpush1.msra.mxu0 0.0
      %1044 = vmatprep.subr.mxu0 0.0
      %1045 = vmatpush1.msra.mxu0 0.0
      %1046 = vmatprep.subr.mxu0 0.0
      %1047 = vmatpush1.msra.mxu0 0.0
      %1048 = vmatprep.subr.mxu0 0.0
      %1049 = vmatpush1.msra.mxu0 0.0
      %1050 = vmatprep.subr.mxu0 0.0
      %1051 = vmatpush1.msra.mxu0 0.0
      %1052 = vmatprep.subr.mxu0 0.0
      %1053 = vmatpush1.msra.mxu0 0.0
      %1054 = vmatprep.subr.mxu0 0.0
      %1055 = vmatpush1.msra.mxu0 0.0
      %1056 = vmatprep.subr.mxu0 0.0
      %1057 = vmatpush1.msra.mxu0 0.0
      %1058 = vmatprep.subr.mxu0 0.0
      %1059 = vmatpush1.msra.mxu0 0.0
      %1060 = vmatprep.subr.mxu0 0.0
      %1061 = vmatpush1.msra.mxu0 0.0
      %1062 = vmatprep.subr.mxu0 0.0
      %1063 = vmatpush1.msra.mxu0 0.0
      %1064 = vmatprep.subr.mxu0 0.0
      %1065 = vmatpush1.msra.mxu0 %v378
      %1066 = vmatprep.subr.mxu0 0.0
      %1067 = vmatpush1.msra.mxu0 %v377
      %1068 = vmatprep.subr.mxu0 0.0
      %1069 = vmatpush1.msra.mxu0 %v376
      %1070 = vmatprep.subr.mxu0 0.0
      %1071 = vmatpush1.msra.mxu0 %v375
      %1072 = vmatprep.subr.mxu0 0.0
      %1073 = vmatpush2.msra.mxu0 0.0
      %1074 = vmatprep.subr.mxu0 0.0
      %1075 = vmatpush2.msra.mxu0 0.0
      %1076 = vmatprep.subr.mxu0 0.0
      %1077 = vmatpush2.msra.mxu0 0.0
      %1078 = vmatprep.subr.mxu0 0.0
      %1079 = vmatpush2.msra.mxu0 0.0
      %1080 = vmatprep.subr.mxu0 0.0
      %1081 = vmatpush2.msra.mxu0 0.0
      %1082 = vmatprep.subr.mxu0 0.0
      %1083 = vmatpush2.msra.mxu0 0.0
      %1084 = vmatprep.subr.mxu0 0.0
      %1085 = vmatpush2.msra.mxu0 0.0
      %1086 = vmatprep.subr.mxu0 0.0
      %1087 = vmatpush2.msra.mxu0 0.0
      %1088 = vmatprep.subr.mxu0 0.0
      %1089 = vmatpush2.msra.mxu0 0.0
      %1090 = vmatprep.subr.mxu0 0.0
      %1091 = vmatpush2.msra.mxu0 0.0
      %1092 = vmatprep.subr.mxu0 0.0
      %1093 = vmatpush2.msra.mxu0 0.0
      %1094 = vmatprep.subr.mxu0 0.0
      %1095 = vmatpush2.msra.mxu0 0.0
      %1096 = vmatprep.subr.mxu0 0.0
      %1097 = vmatpush2.msra.mxu0 0.0
      %1098 = vmatprep.subr.mxu0 0.0
      %1099 = vmatpush2.msra.mxu0 0.0
      %1100 = vmatprep.subr.mxu0 0.0
      %1101 = vmatpush2.msra.mxu0 0.0
      %1102 = vmatprep.subr.mxu0 0.0
      %1103 = vmatpush2.msra.mxu0 0.0
      %1104 = vmatprep.mubr.f32.mxu0 0.0
      %1105 = vmatmul.mubr.f32.gmra.mxu0 %v1038
      %v1106 = vpop.f32.mrf.mxu0
      %v1107 = vadd.f32 0.0, %v1106
      %v1108 = vpop.f32.mrf.mxu0
      %1109 = vdwg.mxu0
      %v1110 = vadd.f32 %v503, %v1107
      %v1111 = vxor.u32 %v1110, 2147483648
      %v1112 = vmul.f32 %v1111, 1.442695
      %v1113 = vpow.pop %v1112
      %v1114 = vadd.f32 %v1113, 1.0
      %v1115 = vrcp.pop %v1114
      %v1116 = vmul.f32 1.0, %v1115
      %v1117 = vtanh.pop %v1110
      %v1118 = vmul.f32 %v1116, %v1025
      %1120 = vrot.lane.b32.xlu0 %v1117, 64
      %v1121 = vpop.permute.xlu0 %1120
      %v1123 = vmul.f32 %v1116, %v1121
      %1125 = vrot.lane.b32.xlu0 %v1123, 32
      %v1126 = vpop.permute.xlu0 %1125
      %v1128 = vadd.f32 %v1118, %v1126
      %v1129 = vtanh.pop %v1128
      %1131 = vrot.lane.b32.xlu0 %v1129, 64
      %v1132 = vpop.permute.xlu0 %1131
      %v1134 = vmul.f32 %v1116, %v1132
      %1136 = vrot.lane.b32.xlu0 %v1134, 32
      %v1137 = vpop.permute.xlu0 %1136
      %s1139 = scalar_lea.vmem [#allocation4], 40
      %1140 = vst.msk [vmem:[%s1139] sm:$0xff] %vm518, %v1137
      %v1141 = vsel %vm518, %v1137, 0
      %1143 = vmatprep.subr.mxu0 0.0
      %1144 = vmatpush1.msra.mxu0 0.0
      %1145 = vmatprep.subr.mxu0 0.0
      %1146 = vmatpush1.msra.mxu0 0.0
      %1147 = vmatprep.subr.mxu0 0.0
      %1148 = vmatpush1.msra.mxu0 0.0
      %1149 = vmatprep.subr.mxu0 0.0
      %1150 = vmatpush1.msra.mxu0 0.0
      %1151 = vmatprep.subr.mxu0 0.0
      %1152 = vmatpush1.msra.mxu0 0.0
      %1153 = vmatprep.subr.mxu0 0.0
      %1154 = vmatpush1.msra.mxu0 0.0
      %1155 = vmatprep.subr.mxu0 0.0
      %1156 = vmatpush1.msra.mxu0 0.0
      %1157 = vmatprep.subr.mxu0 0.0
      %1158 = vmatpush1.msra.mxu0 0.0
      %1159 = vmatprep.subr.mxu0 0.0
      %1160 = vmatpush1.msra.mxu0 0.0
      %1161 = vmatprep.subr.mxu0 0.0
      %1162 = vmatpush1.msra.mxu0 0.0
      %1163 = vmatprep.subr.mxu0 0.0
      %1164 = vmatpush1.msra.mxu0 0.0
      %1165 = vmatprep.subr.mxu0 0.0
      %1166 = vmatpush1.msra.mxu0 0.0
      %1167 = vmatprep.subr.mxu0 0.0
      %1168 = vmatpush1.msra.mxu0 %v378
      %1169 = vmatprep.subr.mxu0 0.0
      %1170 = vmatpush1.msra.mxu0 %v377
      %1171 = vmatprep.subr.mxu0 0.0
      %1172 = vmatpush1.msra.mxu0 %v376
      %1173 = vmatprep.subr.mxu0 0.0
      %1174 = vmatpush1.msra.mxu0 %v375
      %1175 = vmatprep.subr.mxu0 0.0
      %1176 = vmatpush2.msra.mxu0 0.0
      %1177 = vmatprep.subr.mxu0 0.0
      %1178 = vmatpush2.msra.mxu0 0.0
      %1179 = vmatprep.subr.mxu0 0.0
      %1180 = vmatpush2.msra.mxu0 0.0
      %1181 = vmatprep.subr.mxu0 0.0
      %1182 = vmatpush2.msra.mxu0 0.0
      %1183 = vmatprep.subr.mxu0 0.0
      %1184 = vmatpush2.msra.mxu0 0.0
      %1185 = vmatprep.subr.mxu0 0.0
      %1186 = vmatpush2.msra.mxu0 0.0
      %1187 = vmatprep.subr.mxu0 0.0
      %1188 = vmatpush2.msra.mxu0 0.0
      %1189 = vmatprep.subr.mxu0 0.0
      %1190 = vmatpush2.msra.mxu0 0.0
      %1191 = vmatprep.subr.mxu0 0.0
      %1192 = vmatpush2.msra.mxu0 0.0
      %1193 = vmatprep.subr.mxu0 0.0
      %1194 = vmatpush2.msra.mxu0 0.0
      %1195 = vmatprep.subr.mxu0 0.0
      %1196 = vmatpush2.msra.mxu0 0.0
      %1197 = vmatprep.subr.mxu0 0.0
      %1198 = vmatpush2.msra.mxu0 0.0
      %1199 = vmatprep.subr.mxu0 0.0
      %1200 = vmatpush2.msra.mxu0 0.0
      %1201 = vmatprep.subr.mxu0 0.0
      %1202 = vmatpush2.msra.mxu0 0.0
      %1203 = vmatprep.subr.mxu0 0.0
      %1204 = vmatpush2.msra.mxu0 0.0
      %1205 = vmatprep.subr.mxu0 0.0
      %1206 = vmatpush2.msra.mxu0 0.0
      %1207 = vmatprep.mubr.f32.mxu0 0.0
      %1208 = vmatmul.mubr.f32.gmra.mxu0 %v1141
      %v1209 = vpop.f32.mrf.mxu0
      %v1210 = vadd.f32 0.0, %v1209
      %v1211 = vpop.f32.mrf.mxu0
      %1212 = vdwg.mxu0
      %v1213 = vadd.f32 %v508, %v1210
      %v1214 = vxor.u32 %v1213, 2147483648
      %v1215 = vmul.f32 %v1214, 1.442695
      %v1216 = vpow.pop %v1215
      %v1217 = vadd.f32 %v1216, 1.0
      %v1218 = vrcp.pop %v1217
      %v1219 = vmul.f32 1.0, %v1218
      %v1220 = vtanh.pop %v1213
      %v1221 = vmul.f32 %v1219, %v1128
      %1223 = vrot.lane.b32.xlu0 %v1220, 64
      %v1224 = vpop.permute.xlu0 %1223
      %v1226 = vmul.f32 %v1219, %v1224
      %1228 = vrot.lane.b32.xlu0 %v1226, 32
      %v1229 = vpop.permute.xlu0 %1228
      %v1231 = vadd.f32 %v1221, %v1229
      %v1232 = vtanh.pop %v1231
      %1234 = vrot.lane.b32.xlu0 %v1232, 64
      %v1235 = vpop.permute.xlu0 %1234
      %v1237 = vmul.f32 %v1219, %v1235
      %1239 = vrot.lane.b32.xlu0 %v1237, 32
      %v1240 = vpop.permute.xlu0 %1239
      %s1242 = scalar_lea.vmem [#allocation4], 48
      %1243 = vst.msk [vmem:[%s1242] sm:$0xff] %vm518, %v1240
      %v1244 = vsel %vm518, %v1240, 0
      %1246 = vmatprep.subr.mxu0 0.0
      %1247 = vmatpush1.msra.mxu0 0.0
      %1248 = vmatprep.subr.mxu0 0.0
      %1249 = vmatpush1.msra.mxu0 0.0
      %1250 = vmatprep.subr.mxu0 0.0
      %1251 = vmatpush1.msra.mxu0 0.0
      %1252 = vmatprep.subr.mxu0 0.0
      %1253 = vmatpush1.msra.mxu0 0.0
      %1254 = vmatprep.subr.mxu0 0.0
      %1255 = vmatpush1.msra.mxu0 0.0
      %1256 = vmatprep.subr.mxu0 0.0
      %1257 = vmatpush1.msra.mxu0 0.0
      %1258 = vmatprep.subr.mxu0 0.0
      %1259 = vmatpush1.msra.mxu0 0.0
      %1260 = vmatprep.subr.mxu0 0.0
      %1261 = vmatpush1.msra.mxu0 0.0
      %1262 = vmatprep.subr.mxu0 0.0
      %1263 = vmatpush1.msra.mxu0 0.0
      %1264 = vmatprep.subr.mxu0 0.0
      %1265 = vmatpush1.msra.mxu0 0.0
      %1266 = vmatprep.subr.mxu0 0.0
      %1267 = vmatpush1.msra.mxu0 0.0
      %1268 = vmatprep.subr.mxu0 0.0
      %1269 = vmatpush1.msra.mxu0 0.0
      %1270 = vmatprep.subr.mxu0 0.0
      %1271 = vmatpush1.msra.mxu0 %v378
      %1272 = vmatprep.subr.mxu0 0.0
      %1273 = vmatpush1.msra.mxu0 %v377
      %1274 = vmatprep.subr.mxu0 0.0
      %1275 = vmatpush1.msra.mxu0 %v376
      %1276 = vmatprep.subr.mxu0 0.0
      %1277 = vmatpush1.msra.mxu0 %v375
      %1278 = vmatprep.subr.mxu0 0.0
      %1279 = vmatpush2.msra.mxu0 0.0
      %1280 = vmatprep.subr.mxu0 0.0
      %1281 = vmatpush2.msra.mxu0 0.0
      %1282 = vmatprep.subr.mxu0 0.0
      %1283 = vmatpush2.msra.mxu0 0.0
      %1284 = vmatprep.subr.mxu0 0.0
      %1285 = vmatpush2.msra.mxu0 0.0
      %1286 = vmatprep.subr.mxu0 0.0
      %1287 = vmatpush2.msra.mxu0 0.0
      %1288 = vmatprep.subr.mxu0 0.0
      %1289 = vmatpush2.msra.mxu0 0.0
      %1290 = vmatprep.subr.mxu0 0.0
      %1291 = vmatpush2.msra.mxu0 0.0
      %1292 = vmatprep.subr.mxu0 0.0
      %1293 = vmatpush2.msra.mxu0 0.0
      %1294 = vmatprep.subr.mxu0 0.0
      %1295 = vmatpush2.msra.mxu0 0.0
      %1296 = vmatprep.subr.mxu0 0.0
      %1297 = vmatpush2.msra.mxu0 0.0
      %1298 = vmatprep.subr.mxu0 0.0
      %1299 = vmatpush2.msra.mxu0 0.0
      %1300 = vmatprep.subr.mxu0 0.0
      %1301 = vmatpush2.msra.mxu0 0.0
      %1302 = vmatprep.subr.mxu0 0.0
      %1303 = vmatpush2.msra.mxu0 0.0
      %1304 = vmatprep.subr.mxu0 0.0
      %1305 = vmatpush2.msra.mxu0 0.0
      %1306 = vmatprep.subr.mxu0 0.0
      %1307 = vmatpush2.msra.mxu0 0.0
      %1308 = vmatprep.subr.mxu0 0.0
      %1309 = vmatpush2.msra.mxu0 0.0
      %1310 = vmatprep.mubr.f32.mxu0 0.0
      %1311 = vmatmul.mubr.f32.gmra.mxu0 %v1244
      %v1312 = vpop.f32.mrf.mxu0
      %v1313 = vadd.f32 0.0, %v1312
      %v1314 = vpop.f32.mrf.mxu0
      %1315 = vdwg.mxu0
      %v1316 = vadd.f32 %v513, %v1313
      %v1317 = vxor.u32 %v1316, 2147483648
      %v1318 = vmul.f32 %v1317, 1.442695
      %v1319 = vpow.pop %v1318
      %v1320 = vadd.f32 %v1319, 1.0
      %v1321 = vrcp.pop %v1320
      %v1322 = vmul.f32 1.0, %v1321
      %v1323 = vtanh.pop %v1316
      %v1324 = vmul.f32 %v1322, %v1231
      %1326 = vrot.lane.b32.xlu0 %v1323, 64
      %v1327 = vpop.permute.xlu0 %1326
      %v1329 = vmul.f32 %v1322, %v1327
      %1331 = vrot.lane.b32.xlu0 %v1329, 32
      %v1332 = vpop.permute.xlu0 %1331
      %v1334 = vadd.f32 %v1324, %v1332
      %v1335 = vtanh.pop %v1334
      %1337 = vrot.lane.b32.xlu0 %v1335, 64
      %v1338 = vpop.permute.xlu0 %1337
      %v1340 = vmul.f32 %v1322, %v1338
      %1342 = vrot.lane.b32.xlu0 %v1340, 32
      %v1343 = vpop.permute.xlu0 %1342
      %s1345 = scalar_lea.vmem [#allocation4], 56
      %1346 = vst.msk [vmem:[%s1345] sm:$0xff] %vm518, %v1343
      %1347 = vst.msk [vmem:[#allocation2] sm:$0xff] %vm518, %v1343
      %1349 = vrot.lane.b32.xlu0 %v1334, 96
      %v1350 = vpop.permute.xlu0 %1349
      %1352 = vst.msk [vmem:[#allocation3] sm:$0xff] %vm518, %v1350
      %v1353 = vld [vmem:[#allocation4] sm:$0xff]
      %v1354 = vld [vmem:[#allocation4 + $0x8] sm:$0xff]
      %v1355 = vld [vmem:[#allocation4 + $0x10] sm:$0xff]
      %v1356 = vld [vmem:[#allocation4 + $0x18] sm:$0xff]
      %v1357 = vld [vmem:[#allocation4 + $0x20] sm:$0xff]
      %v1358 = vld [vmem:[#allocation4 + $0x28] sm:$0xff]
      %v1359 = vld [vmem:[#allocation4 + $0x30] sm:$0xff]
      %v1360 = vld [vmem:[#allocation4 + $0x38] sm:$0xff]
      %v1361 = vld [vmem:[%s4] sm:$0xff]
      %v1362 = vld [vmem:[%s4 + $0x8] sm:$0xff]
      %v1363 = vld [vmem:[%s4 + $0x10] sm:$0xff]
      %v1364 = vld [vmem:[%s4 + $0x18] sm:$0xff]
      %v1365 = vld [vmem:[%s5] sm:$0xff]
      %v1366 = vld [vmem:[%s5 + $0x8] sm:$0xff]
      %v1367 = vld [vmem:[%s5 + $0x10] sm:$0xff]
      %v1368 = vld [vmem:[%s5 + $0x18] sm:$0xff]
      %v1369 = vld [vmem:[%s6] sm:$0x1]
      %v1371 = vlaneseq
      %v1372 = vshrl.u32 %v1371, 7
      %v1373 = vsub.s32 0, %v1372
      %v1374 = vrot.slane %v1369, %v1373
      %v1377 = vsel %vm518, %v1353, 0
      %v1380 = vsel %vm518, %v1354, 0
      %v1383 = vsel %vm518, %v1355, 0
      %v1386 = vsel %vm518, %v1356, 0
      %v1389 = vsel %vm518, %v1357, 0
      %v1392 = vsel %vm518, %v1358, 0
      %v1395 = vsel %vm518, %v1359, 0
      %v1398 = vsel %vm518, %v1360, 0
      %1400 = vmatprep.subr.mxu0 0.0
      %1401 = vmatpush1.msra.mxu0 0.0
      %1402 = vmatprep.subr.mxu0 0.0
      %1403 = vmatpush1.msra.mxu0 0.0
      %1404 = vmatprep.subr.mxu0 0.0
      %1405 = vmatpush1.msra.mxu0 0.0
      %1406 = vmatprep.subr.mxu0 0.0
      %1407 = vmatpush1.msra.mxu0 0.0
      %1408 = vmatprep.subr.mxu0 0.0
      %1409 = vmatpush1.msra.mxu0 0.0
      %1410 = vmatprep.subr.mxu0 0.0
      %1411 = vmatpush1.msra.mxu0 0.0
      %1412 = vmatprep.subr.mxu0 0.0
      %1413 = vmatpush1.msra.mxu0 0.0
      %1414 = vmatprep.subr.mxu0 0.0
      %1415 = vmatpush1.msra.mxu0 0.0
      %1416 = vmatprep.subr.mxu0 0.0
      %1417 = vmatpush1.msra.mxu0 0.0
      %1418 = vmatprep.subr.mxu0 0.0
      %1419 = vmatpush1.msra.mxu0 0.0
      %1420 = vmatprep.subr.mxu0 0.0
      %1421 = vmatpush1.msra.mxu0 0.0
      %1422 = vmatprep.subr.mxu0 0.0
      %1423 = vmatpush1.msra.mxu0 0.0
      %1424 = vmatprep.subr.mxu0 0.0
      %1425 = vmatpush1.msra.mxu0 %v1364
      %1426 = vmatprep.subr.mxu0 0.0
      %1427 = vmatpush1.msra.mxu0 %v1363
      %1428 = vmatprep.subr.mxu0 0.0
      %1429 = vmatpush1.msra.mxu0 %v1362
      %1430 = vmatprep.subr.mxu0 0.0
      %1431 = vmatpush1.msra.mxu0 %v1361
      %1432 = vmatprep.subr.mxu0 0.0
      %1433 = vmatpush2.msra.mxu0 0.0
      %1434 = vmatprep.subr.mxu0 0.0
      %1435 = vmatpush2.msra.mxu0 0.0
      %1436 = vmatprep.subr.mxu0 0.0
      %1437 = vmatpush2.msra.mxu0 0.0
      %1438 = vmatprep.subr.mxu0 0.0
      %1439 = vmatpush2.msra.mxu0 0.0
      %1440 = vmatprep.subr.mxu0 0.0
      %1441 = vmatpush2.msra.mxu0 0.0
      %1442 = vmatprep.subr.mxu0 0.0
      %1443 = vmatpush2.msra.mxu0 0.0
      %1444 = vmatprep.subr.mxu0 0.0
      %1445 = vmatpush2.msra.mxu0 0.0
      %1446 = vmatprep.subr.mxu0 0.0
      %1447 = vmatpush2.msra.mxu0 0.0
      %1448 = vmatprep.subr.mxu0 0.0
      %1449 = vmatpush2.msra.mxu0 0.0
      %1450 = vmatprep.subr.mxu0 0.0
      %1451 = vmatpush2.msra.mxu0 0.0
      %1452 = vmatprep.subr.mxu0 0.0
      %1453 = vmatpush2.msra.mxu0 0.0
      %1454 = vmatprep.subr.mxu0 0.0
      %1455 = vmatpush2.msra.mxu0 0.0
      %1456 = vmatprep.subr.mxu0 0.0
      %1457 = vmatpush2.msra.mxu0 0.0
      %1458 = vmatprep.subr.mxu0 0.0
      %1459 = vmatpush2.msra.mxu0 0.0
      %1460 = vmatprep.subr.mxu0 0.0
      %1461 = vmatpush2.msra.mxu0 0.0
      %1462 = vmatprep.subr.mxu0 0.0
      %1463 = vmatpush2.msra.mxu0 0.0
      %1464 = vmatprep.mubr.f32.mxu0 0.0
      %1465 = vmatmul.mubr.f32.gmra.mxu0 %v1377
      %v1466 = vpop.f32.mrf.mxu0
      %v1467 = vadd.f32 %v1374, %v1466
      %v1468 = vpop.f32.mrf.mxu0
      %1469 = vmatprep.mubr.f32.mxu0 0.0
      %1470 = vmatmul.mubr.f32.gmra.mxu0 %v1380
      %v1471 = vpop.f32.mrf.mxu0
      %v1472 = vadd.f32 %v1374, %v1471
      %v1473 = vpop.f32.mrf.mxu0
      %1474 = vmatprep.mubr.f32.mxu0 0.0
      %1475 = vmatmul.mubr.f32.gmra.mxu0 %v1383
      %v1476 = vpop.f32.mrf.mxu0
      %v1477 = vadd.f32 %v1374, %v1476
      %v1478 = vpop.f32.mrf.mxu0
      %1479 = vmatprep.mubr.f32.mxu0 0.0
      %1480 = vmatmul.mubr.f32.gmra.mxu0 %v1386
      %v1481 = vpop.f32.mrf.mxu0
      %v1482 = vadd.f32 %v1374, %v1481
      %v1483 = vpop.f32.mrf.mxu0
      %1484 = vmatprep.mubr.f32.mxu0 0.0
      %1485 = vmatmul.mubr.f32.gmra.mxu0 %v1389
      %v1486 = vpop.f32.mrf.mxu0
      %v1487 = vadd.f32 %v1374, %v1486
      %v1488 = vpop.f32.mrf.mxu0
      %1489 = vmatprep.mubr.f32.mxu0 0.0
      %1490 = vmatmul.mubr.f32.gmra.mxu0 %v1392
      %v1491 = vpop.f32.mrf.mxu0
      %v1492 = vadd.f32 %v1374, %v1491
      %v1493 = vpop.f32.mrf.mxu0
      %1494 = vmatprep.mubr.f32.mxu0 0.0
      %1495 = vmatmul.mubr.f32.gmra.mxu0 %v1395
      %v1496 = vpop.f32.mrf.mxu0
      %v1497 = vadd.f32 %v1374, %v1496
      %v1498 = vpop.f32.mrf.mxu0
      %1499 = vmatprep.mubr.f32.mxu0 0.0
      %1500 = vmatmul.mubr.f32.gmra.mxu0 %v1398
      %v1501 = vpop.f32.mrf.mxu0
      %v1502 = vadd.f32 %v1374, %v1501
      %v1503 = vpop.f32.mrf.mxu0
      %1504 = vdwg.mxu0
      %s1505 = scalar_lea.vmem [#allocation2], 8
      %v1506 = vld [vmem:[%s1505] sm:$0xff]
      %s1507 = scalar_lea.vmem [#allocation3], 8
      %v1508 = vld [vmem:[%s1507] sm:$0xff]
      %v1510 = vsel %vm518, %v1506, 0
      %1512 = vmatprep.subr.mxu0 0.0
      %1513 = vmatpush1.msra.mxu0 0.0
      %1514 = vmatprep.subr.mxu0 0.0
      %1515 = vmatpush1.msra.mxu0 0.0
      %1516 = vmatprep.subr.mxu0 0.0
      %1517 = vmatpush1.msra.mxu0 0.0
      %1518 = vmatprep.subr.mxu0 0.0
      %1519 = vmatpush1.msra.mxu0 0.0
      %1520 = vmatprep.subr.mxu0 0.0
      %1521 = vmatpush1.msra.mxu0 0.0
      %1522 = vmatprep.subr.mxu0 0.0
      %1523 = vmatpush1.msra.mxu0 0.0
      %1524 = vmatprep.subr.mxu0 0.0
      %1525 = vmatpush1.msra.mxu0 0.0
      %1526 = vmatprep.subr.mxu0 0.0
      %1527 = vmatpush1.msra.mxu0 0.0
      %1528 = vmatprep.subr.mxu0 0.0
      %1529 = vmatpush1.msra.mxu0 0.0
      %1530 = vmatprep.subr.mxu0 0.0
      %1531 = vmatpush1.msra.mxu0 0.0
      %1532 = vmatprep.subr.mxu0 0.0
      %1533 = vmatpush1.msra.mxu0 0.0
      %1534 = vmatprep.subr.mxu0 0.0
      %1535 = vmatpush1.msra.mxu0 0.0
      %1536 = vmatprep.subr.mxu0 0.0
      %1537 = vmatpush1.msra.mxu0 %v1368
      %1538 = vmatprep.subr.mxu0 0.0
      %1539 = vmatpush1.msra.mxu0 %v1367
      %1540 = vmatprep.subr.mxu0 0.0
      %1541 = vmatpush1.msra.mxu0 %v1366
      %1542 = vmatprep.subr.mxu0 0.0
      %1543 = vmatpush1.msra.mxu0 %v1365
      %1544 = vmatprep.subr.mxu0 0.0
      %1545 = vmatpush2.msra.mxu0 0.0
      %1546 = vmatprep.subr.mxu0 0.0
      %1547 = vmatpush2.msra.mxu0 0.0
      %1548 = vmatprep.subr.mxu0 0.0
      %1549 = vmatpush2.msra.mxu0 0.0
      %1550 = vmatprep.subr.mxu0 0.0
      %1551 = vmatpush2.msra.mxu0 0.0
      %1552 = vmatprep.subr.mxu0 0.0
      %1553 = vmatpush2.msra.mxu0 0.0
      %1554 = vmatprep.subr.mxu0 0.0
      %1555 = vmatpush2.msra.mxu0 0.0
      %1556 = vmatprep.subr.mxu0 0.0
      %1557 = vmatpush2.msra.mxu0 0.0
      %1558 = vmatprep.subr.mxu0 0.0
      %1559 = vmatpush2.msra.mxu0 0.0
      %1560 = vmatprep.subr.mxu0 0.0
      %1561 = vmatpush2.msra.mxu0 0.0
      %1562 = vmatprep.subr.mxu0 0.0
      %1563 = vmatpush2.msra.mxu0 0.0
      %1564 = vmatprep.subr.mxu0 0.0
      %1565 = vmatpush2.msra.mxu0 0.0
      %1566 = vmatprep.subr.mxu0 0.0
      %1567 = vmatpush2.msra.mxu0 0.0
      %1568 = vmatprep.subr.mxu0 0.0
      %1569 = vmatpush2.msra.mxu0 0.0
      %1570 = vmatprep.subr.mxu0 0.0
      %1571 = vmatpush2.msra.mxu0 0.0
      %1572 = vmatprep.subr.mxu0 0.0
      %1573 = vmatpush2.msra.mxu0 0.0
      %1574 = vmatprep.subr.mxu0 0.0
      %1575 = vmatpush2.msra.mxu0 0.0
      %1576 = vmatprep.mubr.f32.mxu0 0.0
      %1577 = vmatmul.mubr.f32.gmra.mxu0 %v1510
      %v1578 = vpop.f32.mrf.mxu0
      %v1579 = vadd.f32 0.0, %v1578
      %v1580 = vpop.f32.mrf.mxu0
      %1581 = vdwg.mxu0
      %v1582 = vadd.f32 %v1467, %v1579
      %v1583 = vxor.u32 %v1582, 2147483648
      %v1584 = vmul.f32 %v1583, 1.442695
      %v1585 = vpow.pop %v1584
      %v1586 = vadd.f32 %v1585, 1.0
      %v1587 = vrcp.pop %v1586
      %v1588 = vmul.f32 1.0, %v1587
      %v1589 = vtanh.pop %v1582
      %1591 = vrot.lane.b32.xlu0 %v1508, 32
      %v1592 = vpop.permute.xlu0 %1591
      %v1594 = vmul.f32 %v1588, %v1592
      %1596 = vrot.lane.b32.xlu0 %v1589, 64
      %v1597 = vpop.permute.xlu0 %1596
      %v1599 = vmul.f32 %v1588, %v1597
      %1601 = vrot.lane.b32.xlu0 %v1599, 32
      %v1602 = vpop.permute.xlu0 %1601
      %v1604 = vadd.f32 %v1594, %v1602
      %v1605 = vtanh.pop %v1604
      %1607 = vrot.lane.b32.xlu0 %v1605, 64
      %v1608 = vpop.permute.xlu0 %1607
      %v1610 = vmul.f32 %v1588, %v1608
      %1612 = vrot.lane.b32.xlu0 %v1610, 32
      %v1613 = vpop.permute.xlu0 %1612
      %v1614 = vsel %vm518, %v1613, 0
      %1616 = vmatprep.subr.mxu0 0.0
      %1617 = vmatpush1.msra.mxu0 0.0
      %1618 = vmatprep.subr.mxu0 0.0
      %1619 = vmatpush1.msra.mxu0 0.0
      %1620 = vmatprep.subr.mxu0 0.0
      %1621 = vmatpush1.msra.mxu0 0.0
      %1622 = vmatprep.subr.mxu0 0.0
      %1623 = vmatpush1.msra.mxu0 0.0
      %1624 = vmatprep.subr.mxu0 0.0
      %1625 = vmatpush1.msra.mxu0 0.0
      %1626 = vmatprep.subr.mxu0 0.0
      %1627 = vmatpush1.msra.mxu0 0.0
      %1628 = vmatprep.subr.mxu0 0.0
      %1629 = vmatpush1.msra.mxu0 0.0
      %1630 = vmatprep.subr.mxu0 0.0
      %1631 = vmatpush1.msra.mxu0 0.0
      %1632 = vmatprep.subr.mxu0 0.0
      %1633 = vmatpush1.msra.mxu0 0.0
      %1634 = vmatprep.subr.mxu0 0.0
      %1635 = vmatpush1.msra.mxu0 0.0
      %1636 = vmatprep.subr.mxu0 0.0
      %1637 = vmatpush1.msra.mxu0 0.0
      %1638 = vmatprep.subr.mxu0 0.0
      %1639 = vmatpush1.msra.mxu0 0.0
      %1640 = vmatprep.subr.mxu0 0.0
      %1641 = vmatpush1.msra.mxu0 %v1368
      %1642 = vmatprep.subr.mxu0 0.0
      %1643 = vmatpush1.msra.mxu0 %v1367
      %1644 = vmatprep.subr.mxu0 0.0
      %1645 = vmatpush1.msra.mxu0 %v1366
      %1646 = vmatprep.subr.mxu0 0.0
      %1647 = vmatpush1.msra.mxu0 %v1365
      %1648 = vmatprep.subr.mxu0 0.0
      %1649 = vmatpush2.msra.mxu0 0.0
      %1650 = vmatprep.subr.mxu0 0.0
      %1651 = vmatpush2.msra.mxu0 0.0
      %1652 = vmatprep.subr.mxu0 0.0
      %1653 = vmatpush2.msra.mxu0 0.0
      %1654 = vmatprep.subr.mxu0 0.0
      %1655 = vmatpush2.msra.mxu0 0.0
      %1656 = vmatprep.subr.mxu0 0.0
      %1657 = vmatpush2.msra.mxu0 0.0
      %1658 = vmatprep.subr.mxu0 0.0
      %1659 = vmatpush2.msra.mxu0 0.0
      %1660 = vmatprep.subr.mxu0 0.0
      %1661 = vmatpush2.msra.mxu0 0.0
      %1662 = vmatprep.subr.mxu0 0.0
      %1663 = vmatpush2.msra.mxu0 0.0
      %1664 = vmatprep.subr.mxu0 0.0
      %1665 = vmatpush2.msra.mxu0 0.0
      %1666 = vmatprep.subr.mxu0 0.0
      %1667 = vmatpush2.msra.mxu0 0.0
      %1668 = vmatprep.subr.mxu0 0.0
      %1669 = vmatpush2.msra.mxu0 0.0
      %1670 = vmatprep.subr.mxu0 0.0
      %1671 = vmatpush2.msra.mxu0 0.0
      %1672 = vmatprep.subr.mxu0 0.0
      %1673 = vmatpush2.msra.mxu0 0.0
      %1674 = vmatprep.subr.mxu0 0.0
      %1675 = vmatpush2.msra.mxu0 0.0
      %1676 = vmatprep.subr.mxu0 0.0
      %1677 = vmatpush2.msra.mxu0 0.0
      %1678 = vmatprep.subr.mxu0 0.0
      %1679 = vmatpush2.msra.mxu0 0.0
      %1680 = vmatprep.mubr.f32.mxu0 0.0
      %1681 = vmatmul.mubr.f32.gmra.mxu0 %v1614
      %v1682 = vpop.f32.mrf.mxu0
      %v1683 = vadd.f32 0.0, %v1682
      %v1684 = vpop.f32.mrf.mxu0
      %1685 = vdwg.mxu0
      %v1686 = vadd.f32 %v1472, %v1683
      %v1687 = vxor.u32 %v1686, 2147483648
      %v1688 = vmul.f32 %v1687, 1.442695
      %v1689 = vpow.pop %v1688
      %v1690 = vadd.f32 %v1689, 1.0
      %v1691 = vrcp.pop %v1690
      %v1692 = vmul.f32 1.0, %v1691
      %v1693 = vtanh.pop %v1686
      %v1694 = vmul.f32 %v1692, %v1604
      %1696 = vrot.lane.b32.xlu0 %v1693, 64
      %v1697 = vpop.permute.xlu0 %1696
      %v1699 = vmul.f32 %v1692, %v1697
      %1701 = vrot.lane.b32.xlu0 %v1699, 32
      %v1702 = vpop.permute.xlu0 %1701
      %v1704 = vadd.f32 %v1694, %v1702
      %v1705 = vtanh.pop %v1704
      %1707 = vrot.lane.b32.xlu0 %v1705, 64
      %v1708 = vpop.permute.xlu0 %1707
      %v1710 = vmul.f32 %v1692, %v1708
      %1712 = vrot.lane.b32.xlu0 %v1710, 32
      %v1713 = vpop.permute.xlu0 %1712
      %v1714 = vsel %vm518, %v1713, 0
      %1716 = vmatprep.subr.mxu0 0.0
      %1717 = vmatpush1.msra.mxu0 0.0
      %1718 = vmatprep.subr.mxu0 0.0
      %1719 = vmatpush1.msra.mxu0 0.0
      %1720 = vmatprep.subr.mxu0 0.0
      %1721 = vmatpush1.msra.mxu0 0.0
      %1722 = vmatprep.subr.mxu0 0.0
      %1723 = vmatpush1.msra.mxu0 0.0
      %1724 = vmatprep.subr.mxu0 0.0
      %1725 = vmatpush1.msra.mxu0 0.0
      %1726 = vmatprep.subr.mxu0 0.0
      %1727 = vmatpush1.msra.mxu0 0.0
      %1728 = vmatprep.subr.mxu0 0.0
      %1729 = vmatpush1.msra.mxu0 0.0
      %1730 = vmatprep.subr.mxu0 0.0
      %1731 = vmatpush1.msra.mxu0 0.0
      %1732 = vmatprep.subr.mxu0 0.0
      %1733 = vmatpush1.msra.mxu0 0.0
      %1734 = vmatprep.subr.mxu0 0.0
      %1735 = vmatpush1.msra.mxu0 0.0
      %1736 = vmatprep.subr.mxu0 0.0
      %1737 = vmatpush1.msra.mxu0 0.0
      %1738 = vmatprep.subr.mxu0 0.0
      %1739 = vmatpush1.msra.mxu0 0.0
      %1740 = vmatprep.subr.mxu0 0.0
      %1741 = vmatpush1.msra.mxu0 %v1368
      %1742 = vmatprep.subr.mxu0 0.0
      %1743 = vmatpush1.msra.mxu0 %v1367
      %1744 = vmatprep.subr.mxu0 0.0
      %1745 = vmatpush1.msra.mxu0 %v1366
      %1746 = vmatprep.subr.mxu0 0.0
      %1747 = vmatpush1.msra.mxu0 %v1365
      %1748 = vmatprep.subr.mxu0 0.0
      %1749 = vmatpush2.msra.mxu0 0.0
      %1750 = vmatprep.subr.mxu0 0.0
      %1751 = vmatpush2.msra.mxu0 0.0
      %1752 = vmatprep.subr.mxu0 0.0
      %1753 = vmatpush2.msra.mxu0 0.0
      %1754 = vmatprep.subr.mxu0 0.0
      %1755 = vmatpush2.msra.mxu0 0.0
      %1756 = vmatprep.subr.mxu0 0.0
      %1757 = vmatpush2.msra.mxu0 0.0
      %1758 = vmatprep.subr.mxu0 0.0
      %1759 = vmatpush2.msra.mxu0 0.0
      %1760 = vmatprep.subr.mxu0 0.0
      %1761 = vmatpush2.msra.mxu0 0.0
      %1762 = vmatprep.subr.mxu0 0.0
      %1763 = vmatpush2.msra.mxu0 0.0
      %1764 = vmatprep.subr.mxu0 0.0
      %1765 = vmatpush2.msra.mxu0 0.0
      %1766 = vmatprep.subr.mxu0 0.0
      %1767 = vmatpush2.msra.mxu0 0.0
      %1768 = vmatprep.subr.mxu0 0.0
      %1769 = vmatpush2.msra.mxu0 0.0
      %1770 = vmatprep.subr.mxu0 0.0
      %1771 = vmatpush2.msra.mxu0 0.0
      %1772 = vmatprep.subr.mxu0 0.0
      %1773 = vmatpush2.msra.mxu0 0.0
      %1774 = vmatprep.subr.mxu0 0.0
      %1775 = vmatpush2.msra.mxu0 0.0
      %1776 = vmatprep.subr.mxu0 0.0
      %1777 = vmatpush2.msra.mxu0 0.0
      %1778 = vmatprep.subr.mxu0 0.0
      %1779 = vmatpush2.msra.mxu0 0.0
      %1780 = vmatprep.mubr.f32.mxu0 0.0
      %1781 = vmatmul.mubr.f32.gmra.mxu0 %v1714
      %v1782 = vpop.f32.mrf.mxu0
      %v1783 = vadd.f32 0.0, %v1782
      %v1784 = vpop.f32.mrf.mxu0
      %1785 = vdwg.mxu0
      %v1786 = vadd.f32 %v1477, %v1783
      %v1787 = vxor.u32 %v1786, 2147483648
      %v1788 = vmul.f32 %v1787, 1.442695
      %v1789 = vpow.pop %v1788
      %v1790 = vadd.f32 %v1789, 1.0
      %v1791 = vrcp.pop %v1790
      %v1792 = vmul.f32 1.0, %v1791
      %v1793 = vtanh.pop %v1786
      %v1794 = vmul.f32 %v1792, %v1704
      %1796 = vrot.lane.b32.xlu0 %v1793, 64
      %v1797 = vpop.permute.xlu0 %1796
      %v1799 = vmul.f32 %v1792, %v1797
      %1801 = vrot.lane.b32.xlu0 %v1799, 32
      %v1802 = vpop.permute.xlu0 %1801
      %v1804 = vadd.f32 %v1794, %v1802
      %v1805 = vtanh.pop %v1804
      %1807 = vrot.lane.b32.xlu0 %v1805, 64
      %v1808 = vpop.permute.xlu0 %1807
      %v1810 = vmul.f32 %v1792, %v1808
      %1812 = vrot.lane.b32.xlu0 %v1810, 32
      %v1813 = vpop.permute.xlu0 %1812
      %v1814 = vsel %vm518, %v1813, 0
      %1816 = vmatprep.subr.mxu0 0.0
      %1817 = vmatpush1.msra.mxu0 0.0
      %1818 = vmatprep.subr.mxu0 0.0
      %1819 = vmatpush1.msra.mxu0 0.0
      %1820 = vmatprep.subr.mxu0 0.0
      %1821 = vmatpush1.msra.mxu0 0.0
      %1822 = vmatprep.subr.mxu0 0.0
      %1823 = vmatpush1.msra.mxu0 0.0
      %1824 = vmatprep.subr.mxu0 0.0
      %1825 = vmatpush1.msra.mxu0 0.0
      %1826 = vmatprep.subr.mxu0 0.0
      %1827 = vmatpush1.msra.mxu0 0.0
      %1828 = vmatprep.subr.mxu0 0.0
      %1829 = vmatpush1.msra.mxu0 0.0
      %1830 = vmatprep.subr.mxu0 0.0
      %1831 = vmatpush1.msra.mxu0 0.0
      %1832 = vmatprep.subr.mxu0 0.0
      %1833 = vmatpush1.msra.mxu0 0.0
      %1834 = vmatprep.subr.mxu0 0.0
      %1835 = vmatpush1.msra.mxu0 0.0
      %1836 = vmatprep.subr.mxu0 0.0
      %1837 = vmatpush1.msra.mxu0 0.0
      %1838 = vmatprep.subr.mxu0 0.0
      %1839 = vmatpush1.msra.mxu0 0.0
      %1840 = vmatprep.subr.mxu0 0.0
      %1841 = vmatpush1.msra.mxu0 %v1368
      %1842 = vmatprep.subr.mxu0 0.0
      %1843 = vmatpush1.msra.mxu0 %v1367
      %1844 = vmatprep.subr.mxu0 0.0
      %1845 = vmatpush1.msra.mxu0 %v1366
      %1846 = vmatprep.subr.mxu0 0.0
      %1847 = vmatpush1.msra.mxu0 %v1365
      %1848 = vmatprep.subr.mxu0 0.0
      %1849 = vmatpush2.msra.mxu0 0.0
      %1850 = vmatprep.subr.mxu0 0.0
      %1851 = vmatpush2.msra.mxu0 0.0
      %1852 = vmatprep.subr.mxu0 0.0
      %1853 = vmatpush2.msra.mxu0 0.0
      %1854 = vmatprep.subr.mxu0 0.0
      %1855 = vmatpush2.msra.mxu0 0.0
      %1856 = vmatprep.subr.mxu0 0.0
      %1857 = vmatpush2.msra.mxu0 0.0
      %1858 = vmatprep.subr.mxu0 0.0
      %1859 = vmatpush2.msra.mxu0 0.0
      %1860 = vmatprep.subr.mxu0 0.0
      %1861 = vmatpush2.msra.mxu0 0.0
      %1862 = vmatprep.subr.mxu0 0.0
      %1863 = vmatpush2.msra.mxu0 0.0
      %1864 = vmatprep.subr.mxu0 0.0
      %1865 = vmatpush2.msra.mxu0 0.0
      %1866 = vmatprep.subr.mxu0 0.0
      %1867 = vmatpush2.msra.mxu0 0.0
      %1868 = vmatprep.subr.mxu0 0.0
      %1869 = vmatpush2.msra.mxu0 0.0
      %1870 = vmatprep.subr.mxu0 0.0
      %1871 = vmatpush2.msra.mxu0 0.0
      %1872 = vmatprep.subr.mxu0 0.0
      %1873 = vmatpush2.msra.mxu0 0.0
      %1874 = vmatprep.subr.mxu0 0.0
      %1875 = vmatpush2.msra.mxu0 0.0
      %1876 = vmatprep.subr.mxu0 0.0
      %1877 = vmatpush2.msra.mxu0 0.0
      %1878 = vmatprep.subr.mxu0 0.0
      %1879 = vmatpush2.msra.mxu0 0.0
      %1880 = vmatprep.mubr.f32.mxu0 0.0
      %1881 = vmatmul.mubr.f32.gmra.mxu0 %v1814
      %v1882 = vpop.f32.mrf.mxu0
      %v1883 = vadd.f32 0.0, %v1882
      %v1884 = vpop.f32.mrf.mxu0
      %1885 = vdwg.mxu0
      %v1886 = vadd.f32 %v1482, %v1883
      %v1887 = vxor.u32 %v1886, 2147483648
      %v1888 = vmul.f32 %v1887, 1.442695
      %v1889 = vpow.pop %v1888
      %v1890 = vadd.f32 %v1889, 1.0
      %v1891 = vrcp.pop %v1890
      %v1892 = vmul.f32 1.0, %v1891
      %v1893 = vtanh.pop %v1886
      %v1894 = vmul.f32 %v1892, %v1804
      %1896 = vrot.lane.b32.xlu0 %v1893, 64
      %v1897 = vpop.permute.xlu0 %1896
      %v1899 = vmul.f32 %v1892, %v1897
      %1901 = vrot.lane.b32.xlu0 %v1899, 32
      %v1902 = vpop.permute.xlu0 %1901
      %v1904 = vadd.f32 %v1894, %v1902
      %v1905 = vtanh.pop %v1904
      %1907 = vrot.lane.b32.xlu0 %v1905, 64
      %v1908 = vpop.permute.xlu0 %1907
      %v1910 = vmul.f32 %v1892, %v1908
      %1912 = vrot.lane.b32.xlu0 %v1910, 32
      %v1913 = vpop.permute.xlu0 %1912
      %v1914 = vsel %vm518, %v1913, 0
      %1916 = vmatprep.subr.mxu0 0.0
      %1917 = vmatpush1.msra.mxu0 0.0
      %1918 = vmatprep.subr.mxu0 0.0
      %1919 = vmatpush1.msra.mxu0 0.0
      %1920 = vmatprep.subr.mxu0 0.0
      %1921 = vmatpush1.msra.mxu0 0.0
      %1922 = vmatprep.subr.mxu0 0.0
      %1923 = vmatpush1.msra.mxu0 0.0
      %1924 = vmatprep.subr.mxu0 0.0
      %1925 = vmatpush1.msra.mxu0 0.0
      %1926 = vmatprep.subr.mxu0 0.0
      %1927 = vmatpush1.msra.mxu0 0.0
      %1928 = vmatprep.subr.mxu0 0.0
      %1929 = vmatpush1.msra.mxu0 0.0
      %1930 = vmatprep.subr.mxu0 0.0
      %1931 = vmatpush1.msra.mxu0 0.0
      %1932 = vmatprep.subr.mxu0 0.0
      %1933 = vmatpush1.msra.mxu0 0.0
      %1934 = vmatprep.subr.mxu0 0.0
      %1935 = vmatpush1.msra.mxu0 0.0
      %1936 = vmatprep.subr.mxu0 0.0
      %1937 = vmatpush1.msra.mxu0 0.0
      %1938 = vmatprep.subr.mxu0 0.0
      %1939 = vmatpush1.msra.mxu0 0.0
      %1940 = vmatprep.subr.mxu0 0.0
      %1941 = vmatpush1.msra.mxu0 %v1368
      %1942 = vmatprep.subr.mxu0 0.0
      %1943 = vmatpush1.msra.mxu0 %v1367
      %1944 = vmatprep.subr.mxu0 0.0
      %1945 = vmatpush1.msra.mxu0 %v1366
      %1946 = vmatprep.subr.mxu0 0.0
      %1947 = vmatpush1.msra.mxu0 %v1365
      %1948 = vmatprep.subr.mxu0 0.0
      %1949 = vmatpush2.msra.mxu0 0.0
      %1950 = vmatprep.subr.mxu0 0.0
      %1951 = vmatpush2.msra.mxu0 0.0
      %1952 = vmatprep.subr.mxu0 0.0
      %1953 = vmatpush2.msra.mxu0 0.0
      %1954 = vmatprep.subr.mxu0 0.0
      %1955 = vmatpush2.msra.mxu0 0.0
      %1956 = vmatprep.subr.mxu0 0.0
      %1957 = vmatpush2.msra.mxu0 0.0
      %1958 = vmatprep.subr.mxu0 0.0
      %1959 = vmatpush2.msra.mxu0 0.0
      %1960 = vmatprep.subr.mxu0 0.0
      %1961 = vmatpush2.msra.mxu0 0.0
      %1962 = vmatprep.subr.mxu0 0.0
      %1963 = vmatpush2.msra.mxu0 0.0
      %1964 = vmatprep.subr.mxu0 0.0
      %1965 = vmatpush2.msra.mxu0 0.0
      %1966 = vmatprep.subr.mxu0 0.0
      %1967 = vmatpush2.msra.mxu0 0.0
      %1968 = vmatprep.subr.mxu0 0.0
      %1969 = vmatpush2.msra.mxu0 0.0
      %1970 = vmatprep.subr.mxu0 0.0
      %1971 = vmatpush2.msra.mxu0 0.0
      %1972 = vmatprep.subr.mxu0 0.0
      %1973 = vmatpush2.msra.mxu0 0.0
      %1974 = vmatprep.subr.mxu0 0.0
      %1975 = vmatpush2.msra.mxu0 0.0
      %1976 = vmatprep.subr.mxu0 0.0
      %1977 = vmatpush2.msra.mxu0 0.0
      %1978 = vmatprep.subr.mxu0 0.0
      %1979 = vmatpush2.msra.mxu0 0.0
      %1980 = vmatprep.mubr.f32.mxu0 0.0
      %1981 = vmatmul.mubr.f32.gmra.mxu0 %v1914
      %v1982 = vpop.f32.mrf.mxu0
      %v1983 = vadd.f32 0.0, %v1982
      %v1984 = vpop.f32.mrf.mxu0
      %1985 = vdwg.mxu0
      %v1986 = vadd.f32 %v1487, %v1983
      %v1987 = vxor.u32 %v1986, 2147483648
      %v1988 = vmul.f32 %v1987, 1.442695
      %v1989 = vpow.pop %v1988
      %v1990 = vadd.f32 %v1989, 1.0
      %v1991 = vrcp.pop %v1990
      %v1992 = vmul.f32 1.0, %v1991
      %v1993 = vtanh.pop %v1986
      %v1994 = vmul.f32 %v1992, %v1904
      %1996 = vrot.lane.b32.xlu0 %v1993, 64
      %v1997 = vpop.permute.xlu0 %1996
      %v1999 = vmul.f32 %v1992, %v1997
      %2001 = vrot.lane.b32.xlu0 %v1999, 32
      %v2002 = vpop.permute.xlu0 %2001
      %v2004 = vadd.f32 %v1994, %v2002
      %v2005 = vtanh.pop %v2004
      %2007 = vrot.lane.b32.xlu0 %v2005, 64
      %v2008 = vpop.permute.xlu0 %2007
      %v2010 = vmul.f32 %v1992, %v2008
      %2012 = vrot.lane.b32.xlu0 %v2010, 32
      %v2013 = vpop.permute.xlu0 %2012
      %v2014 = vsel %vm518, %v2013, 0
      %2016 = vmatprep.subr.mxu0 0.0
      %2017 = vmatpush1.msra.mxu0 0.0
      %2018 = vmatprep.subr.mxu0 0.0
      %2019 = vmatpush1.msra.mxu0 0.0
      %2020 = vmatprep.subr.mxu0 0.0
      %2021 = vmatpush1.msra.mxu0 0.0
      %2022 = vmatprep.subr.mxu0 0.0
      %2023 = vmatpush1.msra.mxu0 0.0
      %2024 = vmatprep.subr.mxu0 0.0
      %2025 = vmatpush1.msra.mxu0 0.0
      %2026 = vmatprep.subr.mxu0 0.0
      %2027 = vmatpush1.msra.mxu0 0.0
      %2028 = vmatprep.subr.mxu0 0.0
      %2029 = vmatpush1.msra.mxu0 0.0
      %2030 = vmatprep.subr.mxu0 0.0
      %2031 = vmatpush1.msra.mxu0 0.0
      %2032 = vmatprep.subr.mxu0 0.0
      %2033 = vmatpush1.msra.mxu0 0.0
      %2034 = vmatprep.subr.mxu0 0.0
      %2035 = vmatpush1.msra.mxu0 0.0
      %2036 = vmatprep.subr.mxu0 0.0
      %2037 = vmatpush1.msra.mxu0 0.0
      %2038 = vmatprep.subr.mxu0 0.0
      %2039 = vmatpush1.msra.mxu0 0.0
      %2040 = vmatprep.subr.mxu0 0.0
      %2041 = vmatpush1.msra.mxu0 %v1368
      %2042 = vmatprep.subr.mxu0 0.0
      %2043 = vmatpush1.msra.mxu0 %v1367
      %2044 = vmatprep.subr.mxu0 0.0
      %2045 = vmatpush1.msra.mxu0 %v1366
      %2046 = vmatprep.subr.mxu0 0.0
      %2047 = vmatpush1.msra.mxu0 %v1365
      %2048 = vmatprep.subr.mxu0 0.0
      %2049 = vmatpush2.msra.mxu0 0.0
      %2050 = vmatprep.subr.mxu0 0.0
      %2051 = vmatpush2.msra.mxu0 0.0
      %2052 = vmatprep.subr.mxu0 0.0
      %2053 = vmatpush2.msra.mxu0 0.0
      %2054 = vmatprep.subr.mxu0 0.0
      %2055 = vmatpush2.msra.mxu0 0.0
      %2056 = vmatprep.subr.mxu0 0.0
      %2057 = vmatpush2.msra.mxu0 0.0
      %2058 = vmatprep.subr.mxu0 0.0
      %2059 = vmatpush2.msra.mxu0 0.0
      %2060 = vmatprep.subr.mxu0 0.0
      %2061 = vmatpush2.msra.mxu0 0.0
      %2062 = vmatprep.subr.mxu0 0.0
      %2063 = vmatpush2.msra.mxu0 0.0
      %2064 = vmatprep.subr.mxu0 0.0
      %2065 = vmatpush2.msra.mxu0 0.0
      %2066 = vmatprep.subr.mxu0 0.0
      %2067 = vmatpush2.msra.mxu0 0.0
      %2068 = vmatprep.subr.mxu0 0.0
      %2069 = vmatpush2.msra.mxu0 0.0
      %2070 = vmatprep.subr.mxu0 0.0
      %2071 = vmatpush2.msra.mxu0 0.0
      %2072 = vmatprep.subr.mxu0 0.0
      %2073 = vmatpush2.msra.mxu0 0.0
      %2074 = vmatprep.subr.mxu0 0.0
      %2075 = vmatpush2.msra.mxu0 0.0
      %2076 = vmatprep.subr.mxu0 0.0
      %2077 = vmatpush2.msra.mxu0 0.0
      %2078 = vmatprep.subr.mxu0 0.0
      %2079 = vmatpush2.msra.mxu0 0.0
      %2080 = vmatprep.mubr.f32.mxu0 0.0
      %2081 = vmatmul.mubr.f32.gmra.mxu0 %v2014
      %v2082 = vpop.f32.mrf.mxu0
      %v2083 = vadd.f32 0.0, %v2082
      %v2084 = vpop.f32.mrf.mxu0
      %2085 = vdwg.mxu0
      %v2086 = vadd.f32 %v1492, %v2083
      %v2087 = vxor.u32 %v2086, 2147483648
      %v2088 = vmul.f32 %v2087, 1.442695
      %v2089 = vpow.pop %v2088
      %v2090 = vadd.f32 %v2089, 1.0
      %v2091 = vrcp.pop %v2090
      %v2092 = vmul.f32 1.0, %v2091
      %v2093 = vtanh.pop %v2086
      %v2094 = vmul.f32 %v2092, %v2004
      %2096 = vrot.lane.b32.xlu0 %v2093, 64
      %v2097 = vpop.permute.xlu0 %2096
      %v2099 = vmul.f32 %v2092, %v2097
      %2101 = vrot.lane.b32.xlu0 %v2099, 32
      %v2102 = vpop.permute.xlu0 %2101
      %v2104 = vadd.f32 %v2094, %v2102
      %v2105 = vtanh.pop %v2104
      %2107 = vrot.lane.b32.xlu0 %v2105, 64
      %v2108 = vpop.permute.xlu0 %2107
      %v2110 = vmul.f32 %v2092, %v2108
      %2112 = vrot.lane.b32.xlu0 %v2110, 32
      %v2113 = vpop.permute.xlu0 %2112
      %v2114 = vsel %vm518, %v2113, 0
      %2116 = vmatprep.subr.mxu0 0.0
      %2117 = vmatpush1.msra.mxu0 0.0
      %2118 = vmatprep.subr.mxu0 0.0
      %2119 = vmatpush1.msra.mxu0 0.0
      %2120 = vmatprep.subr.mxu0 0.0
      %2121 = vmatpush1.msra.mxu0 0.0
      %2122 = vmatprep.subr.mxu0 0.0
      %2123 = vmatpush1.msra.mxu0 0.0
      %2124 = vmatprep.subr.mxu0 0.0
      %2125 = vmatpush1.msra.mxu0 0.0
      %2126 = vmatprep.subr.mxu0 0.0
      %2127 = vmatpush1.msra.mxu0 0.0
      %2128 = vmatprep.subr.mxu0 0.0
      %2129 = vmatpush1.msra.mxu0 0.0
      %2130 = vmatprep.subr.mxu0 0.0
      %2131 = vmatpush1.msra.mxu0 0.0
      %2132 = vmatprep.subr.mxu0 0.0
      %2133 = vmatpush1.msra.mxu0 0.0
      %2134 = vmatprep.subr.mxu0 0.0
      %2135 = vmatpush1.msra.mxu0 0.0
      %2136 = vmatprep.subr.mxu0 0.0
      %2137 = vmatpush1.msra.mxu0 0.0
      %2138 = vmatprep.subr.mxu0 0.0
      %2139 = vmatpush1.msra.mxu0 0.0
      %2140 = vmatprep.subr.mxu0 0.0
      %2141 = vmatpush1.msra.mxu0 %v1368
      %2142 = vmatprep.subr.mxu0 0.0
      %2143 = vmatpush1.msra.mxu0 %v1367
      %2144 = vmatprep.subr.mxu0 0.0
      %2145 = vmatpush1.msra.mxu0 %v1366
      %2146 = vmatprep.subr.mxu0 0.0
      %2147 = vmatpush1.msra.mxu0 %v1365
      %2148 = vmatprep.subr.mxu0 0.0
      %2149 = vmatpush2.msra.mxu0 0.0
      %2150 = vmatprep.subr.mxu0 0.0
      %2151 = vmatpush2.msra.mxu0 0.0
      %2152 = vmatprep.subr.mxu0 0.0
      %2153 = vmatpush2.msra.mxu0 0.0
      %2154 = vmatprep.subr.mxu0 0.0
      %2155 = vmatpush2.msra.mxu0 0.0
      %2156 = vmatprep.subr.mxu0 0.0
      %2157 = vmatpush2.msra.mxu0 0.0
      %2158 = vmatprep.subr.mxu0 0.0
      %2159 = vmatpush2.msra.mxu0 0.0
      %2160 = vmatprep.subr.mxu0 0.0
      %2161 = vmatpush2.msra.mxu0 0.0
      %2162 = vmatprep.subr.mxu0 0.0
      %2163 = vmatpush2.msra.mxu0 0.0
      %2164 = vmatprep.subr.mxu0 0.0
      %2165 = vmatpush2.msra.mxu0 0.0
      %2166 = vmatprep.subr.mxu0 0.0
      %2167 = vmatpush2.msra.mxu0 0.0
      %2168 = vmatprep.subr.mxu0 0.0
      %2169 = vmatpush2.msra.mxu0 0.0
      %2170 = vmatprep.subr.mxu0 0.0
      %2171 = vmatpush2.msra.mxu0 0.0
      %2172 = vmatprep.subr.mxu0 0.0
      %2173 = vmatpush2.msra.mxu0 0.0
      %2174 = vmatprep.subr.mxu0 0.0
      %2175 = vmatpush2.msra.mxu0 0.0
      %2176 = vmatprep.subr.mxu0 0.0
      %2177 = vmatpush2.msra.mxu0 0.0
      %2178 = vmatprep.subr.mxu0 0.0
      %2179 = vmatpush2.msra.mxu0 0.0
      %2180 = vmatprep.mubr.f32.mxu0 0.0
      %2181 = vmatmul.mubr.f32.gmra.mxu0 %v2114
      %v2182 = vpop.f32.mrf.mxu0
      %v2183 = vadd.f32 0.0, %v2182
      %v2184 = vpop.f32.mrf.mxu0
      %2185 = vdwg.mxu0
      %v2186 = vadd.f32 %v1497, %v2183
      %v2187 = vxor.u32 %v2186, 2147483648
      %v2188 = vmul.f32 %v2187, 1.442695
      %v2189 = vpow.pop %v2188
      %v2190 = vadd.f32 %v2189, 1.0
      %v2191 = vrcp.pop %v2190
      %v2192 = vmul.f32 1.0, %v2191
      %v2193 = vtanh.pop %v2186
      %v2194 = vmul.f32 %v2192, %v2104
      %2196 = vrot.lane.b32.xlu0 %v2193, 64
      %v2197 = vpop.permute.xlu0 %2196
      %v2199 = vmul.f32 %v2192, %v2197
      %2201 = vrot.lane.b32.xlu0 %v2199, 32
      %v2202 = vpop.permute.xlu0 %2201
      %v2204 = vadd.f32 %v2194, %v2202
      %v2205 = vtanh.pop %v2204
      %2207 = vrot.lane.b32.xlu0 %v2205, 64
      %v2208 = vpop.permute.xlu0 %2207
      %v2210 = vmul.f32 %v2192, %v2208
      %2212 = vrot.lane.b32.xlu0 %v2210, 32
      %v2213 = vpop.permute.xlu0 %2212
      %v2214 = vsel %vm518, %v2213, 0
      %2216 = vmatprep.subr.mxu0 0.0
      %2217 = vmatpush1.msra.mxu0 0.0
      %2218 = vmatprep.subr.mxu0 0.0
      %2219 = vmatpush1.msra.mxu0 0.0
      %2220 = vmatprep.subr.mxu0 0.0
      %2221 = vmatpush1.msra.mxu0 0.0
      %2222 = vmatprep.subr.mxu0 0.0
      %2223 = vmatpush1.msra.mxu0 0.0
      %2224 = vmatprep.subr.mxu0 0.0
      %2225 = vmatpush1.msra.mxu0 0.0
      %2226 = vmatprep.subr.mxu0 0.0
      %2227 = vmatpush1.msra.mxu0 0.0
      %2228 = vmatprep.subr.mxu0 0.0
      %2229 = vmatpush1.msra.mxu0 0.0
      %2230 = vmatprep.subr.mxu0 0.0
      %2231 = vmatpush1.msra.mxu0 0.0
      %2232 = vmatprep.subr.mxu0 0.0
      %2233 = vmatpush1.msra.mxu0 0.0
      %2234 = vmatprep.subr.mxu0 0.0
      %2235 = vmatpush1.msra.mxu0 0.0
      %2236 = vmatprep.subr.mxu0 0.0
      %2237 = vmatpush1.msra.mxu0 0.0
      %2238 = vmatprep.subr.mxu0 0.0
      %2239 = vmatpush1.msra.mxu0 0.0
      %2240 = vmatprep.subr.mxu0 0.0
      %2241 = vmatpush1.msra.mxu0 %v1368
      %2242 = vmatprep.subr.mxu0 0.0
      %2243 = vmatpush1.msra.mxu0 %v1367
      %2244 = vmatprep.subr.mxu0 0.0
      %2245 = vmatpush1.msra.mxu0 %v1366
      %2246 = vmatprep.subr.mxu0 0.0
      %2247 = vmatpush1.msra.mxu0 %v1365
      %2248 = vmatprep.subr.mxu0 0.0
      %2249 = vmatpush2.msra.mxu0 0.0
      %2250 = vmatprep.subr.mxu0 0.0
      %2251 = vmatpush2.msra.mxu0 0.0
      %2252 = vmatprep.subr.mxu0 0.0
      %2253 = vmatpush2.msra.mxu0 0.0
      %2254 = vmatprep.subr.mxu0 0.0
      %2255 = vmatpush2.msra.mxu0 0.0
      %2256 = vmatprep.subr.mxu0 0.0
      %2257 = vmatpush2.msra.mxu0 0.0
      %2258 = vmatprep.subr.mxu0 0.0
      %2259 = vmatpush2.msra.mxu0 0.0
      %2260 = vmatprep.subr.mxu0 0.0
      %2261 = vmatpush2.msra.mxu0 0.0
      %2262 = vmatprep.subr.mxu0 0.0
      %2263 = vmatpush2.msra.mxu0 0.0
      %2264 = vmatprep.subr.mxu0 0.0
      %2265 = vmatpush2.msra.mxu0 0.0
      %2266 = vmatprep.subr.mxu0 0.0
      %2267 = vmatpush2.msra.mxu0 0.0
      %2268 = vmatprep.subr.mxu0 0.0
      %2269 = vmatpush2.msra.mxu0 0.0
      %2270 = vmatprep.subr.mxu0 0.0
      %2271 = vmatpush2.msra.mxu0 0.0
      %2272 = vmatprep.subr.mxu0 0.0
      %2273 = vmatpush2.msra.mxu0 0.0
      %2274 = vmatprep.subr.mxu0 0.0
      %2275 = vmatpush2.msra.mxu0 0.0
      %2276 = vmatprep.subr.mxu0 0.0
      %2277 = vmatpush2.msra.mxu0 0.0
      %2278 = vmatprep.subr.mxu0 0.0
      %2279 = vmatpush2.msra.mxu0 0.0
      %2280 = vmatprep.mubr.f32.mxu0 0.0
      %2281 = vmatmul.mubr.f32.gmra.mxu0 %v2214
      %v2282 = vpop.f32.mrf.mxu0
      %v2283 = vadd.f32 0.0, %v2282
      %v2284 = vpop.f32.mrf.mxu0
      %2285 = vdwg.mxu0
      %v2286 = vadd.f32 %v1502, %v2283
      %v2287 = vxor.u32 %v2286, 2147483648
      %v2288 = vmul.f32 %v2287, 1.442695
      %v2289 = vpow.pop %v2288
      %v2290 = vadd.f32 %v2289, 1.0
      %v2291 = vrcp.pop %v2290
      %v2292 = vmul.f32 1.0, %v2291
      %v2293 = vtanh.pop %v2286
      %v2294 = vmul.f32 %v2292, %v2204
      %2296 = vrot.lane.b32.xlu0 %v2293, 64
      %v2297 = vpop.permute.xlu0 %2296
      %v2299 = vmul.f32 %v2292, %v2297
      %2301 = vrot.lane.b32.xlu0 %v2299, 32
      %v2302 = vpop.permute.xlu0 %2301
      %v2304 = vadd.f32 %v2294, %v2302
      %v2305 = vtanh.pop %v2304
      %2307 = vrot.lane.b32.xlu0 %v2305, 64
      %v2308 = vpop.permute.xlu0 %2307
      %v2310 = vmul.f32 %v2292, %v2308
      %2312 = vrot.lane.b32.xlu0 %v2310, 32
      %v2313 = vpop.permute.xlu0 %2312
      %2315 = vst.msk [vmem:[%s1505] sm:$0xff] %vm518, %v2313
      %2317 = vrot.lane.b32.xlu0 %v2304, 96
      %v2318 = vpop.permute.xlu0 %2317
      %2320 = vst.msk [vmem:[%s1507] sm:$0xff] %vm518, %v2318
      %p2321 = scmp.eq.s32.totalorder %s25, 1
      // Predicated region
      $region61: #{lstm_price_predictor.1} parent=55 // pred_check
        %p2322 = pneg %p2321
      $region62: #{lstm_price_predictor.1} parent=55 // pred_check_branch
        %2324 = sbr.rel (%p2322) target = $region64
      $region63: #{lstm_price_predictor.1} parent=55 // pred_region
        %v2325 = vld [vmem:[%s7] sm:$0xff]
        %v2326 = vld [vmem:[%s7 + $0x8] sm:$0xff]
        %v2327 = vld [vmem:[%s7 + $0x10] sm:$0xff]
        %v2328 = vld [vmem:[%s7 + $0x18] sm:$0xff]
        %v2329 = vld [vmem:[%s8] sm:$0x1]
        %v2331 = vlaneseq
        %v2332 = vshrl.u32 %v2331, 7
        %v2333 = vsub.s32 0, %v2332
        %v2334 = vrot.slane %v2329, %v2333
        %v2336 = vsel %vm518, %v2313, 0
        %2338 = vmatprep.subr.mxu0 0.0
        %2339 = vmatpush1.msra.mxu0 0.0
        %2340 = vmatprep.subr.mxu0 0.0
        %2341 = vmatpush1.msra.mxu0 0.0
        %2342 = vmatprep.subr.mxu0 0.0
        %2343 = vmatpush1.msra.mxu0 0.0
        %2344 = vmatprep.subr.mxu0 0.0
        %2345 = vmatpush1.msra.mxu0 0.0
        %2346 = vmatprep.subr.mxu0 0.0
        %2347 = vmatpush1.msra.mxu0 0.0
        %2348 = vmatprep.subr.mxu0 0.0
        %2349 = vmatpush1.msra.mxu0 0.0
        %2350 = vmatprep.subr.mxu0 0.0
        %2351 = vmatpush1.msra.mxu0 0.0
        %2352 = vmatprep.subr.mxu0 0.0
        %2353 = vmatpush1.msra.mxu0 0.0
        %2354 = vmatprep.subr.mxu0 0.0
        %2355 = vmatpush1.msra.mxu0 0.0
        %2356 = vmatprep.subr.mxu0 0.0
        %2357 = vmatpush1.msra.mxu0 0.0
        %2358 = vmatprep.subr.mxu0 0.0
        %2359 = vmatpush1.msra.mxu0 0.0
        %2360 = vmatprep.subr.mxu0 0.0
        %2361 = vmatpush1.msra.mxu0 0.0
        %2362 = vmatprep.subr.mxu0 0.0
        %2363 = vmatpush1.msra.mxu0 %v2328
        %2364 = vmatprep.subr.mxu0 0.0
        %2365 = vmatpush1.msra.mxu0 %v2327
        %2366 = vmatprep.subr.mxu0 0.0
        %2367 = vmatpush1.msra.mxu0 %v2326
        %2368 = vmatprep.subr.mxu0 0.0
        %2369 = vmatpush1.msra.mxu0 %v2325
        %2370 = vmatprep.subr.mxu0 0.0
        %2371 = vmatpush2.msra.mxu0 0.0
        %2372 = vmatprep.subr.mxu0 0.0
        %2373 = vmatpush2.msra.mxu0 0.0
        %2374 = vmatprep.subr.mxu0 0.0
        %2375 = vmatpush2.msra.mxu0 0.0
        %2376 = vmatprep.subr.mxu0 0.0
        %2377 = vmatpush2.msra.mxu0 0.0
        %2378 = vmatprep.subr.mxu0 0.0
        %2379 = vmatpush2.msra.mxu0 0.0
        %2380 = vmatprep.subr.mxu0 0.0
        %2381 = vmatpush2.msra.mxu0 0.0
        %2382 = vmatprep.subr.mxu0 0.0
        %2383 = vmatpush2.msra.mxu0 0.0
        %2384 = vmatprep.subr.mxu0 0.0
        %2385 = vmatpush2.msra.mxu0 0.0
        %2386 = vmatprep.subr.mxu0 0.0
        %2387 = vmatpush2.msra.mxu0 0.0
        %2388 = vmatprep.subr.mxu0 0.0
        %2389 = vmatpush2.msra.mxu0 0.0
        %2390 = vmatprep.subr.mxu0 0.0
        %2391 = vmatpush2.msra.mxu0 0.0
        %2392 = vmatprep.subr.mxu0 0.0
        %2393 = vmatpush2.msra.mxu0 0.0
        %2394 = vmatprep.subr.mxu0 0.0
        %2395 = vmatpush2.msra.mxu0 0.0
        %2396 = vmatprep.subr.mxu0 0.0
        %2397 = vmatpush2.msra.mxu0 0.0
        %2398 = vmatprep.subr.mxu0 0.0
        %2399 = vmatpush2.msra.mxu0 0.0
        %2400 = vmatprep.subr.mxu0 0.0
        %2401 = vmatpush2.msra.mxu0 0.0
        %2402 = vmatprep.mubr.f32.mxu0 0.0
        %2403 = vmatmul.mubr.f32.gmra.mxu0 %v2336
        %v2404 = vpop.f32.mrf.mxu0
        %v2405 = vadd.f32 %v2334, %v2404
        %v2406 = vpop.f32.mrf.mxu0
        %2407 = vdwg.mxu0
        %vm2408 = vcmask 31744
        %2409 = vst.msk [vmem:[%s355] sm:$0xff] %vm2408, %v2405
      $region64: #{lstm_price_predictor.1} parent=55 // pred_fallthru
        _
      %p2410 = scmp.lt.s32.totalorder %s24, 0
      %s2411 = scalar_select %p2410, %s24, 0
      %s2412 = smul.addr %s2411, 8
      %s2413 = scalar_lea.vmem %s9, %s2412
      // Predicated region
      $region65: #{lstm_price_predictor.1} parent=55 // pred_check
        %p2414 = pneg %p246
      $region66: #{lstm_price_predictor.1} parent=55 // pred_check_branch
        %2416 = sbr.rel (%p2414) target = $region68
      $region67: #{lstm_price_predictor.1} parent=55 // pred_region
        _
      $region68: #{lstm_price_predictor.1} parent=55 // pred_fallthru
        _
      // Predicated region
      $region69: #{lstm_price_predictor.1} parent=55 // pred_check
        %p2417 = pneg %p246
      $region70: #{lstm_price_predictor.1} parent=55 // pred_check_branch
        %2419 = sbr.rel (%p2417) target = $region72
      $region71: #{lstm_price_predictor.1} parent=55 // pred_region
        %p2420 = scmp.lt.s32.totalorder %s24, 0
        %s2421 = scalar_select %p2420, %s24, 0
        %s2422 = smul.addr %s2421, 8
        %s2423 = scalar_lea.vmem %s9, %s2422
      $region72: #{lstm_price_predictor.1} parent=55 // pred_fallthru
        _
    $region56: #{lstm_price_predictor.1} parent=5 // pred_fallthru
      _
    %p2424 = scmp.le.s32.totalorder 2, %s15
    // Predicated region
    $region73: #{lstm_price_predictor.1} parent=5 // pred_check
      %p2425 = pneg %p2424
    $region74: #{lstm_price_predictor.1} parent=5 // pred_check_branch
      %2427 = sbr.rel (%p2425) target = $region76
    $region75: #{lstm_price_predictor.1} parent=5 // pred_region
      %s2428 = ssub.s32 %s15, 2
    $region76: #{lstm_price_predictor.1} parent=5 // pred_fallthru
      _
  $region6: #{lstm_price_predictor.1} parent=0 // loop_footer
    %s19 = sadd.s32 1, %s15
  $region7: #{lstm_price_predictor.1} parent=0 // loop_footer_branch
    %14 = sbr.rel target = $region3
  $region8: #{lstm_price_predictor.1} parent=0 // loop_exit
    _

</llo_original>
